<compile_context>
chip_gen: v7x
topology: tpu7x:2x2x1
jax: 0.10.0
libtpu: 0.0.40
codegen_flags: <defaults>
</compile_context>

<pallas_src>
import jax
import jax.numpy as jnp
from jax import lax
from jax.experimental import pallas as pl
from jax.experimental.pallas import tpu as pltpu


def _round_up(v, m):
    return (v + m - 1) // m * m


# torch gate order along the 4H axis is (i, f, g, o); we pack as (i, f, o, g) so the
# three sigmoid gates are lane-contiguous and g (tanh) sits in the last HP block.
_GATE_ORDER = (0, 1, 3, 2)


def _step_factory(whh, gin_cur, gin_next, wih_next, b_next, HP):
    """One LSTM time-step; optionally interleaves the next layer's input projection."""

    def body(t, carry):
        h_bf, c = carry
        # Only h @ Whh^T remains on the per-step critical path (bf16 MXU, f32 acc).
        gates = gin_cur[t] + jnp.dot(h_bf, whh, preferred_element_type=jnp.float32)
        # Packed gate order (i, f, o, g): one fused sigmoid slab + one tanh block.
        sg = jnp.tanh(0.5 * gates[:, :3 * HP]) * 0.5 + 0.5      # sigmoid via tanh (1 EUP op)
        g = jnp.tanh(gates[:, 3 * HP:])
        i_g = sg[:, 0:HP]
        f_g = sg[:, HP:2 * HP]
        o_g = sg[:, 2 * HP:3 * HP]
        c = f_g * c + i_g * g
        h = o_g * jnp.tanh(c)
        h_bf = h.astype(jnp.bfloat16)                            # cast once, reuse everywhere
        if wih_next is not None:
            # Fill the MXU-idle bubble: next layer's pre-activations for this timestep.
            gin_next[t] = (jnp.dot(h_bf, wih_next, preferred_element_type=jnp.float32)
                           + b_next)
        return (h_bf, c)

    return body


def _make_lstm_kernel(num_layers, T, BP, DP, HP):
    """num_layers-stacked LSTM over T steps + final Linear, on padded shapes."""
    G = 4 * HP
    n_w = 3 * num_layers + 2  # per layer: Wih^T, Whh^T, bias ; plus Wout^T, bout

    def kernel(*refs):
        x_ref = refs[0]                       # (T, BP, DP)   f32 time-major padded input
        w_refs = refs[1:1 + n_w]
        out_ref = refs[1 + n_w]               # (BP, DP)      f32 final linear output
        gins = [refs[2 + n_w], refs[3 + n_w]]  # 2x (T, BP, G) f32 ping-pong gate pre-acts

        # ---- hoisted layer-0 input projection: one big MXU matmul for all T steps ----
        wih0 = w_refs[0][...]                 # (DP, G) bf16
        b0 = w_refs[2][...]                   # (1,  G) f32  (b_ih + b_hh, gate-blocked)
        xin = x_ref[...].reshape(T * BP, DP).astype(jnp.bfloat16)
        gins[0][...] = (jnp.dot(xin, wih0, preferred_element_type=jnp.float32)
                        + b0).reshape(T, BP, G)

        h_last = None
        for l in range(num_layers):
            whh = w_refs[3 * l + 1][...]      # (HP, G) bf16
            gin_cur = gins[l % 2]
            gin_next = gins[(l + 1) % 2]
            if l + 1 < num_layers:
                wih_next = w_refs[3 * (l + 1)][...]       # (HP, G) bf16
                b_next = w_refs[3 * (l + 1) + 2][...]     # (1,  G) f32
            else:
                wih_next = None
                b_next = None

            body = _step_factory(whh, gin_cur, gin_next, wih_next, b_next, HP)
            h0 = jnp.zeros((BP, HP), jnp.bfloat16)
            c0 = jnp.zeros((BP, HP), jnp.float32)
            h_last, _ = lax.fori_loop(0, T, body, (h0, c0), unroll=True)

        # out = Linear(r_out[:, -1, :]) == Linear(h_last of the top layer)
        wout = w_refs[3 * num_layers][...]        # (HP, DP) bf16
        bout = w_refs[3 * num_layers + 1][...]    # (1,  DP) f32
        out_ref[...] = jnp.dot(h_last, wout, preferred_element_type=jnp.float32) + bout

    return kernel


def pack_params(params, input_size, hidden_size):
    """Pad/transpose/gate-reorder the weights ONCE per parameter set (hoisted out of
    the per-call path).  Padding keeps the padded-lane-zero invariant: zero wih columns
    and zero bias in padded lanes of the g block -> tanh(0)=0 -> c,h stay exactly 0."""
    H, D = hidden_size, input_size
    HP = _round_up(H, 128)
    DP = _round_up(D, 128)

    def pack_gate_w(w, din, dinp):
        # torch (4H, din) -> transposed+padded (dinp, 4*HP) in packed gate order.
        wt = jnp.transpose(w).astype(jnp.float32)              # (din, 4H)
        out = jnp.zeros((dinp, 4 * HP), jnp.float32)
        for dst, src in enumerate(_GATE_ORDER):
            out = out.at[:din, dst * HP:dst * HP + H].set(wt[:, src * H:(src + 1) * H])
        return out.astype(jnp.bfloat16)

    def pack_gate_b(bih, bhh):
        bsum = (bih + bhh).astype(jnp.float32)                 # (4H,)
        out = jnp.zeros((1, 4 * HP), jnp.float32)
        for dst, src in enumerate(_GATE_ORDER):
            out = out.at[0, dst * HP:dst * HP + H].set(bsum[src * H:(src + 1) * H])
        return out

    flat = []
    for l, (wih, whh, bih, bhh) in enumerate(params["layers"]):
        din = D if l == 0 else H
        dinp = DP if l == 0 else HP
        flat.append(pack_gate_w(wih, din, dinp))               # (DinP, 4*HP) bf16
        flat.append(pack_gate_w(whh, H, HP))                   # (HP,   4*HP) bf16
        flat.append(pack_gate_b(bih, bhh))                     # (1,    4*HP) f32

    wout = jnp.zeros((HP, DP), jnp.float32).at[:H, :D].set(
        jnp.transpose(params["w_out"]).astype(jnp.float32)).astype(jnp.bfloat16)
    bout = jnp.zeros((1, DP), jnp.float32).at[0, :D].set(params["b_out"].astype(jnp.float32))
    flat += [wout, bout]
    return tuple(jax.device_put(w) for w in flat)


def build_rnn_forward(batch, seq_len, input_size, hidden_size, num_layers):
    """Builds the pallas_call once and returns a jitted forward(x, packed_weights)."""
    B, T, D, H = batch, seq_len, input_size, hidden_size
    BP = _round_up(max(B, 8), 8)       # sublane padding
    HP = _round_up(H, 128)             # lane padding: hidden / per-gate block
    DP = _round_up(D, 128)             # lane padding: input & output features
    G = 4 * HP

    kernel = _make_lstm_kernel(num_layers, T, BP, DP, HP)
    n_in = 1 + 3 * num_layers + 2

    call = pl.pallas_call(
        kernel,
        out_shape=jax.ShapeDtypeStruct((BP, DP), jnp.float32),
        in_specs=[pl.BlockSpec(memory_space=pltpu.MemorySpace.VMEM)] * n_in,
        out_specs=pl.BlockSpec(memory_space=pltpu.MemorySpace.VMEM),
        scratch_shapes=[pltpu.VMEM((T, BP, G), jnp.float32),   # gate pre-acts (ping)
                        pltpu.VMEM((T, BP, G), jnp.float32)],  # gate pre-acts (pong)
    )

    @jax.jit
    def forward(x, packed_weights):
        # time-major, padded input: (T, BP, DP); padding fuses inside jit.
        x_tm = jnp.transpose(x, (1, 0, 2)).astype(jnp.float32)
        x_pad = jnp.zeros((T, BP, DP), jnp.float32).at[:, :B, :D].set(x_tm)
        out_pad = call(x_pad, *packed_weights)
        return out_pad[:B, :D]

    return forward


def init_params(key, input_size, hidden_size, num_layers):
    """Deterministic init matching PyTorch LSTM/Linear shapes (uniform +-1/sqrt(H))."""
    H = hidden_size
    bound = 1.0 / jnp.sqrt(jnp.float32(H))
    layers = []
    for l in range(num_layers):
        din = input_size if l == 0 else H
        key, k1, k2, k3, k4 = jax.random.split(key, 5)
        wih = jax.random.uniform(k1, (4 * H, din), jnp.float32, -bound, bound)
        whh = jax.random.uniform(k2, (4 * H, H), jnp.float32, -bound, bound)
        bih = jax.random.uniform(k3, (4 * H,), jnp.float32, -bound, bound)
        bhh = jax.random.uniform(k4, (4 * H,), jnp.float32, -bound, bound)
        layers.append((wih, whh, bih, bhh))
    key, k5, k6 = jax.random.split(key, 3)
    w_out = jax.random.uniform(k5, (input_size, H), jnp.float32, -bound, bound)
    b_out = jax.random.uniform(k6, (input_size,), jnp.float32, -bound, bound)
    return {"layers": layers, "w_out": w_out, "b_out": b_out}


def _reference_forward(x, params, hidden_size):
    """Pure-JAX f32 reference replicating torch LSTM semantics, for correctness check."""
    B, T, D = x.shape
    H = hidden_size
    seq = x.astype(jnp.float32)
    for (wih, whh, bih, bhh) in params["layers"]:
        h = jnp.zeros((B, H), jnp.float32)
        c = jnp.zeros((B, H), jnp.float32)
        outs = []
        for t in range(T):
            gates = seq[:, t, :] @ wih.T + bih + h @ whh.T + bhh
            i = jax.nn.sigmoid(gates[:, 0 * H:1 * H])
            f = jax.nn.sigmoid(gates[:, 1 * H:2 * H])
            g = jnp.tanh(gates[:, 2 * H:3 * H])
            o = jax.nn.sigmoid(gates[:, 3 * H:4 * H])
            c = f * c + i * g
            h = o * jnp.tanh(c)
            outs.append(h)
        seq = jnp.stack(outs, axis=1)
    return seq[:, -1, :] @ params["w_out"].T + params["b_out"]


if __name__ == "__main__":
    # Small shapes consistent with the module: batch=2, seq=8, input_size=4,
    # hidden_size=32, num_layers=2.
    B, T, INPUT, HIDDEN, LAYERS = 2, 8, 4, 32, 2

    key = jax.random.PRNGKey(0)
    key, kx = jax.random.split(key)
    x = jax.random.normal(kx, (B, T, INPUT), jnp.float32)

    params = init_params(key, INPUT, HIDDEN, LAYERS)

    packed = pack_params(params, INPUT, HIDDEN)                      # once per param set
    forward = build_rnn_forward(B, T, INPUT, HIDDEN, LAYERS)         # builds pallas_call once

    out = jax.block_until_ready(forward(x, packed))

    ref = _reference_forward(x, params, HIDDEN)
    assert out.shape == (B, INPUT)
    # bf16 MXU operands (f32 accumulation) -> tolerance relaxed vs the pure-f32 reference.
    assert jnp.allclose(out, ref, rtol=5e-2, atol=5e-2), "Pallas output mismatch vs reference"

    print("KERNEL_OK")
</pallas_src>

<mosaic_0001>
module attributes {stable_mosaic.version = 11 : i64} {
  func.func @kernel(%arg0: memref<8x8x128xf32, #tpu.memory_space<vmem>>, %arg1: memref<128x512xbf16, #tpu.memory_space<vmem>>, %arg2: memref<128x512xbf16, #tpu.memory_space<vmem>>, %arg3: memref<1x512xf32, #tpu.memory_space<vmem>>, %arg4: memref<128x512xbf16, #tpu.memory_space<vmem>>, %arg5: memref<128x512xbf16, #tpu.memory_space<vmem>>, %arg6: memref<1x512xf32, #tpu.memory_space<vmem>>, %arg7: memref<128x128xbf16, #tpu.memory_space<vmem>>, %arg8: memref<1x128xf32, #tpu.memory_space<vmem>>, %arg9: memref<8x128xf32, #tpu.memory_space<vmem>>, %arg10: memref<8x8x512xf32, #tpu.memory_space<vmem>>, %arg11: memref<8x8x512xf32, #tpu.memory_space<vmem>>) attributes {dimension_semantics = [], scalar_prefetch = 0 : i64, scratch_operands = 2 : i64, tpu.core_type = #tpu.core_type<tc>} {
    %c0 = arith.constant 0 : index
    %c0_0 = arith.constant 0 : index
    %0 = vector.load %arg1[%c0, %c0_0] : memref<128x512xbf16, #tpu.memory_space<vmem>>, vector<128x512xbf16>
    %c0_1 = arith.constant 0 : index
    %c0_2 = arith.constant 0 : index
    %1 = vector.load %arg3[%c0_1, %c0_2] : memref<1x512xf32, #tpu.memory_space<vmem>>, vector<1x512xf32>
    %c0_3 = arith.constant 0 : index
    %c0_4 = arith.constant 0 : index
    %c0_5 = arith.constant 0 : index
    %2 = vector.load %arg0[%c0_3, %c0_4, %c0_5] : memref<8x8x128xf32, #tpu.memory_space<vmem>>, vector<8x8x128xf32>
    %3 = vector.shape_cast %2 : vector<8x8x128xf32> to vector<64x128xf32>
    %4 = arith.truncf %3 : vector<64x128xf32> to vector<64x128xbf16>
    %cst = arith.constant dense<0.000000e+00> : vector<64x512xf32>
    %5 = tpu.matmul %4, %0, %cst {dimension_numbers = #tpu.dot_dimension_numbers<[1], [0], [0], [1], [0, 0, 1, 1], [], []>} : vector<64x128xbf16>, vector<128x512xbf16>, vector<64x512xf32> -> vector<64x512xf32>
    %6 = vector.broadcast %1 : vector<1x512xf32> to vector<64x512xf32>
    %7 = arith.addf %5, %6 : vector<64x512xf32>
    %8 = vector.shape_cast %7 : vector<64x512xf32> to vector<8x8x512xf32>
    %c0_6 = arith.constant 0 : index
    %c0_7 = arith.constant 0 : index
    %c0_8 = arith.constant 0 : index
    %9 = vector.load %arg10[%c0_6, %c0_7, %c0_8] : memref<8x8x512xf32, #tpu.memory_space<vmem>>, vector<8x8x512xf32>
    tpu.vector_store %arg10[%c0_6, %c0_7, %c0_8], %8 {strides = array<i32>} : memref<8x8x512xf32, #tpu.memory_space<vmem>>, vector<8x8x512xf32>,
    %c0_9 = arith.constant 0 : index
    %c0_10 = arith.constant 0 : index
    %10 = vector.load %arg2[%c0_9, %c0_10] : memref<128x512xbf16, #tpu.memory_space<vmem>>, vector<128x512xbf16>
    %c0_11 = arith.constant 0 : index
    %c0_12 = arith.constant 0 : index
    %11 = vector.load %arg4[%c0_11, %c0_12] : memref<128x512xbf16, #tpu.memory_space<vmem>>, vector<128x512xbf16>
    %c0_13 = arith.constant 0 : index
    %c0_14 = arith.constant 0 : index
    %12 = vector.load %arg6[%c0_13, %c0_14] : memref<1x512xf32, #tpu.memory_space<vmem>>, vector<1x512xf32>
    %cst_15 = arith.constant 0.000000e+00 : bf16
    %13 = vector.broadcast %cst_15 : bf16 to vector<8x128xbf16>
    %cst_16 = arith.constant 0.000000e+00 : f32
    %14 = vector.broadcast %cst_16 : f32 to vector<8x128xf32>
    %c0_i32 = arith.constant 0 : i32
    %15 = arith.index_cast %c0_i32 : i32 to index
    %c0_17 = arith.constant 0 : index
    %c0_18 = arith.constant 0 : index
    %16 = vector.load %arg10[%15, %c0_17, %c0_18] : memref<8x8x512xf32, #tpu.memory_space<vmem>>, vector<1x8x512xf32>
    %17 = vector.shape_cast %16 : vector<1x8x512xf32> to vector<8x512xf32>
    %cst_19 = arith.constant dense<0.000000e+00> : vector<8x512xf32>
    %18 = tpu.matmul %13, %10, %cst_19 {dimension_numbers = #tpu.dot_dimension_numbers<[1], [0], [0], [1], [0, 0, 1, 1], [], []>} : vector<8x128xbf16>, vector<128x512xbf16>, vector<8x512xf32> -> vector<8x512xf32>
    %19 = arith.addf %17, %18 : vector<8x512xf32>
    %20 = vector.extract_strided_slice %19 {offsets = [0, 0], sizes = [8, 384], strides = [1, 1]} : vector<8x512xf32> to vector<8x384xf32>
    %cst_20 = arith.constant 5.000000e-01 : f32
    %21 = vector.broadcast %cst_20 : f32 to vector<8x384xf32>
    %22 = arith.mulf %21, %20 : vector<8x384xf32>
    %23 = math.tanh %22 : vector<8x384xf32>
    %cst_21 = arith.constant 5.000000e-01 : f32
    %24 = vector.broadcast %cst_21 : f32 to vector<8x384xf32>
    %25 = arith.mulf %23, %24 : vector<8x384xf32>
    %cst_22 = arith.constant 5.000000e-01 : f32
    %26 = vector.broadcast %cst_22 : f32 to vector<8x384xf32>
    %27 = arith.addf %25, %26 : vector<8x384xf32>
    %28 = vector.extract_strided_slice %19 {offsets = [0, 384], sizes = [8, 128], strides = [1, 1]} : vector<8x512xf32> to vector<8x128xf32>
    %29 = math.tanh %28 : vector<8x128xf32>
    %30 = vector.extract_strided_slice %27 {offsets = [0, 0], sizes = [8, 128], strides = [1, 1]} : vector<8x384xf32> to vector<8x128xf32>
    %31 = vector.extract_strided_slice %27 {offsets = [0, 128], sizes = [8, 128], strides = [1, 1]} : vector<8x384xf32> to vector<8x128xf32>
    %32 = vector.extract_strided_slice %27 {offsets = [0, 256], sizes = [8, 128], strides = [1, 1]} : vector<8x384xf32> to vector<8x128xf32>
    %33 = arith.mulf %31, %14 : vector<8x128xf32>
    %34 = arith.mulf %30, %29 : vector<8x128xf32>
    %35 = arith.addf %33, %34 : vector<8x128xf32>
    %36 = math.tanh %35 : vector<8x128xf32>
    %37 = arith.mulf %32, %36 : vector<8x128xf32>
    %38 = arith.truncf %37 : vector<8x128xf32> to vector<8x128xbf16>
    %cst_23 = arith.constant dense<0.000000e+00> : vector<8x512xf32>
    %39 = tpu.matmul %38, %11, %cst_23 {dimension_numbers = #tpu.dot_dimension_numbers<[1], [0], [0], [1], [0, 0, 1, 1], [], []>} : vector<8x128xbf16>, vector<128x512xbf16>, vector<8x512xf32> -> vector<8x512xf32>
    %40 = vector.broadcast %12 : vector<1x512xf32> to vector<8x512xf32>
    %41 = arith.addf %39, %40 : vector<8x512xf32>
    %42 = arith.index_cast %c0_i32 : i32 to index
    %c0_24 = arith.constant 0 : index
    %c0_25 = arith.constant 0 : index
    %43 = vector.load %arg11[%42, %c0_24, %c0_25] : memref<8x8x512xf32, #tpu.memory_space<vmem>>, vector<1x8x512xf32>
    %44 = vector.shape_cast %43 : vector<1x8x512xf32> to vector<8x512xf32>
    %45 = vector.shape_cast %41 : vector<8x512xf32> to vector<1x8x512xf32>
    tpu.vector_store %arg11[%42, %c0_24, %c0_25], %45 {strides = array<i32>} : memref<8x8x512xf32, #tpu.memory_space<vmem>>, vector<1x8x512xf32>,
    %c1_i32 = arith.constant 1 : i32
    %46 = arith.index_cast %c1_i32 : i32 to index
    %c0_26 = arith.constant 0 : index
    %c0_27 = arith.constant 0 : index
    %47 = vector.load %arg10[%46, %c0_26, %c0_27] : memref<8x8x512xf32, #tpu.memory_space<vmem>>, vector<1x8x512xf32>
    %48 = vector.shape_cast %47 : vector<1x8x512xf32> to vector<8x512xf32>
    %cst_28 = arith.constant dense<0.000000e+00> : vector<8x512xf32>
    %49 = tpu.matmul %38, %10, %cst_28 {dimension_numbers = #tpu.dot_dimension_numbers<[1], [0], [0], [1], [0, 0, 1, 1], [], []>} : vector<8x128xbf16>, vector<128x512xbf16>, vector<8x512xf32> -> vector<8x512xf32>
    %50 = arith.addf %48, %49 : vector<8x512xf32>
    %51 = vector.extract_strided_slice %50 {offsets = [0, 0], sizes = [8, 384], strides = [1, 1]} : vector<8x512xf32> to vector<8x384xf32>
    %cst_29 = arith.constant 5.000000e-01 : f32
    %52 = vector.broadcast %cst_29 : f32 to vector<8x384xf32>
    %53 = arith.mulf %52, %51 : vector<8x384xf32>
    %54 = math.tanh %53 : vector<8x384xf32>
    %cst_30 = arith.constant 5.000000e-01 : f32
    %55 = vector.broadcast %cst_30 : f32 to vector<8x384xf32>
    %56 = arith.mulf %54, %55 : vector<8x384xf32>
    %cst_31 = arith.constant 5.000000e-01 : f32
    %57 = vector.broadcast %cst_31 : f32 to vector<8x384xf32>
    %58 = arith.addf %56, %57 : vector<8x384xf32>
    %59 = vector.extract_strided_slice %50 {offsets = [0, 384], sizes = [8, 128], strides = [1, 1]} : vector<8x512xf32> to vector<8x128xf32>
    %60 = math.tanh %59 : vector<8x128xf32>
    %61 = vector.extract_strided_slice %58 {offsets = [0, 0], sizes = [8, 128], strides = [1, 1]} : vector<8x384xf32> to vector<8x128xf32>
    %62 = vector.extract_strided_slice %58 {offsets = [0, 128], sizes = [8, 128], strides = [1, 1]} : vector<8x384xf32> to vector<8x128xf32>
    %63 = vector.extract_strided_slice %58 {offsets = [0, 256], sizes = [8, 128], strides = [1, 1]} : vector<8x384xf32> to vector<8x128xf32>
    %64 = arith.mulf %62, %35 : vector<8x128xf32>
    %65 = arith.mulf %61, %60 : vector<8x128xf32>
    %66 = arith.addf %64, %65 : vector<8x128xf32>
    %67 = math.tanh %66 : vector<8x128xf32>
    %68 = arith.mulf %63, %67 : vector<8x128xf32>
    %69 = arith.truncf %68 : vector<8x128xf32> to vector<8x128xbf16>
    %cst_32 = arith.constant dense<0.000000e+00> : vector<8x512xf32>
    %70 = tpu.matmul %69, %11, %cst_32 {dimension_numbers = #tpu.dot_dimension_numbers<[1], [0], [0], [1], [0, 0, 1, 1], [], []>} : vector<8x128xbf16>, vector<128x512xbf16>, vector<8x512xf32> -> vector<8x512xf32>
    %71 = vector.broadcast %12 : vector<1x512xf32> to vector<8x512xf32>
    %72 = arith.addf %70, %71 : vector<8x512xf32>
    %73 = arith.index_cast %c1_i32 : i32 to index
    %c0_33 = arith.constant 0 : index
    %c0_34 = arith.constant 0 : index
    %74 = vector.load %arg11[%73, %c0_33, %c0_34] : memref<8x8x512xf32, #tpu.memory_space<vmem>>, vector<1x8x512xf32>
    %75 = vector.shape_cast %74 : vector<1x8x512xf32> to vector<8x512xf32>
    %76 = vector.shape_cast %72 : vector<8x512xf32> to vector<1x8x512xf32>
    tpu.vector_store %arg11[%73, %c0_33, %c0_34], %76 {strides = array<i32>} : memref<8x8x512xf32, #tpu.memory_space<vmem>>, vector<1x8x512xf32>,
    %c2_i32 = arith.constant 2 : i32
    %77 = arith.index_cast %c2_i32 : i32 to index
    %c0_35 = arith.constant 0 : index
    %c0_36 = arith.constant 0 : index
    %78 = vector.load %arg10[%77, %c0_35, %c0_36] : memref<8x8x512xf32, #tpu.memory_space<vmem>>, vector<1x8x512xf32>
    %79 = vector.shape_cast %78 : vector<1x8x512xf32> to vector<8x512xf32>
    %cst_37 = arith.constant dense<0.000000e+00> : vector<8x512xf32>
    %80 = tpu.matmul %69, %10, %cst_37 {dimension_numbers = #tpu.dot_dimension_numbers<[1], [0], [0], [1], [0, 0, 1, 1], [], []>} : vector<8x128xbf16>, vector<128x512xbf16>, vector<8x512xf32> -> vector<8x512xf32>
    %81 = arith.addf %79, %80 : vector<8x512xf32>
    %82 = vector.extract_strided_slice %81 {offsets = [0, 0], sizes = [8, 384], strides = [1, 1]} : vector<8x512xf32> to vector<8x384xf32>
    %cst_38 = arith.constant 5.000000e-01 : f32
    %83 = vector.broadcast %cst_38 : f32 to vector<8x384xf32>
    %84 = arith.mulf %83, %82 : vector<8x384xf32>
    %85 = math.tanh %84 : vector<8x384xf32>
    %cst_39 = arith.constant 5.000000e-01 : f32
    %86 = vector.broadcast %cst_39 : f32 to vector<8x384xf32>
    %87 = arith.mulf %85, %86 : vector<8x384xf32>
    %cst_40 = arith.constant 5.000000e-01 : f32
    %88 = vector.broadcast %cst_40 : f32 to vector<8x384xf32>
    %89 = arith.addf %87, %88 : vector<8x384xf32>
    %90 = vector.extract_strided_slice %81 {offsets = [0, 384], sizes = [8, 128], strides = [1, 1]} : vector<8x512xf32> to vector<8x128xf32>
    %91 = math.tanh %90 : vector<8x128xf32>
    %92 = vector.extract_strided_slice %89 {offsets = [0, 0], sizes = [8, 128], strides = [1, 1]} : vector<8x384xf32> to vector<8x128xf32>
    %93 = vector.extract_strided_slice %89 {offsets = [0, 128], sizes = [8, 128], strides = [1, 1]} : vector<8x384xf32> to vector<8x128xf32>
    %94 = vector.extract_strided_slice %89 {offsets = [0, 256], sizes = [8, 128], strides = [1, 1]} : vector<8x384xf32> to vector<8x128xf32>
    %95 = arith.mulf %93, %66 : vector<8x128xf32>
    %96 = arith.mulf %92, %91 : vector<8x128xf32>
    %97 = arith.addf %95, %96 : vector<8x128xf32>
    %98 = math.tanh %97 : vector<8x128xf32>
    %99 = arith.mulf %94, %98 : vector<8x128xf32>
    %100 = arith.truncf %99 : vector<8x128xf32> to vector<8x128xbf16>
    %cst_41 = arith.constant dense<0.000000e+00> : vector<8x512xf32>
    %101 = tpu.matmul %100, %11, %cst_41 {dimension_numbers = #tpu.dot_dimension_numbers<[1], [0], [0], [1], [0, 0, 1, 1], [], []>} : vector<8x128xbf16>, vector<128x512xbf16>, vector<8x512xf32> -> vector<8x512xf32>
    %102 = vector.broadcast %12 : vector<1x512xf32> to vector<8x512xf32>
    %103 = arith.addf %101, %102 : vector<8x512xf32>
    %104 = arith.index_cast %c2_i32 : i32 to index
    %c0_42 = arith.constant 0 : index
    %c0_43 = arith.constant 0 : index
    %105 = vector.load %arg11[%104, %c0_42, %c0_43] : memref<8x8x512xf32, #tpu.memory_space<vmem>>, vector<1x8x512xf32>
    %106 = vector.shape_cast %105 : vector<1x8x512xf32> to vector<8x512xf32>
    %107 = vector.shape_cast %103 : vector<8x512xf32> to vector<1x8x512xf32>
    tpu.vector_store %arg11[%104, %c0_42, %c0_43], %107 {strides = array<i32>} : memref<8x8x512xf32, #tpu.memory_space<vmem>>, vector<1x8x512xf32>,
    %c3_i32 = arith.constant 3 : i32
    %108 = arith.index_cast %c3_i32 : i32 to index
    %c0_44 = arith.constant 0 : index
    %c0_45 = arith.constant 0 : index
    %109 = vector.load %arg10[%108, %c0_44, %c0_45] : memref<8x8x512xf32, #tpu.memory_space<vmem>>, vector<1x8x512xf32>
    %110 = vector.shape_cast %109 : vector<1x8x512xf32> to vector<8x512xf32>
    %cst_46 = arith.constant dense<0.000000e+00> : vector<8x512xf32>
    %111 = tpu.matmul %100, %10, %cst_46 {dimension_numbers = #tpu.dot_dimension_numbers<[1], [0], [0], [1], [0, 0, 1, 1], [], []>} : vector<8x128xbf16>, vector<128x512xbf16>, vector<8x512xf32> -> vector<8x512xf32>
    %112 = arith.addf %110, %111 : vector<8x512xf32>
    %113 = vector.extract_strided_slice %112 {offsets = [0, 0], sizes = [8, 384], strides = [1, 1]} : vector<8x512xf32> to vector<8x384xf32>
    %cst_47 = arith.constant 5.000000e-01 : f32
    %114 = vector.broadcast %cst_47 : f32 to vector<8x384xf32>
    %115 = arith.mulf %114, %113 : vector<8x384xf32>
    %116 = math.tanh %115 : vector<8x384xf32>
    %cst_48 = arith.constant 5.000000e-01 : f32
    %117 = vector.broadcast %cst_48 : f32 to vector<8x384xf32>
    %118 = arith.mulf %116, %117 : vector<8x384xf32>
    %cst_49 = arith.constant 5.000000e-01 : f32
    %119 = vector.broadcast %cst_49 : f32 to vector<8x384xf32>
    %120 = arith.addf %118, %119 : vector<8x384xf32>
    %121 = vector.extract_strided_slice %112 {offsets = [0, 384], sizes = [8, 128], strides = [1, 1]} : vector<8x512xf32> to vector<8x128xf32>
    %122 = math.tanh %121 : vector<8x128xf32>
    %123 = vector.extract_strided_slice %120 {offsets = [0, 0], sizes = [8, 128], strides = [1, 1]} : vector<8x384xf32> to vector<8x128xf32>
    %124 = vector.extract_strided_slice %120 {offsets = [0, 128], sizes = [8, 128], strides = [1, 1]} : vector<8x384xf32> to vector<8x128xf32>
    %125 = vector.extract_strided_slice %120 {offsets = [0, 256], sizes = [8, 128], strides = [1, 1]} : vector<8x384xf32> to vector<8x128xf32>
    %126 = arith.mulf %124, %97 : vector<8x128xf32>
    %127 = arith.mulf %123, %122 : vector<8x128xf32>
    %128 = arith.addf %126, %127 : vector<8x128xf32>
    %129 = math.tanh %128 : vector<8x128xf32>
    %130 = arith.mulf %125, %129 : vector<8x128xf32>
    %131 = arith.truncf %130 : vector<8x128xf32> to vector<8x128xbf16>
    %cst_50 = arith.constant dense<0.000000e+00> : vector<8x512xf32>
    %132 = tpu.matmul %131, %11, %cst_50 {dimension_numbers = #tpu.dot_dimension_numbers<[1], [0], [0], [1], [0, 0, 1, 1], [], []>} : vector<8x128xbf16>, vector<128x512xbf16>, vector<8x512xf32> -> vector<8x512xf32>
    %133 = vector.broadcast %12 : vector<1x512xf32> to vector<8x512xf32>
    %134 = arith.addf %132, %133 : vector<8x512xf32>
    %135 = arith.index_cast %c3_i32 : i32 to index
    %c0_51 = arith.constant 0 : index
    %c0_52 = arith.constant 0 : index
    %136 = vector.load %arg11[%135, %c0_51, %c0_52] : memref<8x8x512xf32, #tpu.memory_space<vmem>>, vector<1x8x512xf32>
    %137 = vector.shape_cast %136 : vector<1x8x512xf32> to vector<8x512xf32>
    %138 = vector.shape_cast %134 : vector<8x512xf32> to vector<1x8x512xf32>
    tpu.vector_store %arg11[%135, %c0_51, %c0_52], %138 {strides = array<i32>} : memref<8x8x512xf32, #tpu.memory_space<vmem>>, vector<1x8x512xf32>,
    %c4_i32 = arith.constant 4 : i32
    %139 = arith.index_cast %c4_i32 : i32 to index
    %c0_53 = arith.constant 0 : index
    %c0_54 = arith.constant 0 : index
    %140 = vector.load %arg10[%139, %c0_53, %c0_54] : memref<8x8x512xf32, #tpu.memory_space<vmem>>, vector<1x8x512xf32>
    %141 = vector.shape_cast %140 : vector<1x8x512xf32> to vector<8x512xf32>
    %cst_55 = arith.constant dense<0.000000e+00> : vector<8x512xf32>
    %142 = tpu.matmul %131, %10, %cst_55 {dimension_numbers = #tpu.dot_dimension_numbers<[1], [0], [0], [1], [0, 0, 1, 1], [], []>} : vector<8x128xbf16>, vector<128x512xbf16>, vector<8x512xf32> -> vector<8x512xf32>
    %143 = arith.addf %141, %142 : vector<8x512xf32>
    %144 = vector.extract_strided_slice %143 {offsets = [0, 0], sizes = [8, 384], strides = [1, 1]} : vector<8x512xf32> to vector<8x384xf32>
    %cst_56 = arith.constant 5.000000e-01 : f32
    %145 = vector.broadcast %cst_56 : f32 to vector<8x384xf32>
    %146 = arith.mulf %145, %144 : vector<8x384xf32>
    %147 = math.tanh %146 : vector<8x384xf32>
    %cst_57 = arith.constant 5.000000e-01 : f32
    %148 = vector.broadcast %cst_57 : f32 to vector<8x384xf32>
    %149 = arith.mulf %147, %148 : vector<8x384xf32>
    %cst_58 = arith.constant 5.000000e-01 : f32
    %150 = vector.broadcast %cst_58 : f32 to vector<8x384xf32>
    %151 = arith.addf %149, %150 : vector<8x384xf32>
    %152 = vector.extract_strided_slice %143 {offsets = [0, 384], sizes = [8, 128], strides = [1, 1]} : vector<8x512xf32> to vector<8x128xf32>
    %153 = math.tanh %152 : vector<8x128xf32>
    %154 = vector.extract_strided_slice %151 {offsets = [0, 0], sizes = [8, 128], strides = [1, 1]} : vector<8x384xf32> to vector<8x128xf32>
    %155 = vector.extract_strided_slice %151 {offsets = [0, 128], sizes = [8, 128], strides = [1, 1]} : vector<8x384xf32> to vector<8x128xf32>
    %156 = vector.extract_strided_slice %151 {offsets = [0, 256], sizes = [8, 128], strides = [1, 1]} : vector<8x384xf32> to vector<8x128xf32>
    %157 = arith.mulf %155, %128 : vector<8x128xf32>
    %158 = arith.mulf %154, %153 : vector<8x128xf32>
    %159 = arith.addf %157, %158 : vector<8x128xf32>
    %160 = math.tanh %159 : vector<8x128xf32>
    %161 = arith.mulf %156, %160 : vector<8x128xf32>
    %162 = arith.truncf %161 : vector<8x128xf32> to vector<8x128xbf16>
    %cst_59 = arith.constant dense<0.000000e+00> : vector<8x512xf32>
    %163 = tpu.matmul %162, %11, %cst_59 {dimension_numbers = #tpu.dot_dimension_numbers<[1], [0], [0], [1], [0, 0, 1, 1], [], []>} : vector<8x128xbf16>, vector<128x512xbf16>, vector<8x512xf32> -> vector<8x512xf32>
    %164 = vector.broadcast %12 : vector<1x512xf32> to vector<8x512xf32>
    %165 = arith.addf %163, %164 : vector<8x512xf32>
    %166 = arith.index_cast %c4_i32 : i32 to index
    %c0_60 = arith.constant 0 : index
    %c0_61 = arith.constant 0 : index
    %167 = vector.load %arg11[%166, %c0_60, %c0_61] : memref<8x8x512xf32, #tpu.memory_space<vmem>>, vector<1x8x512xf32>
    %168 = vector.shape_cast %167 : vector<1x8x512xf32> to vector<8x512xf32>
    %169 = vector.shape_cast %165 : vector<8x512xf32> to vector<1x8x512xf32>
    tpu.vector_store %arg11[%166, %c0_60, %c0_61], %169 {strides = array<i32>} : memref<8x8x512xf32, #tpu.memory_space<vmem>>, vector<1x8x512xf32>,
    %c5_i32 = arith.constant 5 : i32
    %170 = arith.index_cast %c5_i32 : i32 to index
    %c0_62 = arith.constant 0 : index
    %c0_63 = arith.constant 0 : index
    %171 = vector.load %arg10[%170, %c0_62, %c0_63] : memref<8x8x512xf32, #tpu.memory_space<vmem>>, vector<1x8x512xf32>
    %172 = vector.shape_cast %171 : vector<1x8x512xf32> to vector<8x512xf32>
    %cst_64 = arith.constant dense<0.000000e+00> : vector<8x512xf32>
    %173 = tpu.matmul %162, %10, %cst_64 {dimension_numbers = #tpu.dot_dimension_numbers<[1], [0], [0], [1], [0, 0, 1, 1], [], []>} : vector<8x128xbf16>, vector<128x512xbf16>, vector<8x512xf32> -> vector<8x512xf32>
    %174 = arith.addf %172, %173 : vector<8x512xf32>
    %175 = vector.extract_strided_slice %174 {offsets = [0, 0], sizes = [8, 384], strides = [1, 1]} : vector<8x512xf32> to vector<8x384xf32>
    %cst_65 = arith.constant 5.000000e-01 : f32
    %176 = vector.broadcast %cst_65 : f32 to vector<8x384xf32>
    %177 = arith.mulf %176, %175 : vector<8x384xf32>
    %178 = math.tanh %177 : vector<8x384xf32>
    %cst_66 = arith.constant 5.000000e-01 : f32
    %179 = vector.broadcast %cst_66 : f32 to vector<8x384xf32>
    %180 = arith.mulf %178, %179 : vector<8x384xf32>
    %cst_67 = arith.constant 5.000000e-01 : f32
    %181 = vector.broadcast %cst_67 : f32 to vector<8x384xf32>
    %182 = arith.addf %180, %181 : vector<8x384xf32>
    %183 = vector.extract_strided_slice %174 {offsets = [0, 384], sizes = [8, 128], strides = [1, 1]} : vector<8x512xf32> to vector<8x128xf32>
    %184 = math.tanh %183 : vector<8x128xf32>
    %185 = vector.extract_strided_slice %182 {offsets = [0, 0], sizes = [8, 128], strides = [1, 1]} : vector<8x384xf32> to vector<8x128xf32>
    %186 = vector.extract_strided_slice %182 {offsets = [0, 128], sizes = [8, 128], strides = [1, 1]} : vector<8x384xf32> to vector<8x128xf32>
    %187 = vector.extract_strided_slice %182 {offsets = [0, 256], sizes = [8, 128], strides = [1, 1]} : vector<8x384xf32> to vector<8x128xf32>
    %188 = arith.mulf %186, %159 : vector<8x128xf32>
    %189 = arith.mulf %185, %184 : vector<8x128xf32>
    %190 = arith.addf %188, %189 : vector<8x128xf32>
    %191 = math.tanh %190 : vector<8x128xf32>
    %192 = arith.mulf %187, %191 : vector<8x128xf32>
    %193 = arith.truncf %192 : vector<8x128xf32> to vector<8x128xbf16>
    %cst_68 = arith.constant dense<0.000000e+00> : vector<8x512xf32>
    %194 = tpu.matmul %193, %11, %cst_68 {dimension_numbers = #tpu.dot_dimension_numbers<[1], [0], [0], [1], [0, 0, 1, 1], [], []>} : vector<8x128xbf16>, vector<128x512xbf16>, vector<8x512xf32> -> vector<8x512xf32>
    %195 = vector.broadcast %12 : vector<1x512xf32> to vector<8x512xf32>
    %196 = arith.addf %194, %195 : vector<8x512xf32>
    %197 = arith.index_cast %c5_i32 : i32 to index
    %c0_69 = arith.constant 0 : index
    %c0_70 = arith.constant 0 : index
    %198 = vector.load %arg11[%197, %c0_69, %c0_70] : memref<8x8x512xf32, #tpu.memory_space<vmem>>, vector<1x8x512xf32>
    %199 = vector.shape_cast %198 : vector<1x8x512xf32> to vector<8x512xf32>
    %200 = vector.shape_cast %196 : vector<8x512xf32> to vector<1x8x512xf32>
    tpu.vector_store %arg11[%197, %c0_69, %c0_70], %200 {strides = array<i32>} : memref<8x8x512xf32, #tpu.memory_space<vmem>>, vector<1x8x512xf32>,
    %c6_i32 = arith.constant 6 : i32
    %201 = arith.index_cast %c6_i32 : i32 to index
    %c0_71 = arith.constant 0 : index
    %c0_72 = arith.constant 0 : index
    %202 = vector.load %arg10[%201, %c0_71, %c0_72] : memref<8x8x512xf32, #tpu.memory_space<vmem>>, vector<1x8x512xf32>
    %203 = vector.shape_cast %202 : vector<1x8x512xf32> to vector<8x512xf32>
    %cst_73 = arith.constant dense<0.000000e+00> : vector<8x512xf32>
    %204 = tpu.matmul %193, %10, %cst_73 {dimension_numbers = #tpu.dot_dimension_numbers<[1], [0], [0], [1], [0, 0, 1, 1], [], []>} : vector<8x128xbf16>, vector<128x512xbf16>, vector<8x512xf32> -> vector<8x512xf32>
    %205 = arith.addf %203, %204 : vector<8x512xf32>
    %206 = vector.extract_strided_slice %205 {offsets = [0, 0], sizes = [8, 384], strides = [1, 1]} : vector<8x512xf32> to vector<8x384xf32>
    %cst_74 = arith.constant 5.000000e-01 : f32
    %207 = vector.broadcast %cst_74 : f32 to vector<8x384xf32>
    %208 = arith.mulf %207, %206 : vector<8x384xf32>
    %209 = math.tanh %208 : vector<8x384xf32>
    %cst_75 = arith.constant 5.000000e-01 : f32
    %210 = vector.broadcast %cst_75 : f32 to vector<8x384xf32>
    %211 = arith.mulf %209, %210 : vector<8x384xf32>
    %cst_76 = arith.constant 5.000000e-01 : f32
    %212 = vector.broadcast %cst_76 : f32 to vector<8x384xf32>
    %213 = arith.addf %211, %212 : vector<8x384xf32>
    %214 = vector.extract_strided_slice %205 {offsets = [0, 384], sizes = [8, 128], strides = [1, 1]} : vector<8x512xf32> to vector<8x128xf32>
    %215 = math.tanh %214 : vector<8x128xf32>
    %216 = vector.extract_strided_slice %213 {offsets = [0, 0], sizes = [8, 128], strides = [1, 1]} : vector<8x384xf32> to vector<8x128xf32>
    %217 = vector.extract_strided_slice %213 {offsets = [0, 128], sizes = [8, 128], strides = [1, 1]} : vector<8x384xf32> to vector<8x128xf32>
    %218 = vector.extract_strided_slice %213 {offsets = [0, 256], sizes = [8, 128], strides = [1, 1]} : vector<8x384xf32> to vector<8x128xf32>
    %219 = arith.mulf %217, %190 : vector<8x128xf32>
    %220 = arith.mulf %216, %215 : vector<8x128xf32>
    %221 = arith.addf %219, %220 : vector<8x128xf32>
    %222 = math.tanh %221 : vector<8x128xf32>
    %223 = arith.mulf %218, %222 : vector<8x128xf32>
    %224 = arith.truncf %223 : vector<8x128xf32> to vector<8x128xbf16>
    %cst_77 = arith.constant dense<0.000000e+00> : vector<8x512xf32>
    %225 = tpu.matmul %224, %11, %cst_77 {dimension_numbers = #tpu.dot_dimension_numbers<[1], [0], [0], [1], [0, 0, 1, 1], [], []>} : vector<8x128xbf16>, vector<128x512xbf16>, vector<8x512xf32> -> vector<8x512xf32>
    %226 = vector.broadcast %12 : vector<1x512xf32> to vector<8x512xf32>
    %227 = arith.addf %225, %226 : vector<8x512xf32>
    %228 = arith.index_cast %c6_i32 : i32 to index
    %c0_78 = arith.constant 0 : index
    %c0_79 = arith.constant 0 : index
    %229 = vector.load %arg11[%228, %c0_78, %c0_79] : memref<8x8x512xf32, #tpu.memory_space<vmem>>, vector<1x8x512xf32>
    %230 = vector.shape_cast %229 : vector<1x8x512xf32> to vector<8x512xf32>
    %231 = vector.shape_cast %227 : vector<8x512xf32> to vector<1x8x512xf32>
    tpu.vector_store %arg11[%228, %c0_78, %c0_79], %231 {strides = array<i32>} : memref<8x8x512xf32, #tpu.memory_space<vmem>>, vector<1x8x512xf32>,
    %c7_i32 = arith.constant 7 : i32
    %232 = arith.index_cast %c7_i32 : i32 to index
    %c0_80 = arith.constant 0 : index
    %c0_81 = arith.constant 0 : index
    %233 = vector.load %arg10[%232, %c0_80, %c0_81] : memref<8x8x512xf32, #tpu.memory_space<vmem>>, vector<1x8x512xf32>
    %234 = vector.shape_cast %233 : vector<1x8x512xf32> to vector<8x512xf32>
    %cst_82 = arith.constant dense<0.000000e+00> : vector<8x512xf32>
    %235 = tpu.matmul %224, %10, %cst_82 {dimension_numbers = #tpu.dot_dimension_numbers<[1], [0], [0], [1], [0, 0, 1, 1], [], []>} : vector<8x128xbf16>, vector<128x512xbf16>, vector<8x512xf32> -> vector<8x512xf32>
    %236 = arith.addf %234, %235 : vector<8x512xf32>
    %237 = vector.extract_strided_slice %236 {offsets = [0, 0], sizes = [8, 384], strides = [1, 1]} : vector<8x512xf32> to vector<8x384xf32>
    %cst_83 = arith.constant 5.000000e-01 : f32
    %238 = vector.broadcast %cst_83 : f32 to vector<8x384xf32>
    %239 = arith.mulf %238, %237 : vector<8x384xf32>
    %240 = math.tanh %239 : vector<8x384xf32>
    %cst_84 = arith.constant 5.000000e-01 : f32
    %241 = vector.broadcast %cst_84 : f32 to vector<8x384xf32>
    %242 = arith.mulf %240, %241 : vector<8x384xf32>
    %cst_85 = arith.constant 5.000000e-01 : f32
    %243 = vector.broadcast %cst_85 : f32 to vector<8x384xf32>
    %244 = arith.addf %242, %243 : vector<8x384xf32>
    %245 = vector.extract_strided_slice %236 {offsets = [0, 384], sizes = [8, 128], strides = [1, 1]} : vector<8x512xf32> to vector<8x128xf32>
    %246 = math.tanh %245 : vector<8x128xf32>
    %247 = vector.extract_strided_slice %244 {offsets = [0, 0], sizes = [8, 128], strides = [1, 1]} : vector<8x384xf32> to vector<8x128xf32>
    %248 = vector.extract_strided_slice %244 {offsets = [0, 128], sizes = [8, 128], strides = [1, 1]} : vector<8x384xf32> to vector<8x128xf32>
    %249 = vector.extract_strided_slice %244 {offsets = [0, 256], sizes = [8, 128], strides = [1, 1]} : vector<8x384xf32> to vector<8x128xf32>
    %250 = arith.mulf %248, %221 : vector<8x128xf32>
    %251 = arith.mulf %247, %246 : vector<8x128xf32>
    %252 = arith.addf %250, %251 : vector<8x128xf32>
    %253 = math.tanh %252 : vector<8x128xf32>
    %254 = arith.mulf %249, %253 : vector<8x128xf32>
    %255 = arith.truncf %254 : vector<8x128xf32> to vector<8x128xbf16>
    %cst_86 = arith.constant dense<0.000000e+00> : vector<8x512xf32>
    %256 = tpu.matmul %255, %11, %cst_86 {dimension_numbers = #tpu.dot_dimension_numbers<[1], [0], [0], [1], [0, 0, 1, 1], [], []>} : vector<8x128xbf16>, vector<128x512xbf16>, vector<8x512xf32> -> vector<8x512xf32>
    %257 = vector.broadcast %12 : vector<1x512xf32> to vector<8x512xf32>
    %258 = arith.addf %256, %257 : vector<8x512xf32>
    %259 = arith.index_cast %c7_i32 : i32 to index
    %c0_87 = arith.constant 0 : index
    %c0_88 = arith.constant 0 : index
    %260 = vector.load %arg11[%259, %c0_87, %c0_88] : memref<8x8x512xf32, #tpu.memory_space<vmem>>, vector<1x8x512xf32>
    %261 = vector.shape_cast %260 : vector<1x8x512xf32> to vector<8x512xf32>
    %262 = vector.shape_cast %258 : vector<8x512xf32> to vector<1x8x512xf32>
    tpu.vector_store %arg11[%259, %c0_87, %c0_88], %262 {strides = array<i32>} : memref<8x8x512xf32, #tpu.memory_space<vmem>>, vector<1x8x512xf32>,
    %c8_i32 = arith.constant 8 : i32
    %c0_89 = arith.constant 0 : index
    %c0_90 = arith.constant 0 : index
    %263 = vector.load %arg5[%c0_89, %c0_90] : memref<128x512xbf16, #tpu.memory_space<vmem>>, vector<128x512xbf16>
    %cst_91 = arith.constant 0.000000e+00 : bf16
    %264 = vector.broadcast %cst_91 : bf16 to vector<8x128xbf16>
    %cst_92 = arith.constant 0.000000e+00 : f32
    %265 = vector.broadcast %cst_92 : f32 to vector<8x128xf32>
    %c0_i32_93 = arith.constant 0 : i32
    %266 = arith.index_cast %c0_i32_93 : i32 to index
    %c0_94 = arith.constant 0 : index
    %c0_95 = arith.constant 0 : index
    %267 = vector.load %arg11[%266, %c0_94, %c0_95] : memref<8x8x512xf32, #tpu.memory_space<vmem>>, vector<1x8x512xf32>
    %268 = vector.shape_cast %267 : vector<1x8x512xf32> to vector<8x512xf32>
    %cst_96 = arith.constant dense<0.000000e+00> : vector<8x512xf32>
    %269 = tpu.matmul %264, %263, %cst_96 {dimension_numbers = #tpu.dot_dimension_numbers<[1], [0], [0], [1], [0, 0, 1, 1], [], []>} : vector<8x128xbf16>, vector<128x512xbf16>, vector<8x512xf32> -> vector<8x512xf32>
    %270 = arith.addf %268, %269 : vector<8x512xf32>
    %271 = vector.extract_strided_slice %270 {offsets = [0, 0], sizes = [8, 384], strides = [1, 1]} : vector<8x512xf32> to vector<8x384xf32>
    %cst_97 = arith.constant 5.000000e-01 : f32
    %272 = vector.broadcast %cst_97 : f32 to vector<8x384xf32>
    %273 = arith.mulf %272, %271 : vector<8x384xf32>
    %274 = math.tanh %273 : vector<8x384xf32>
    %cst_98 = arith.constant 5.000000e-01 : f32
    %275 = vector.broadcast %cst_98 : f32 to vector<8x384xf32>
    %276 = arith.mulf %274, %275 : vector<8x384xf32>
    %cst_99 = arith.constant 5.000000e-01 : f32
    %277 = vector.broadcast %cst_99 : f32 to vector<8x384xf32>
    %278 = arith.addf %276, %277 : vector<8x384xf32>
    %279 = vector.extract_strided_slice %270 {offsets = [0, 384], sizes = [8, 128], strides = [1, 1]} : vector<8x512xf32> to vector<8x128xf32>
    %280 = math.tanh %279 : vector<8x128xf32>
    %281 = vector.extract_strided_slice %278 {offsets = [0, 0], sizes = [8, 128], strides = [1, 1]} : vector<8x384xf32> to vector<8x128xf32>
    %282 = vector.extract_strided_slice %278 {offsets = [0, 128], sizes = [8, 128], strides = [1, 1]} : vector<8x384xf32> to vector<8x128xf32>
    %283 = vector.extract_strided_slice %278 {offsets = [0, 256], sizes = [8, 128], strides = [1, 1]} : vector<8x384xf32> to vector<8x128xf32>
    %284 = arith.mulf %282, %265 : vector<8x128xf32>
    %285 = arith.mulf %281, %280 : vector<8x128xf32>
    %286 = arith.addf %284, %285 : vector<8x128xf32>
    %287 = math.tanh %286 : vector<8x128xf32>
    %288 = arith.mulf %283, %287 : vector<8x128xf32>
    %289 = arith.truncf %288 : vector<8x128xf32> to vector<8x128xbf16>
    %c1_i32_100 = arith.constant 1 : i32
    %290 = arith.index_cast %c1_i32_100 : i32 to index
    %c0_101 = arith.constant 0 : index
    %c0_102 = arith.constant 0 : index
    %291 = vector.load %arg11[%290, %c0_101, %c0_102] : memref<8x8x512xf32, #tpu.memory_space<vmem>>, vector<1x8x512xf32>
    %292 = vector.shape_cast %291 : vector<1x8x512xf32> to vector<8x512xf32>
    %cst_103 = arith.constant dense<0.000000e+00> : vector<8x512xf32>
    %293 = tpu.matmul %289, %263, %cst_103 {dimension_numbers = #tpu.dot_dimension_numbers<[1], [0], [0], [1], [0, 0, 1, 1], [], []>} : vector<8x128xbf16>, vector<128x512xbf16>, vector<8x512xf32> -> vector<8x512xf32>
    %294 = arith.addf %292, %293 : vector<8x512xf32>
    %295 = vector.extract_strided_slice %294 {offsets = [0, 0], sizes = [8, 384], strides = [1, 1]} : vector<8x512xf32> to vector<8x384xf32>
    %cst_104 = arith.constant 5.000000e-01 : f32
    %296 = vector.broadcast %cst_104 : f32 to vector<8x384xf32>
    %297 = arith.mulf %296, %295 : vector<8x384xf32>
    %298 = math.tanh %297 : vector<8x384xf32>
    %cst_105 = arith.constant 5.000000e-01 : f32
    %299 = vector.broadcast %cst_105 : f32 to vector<8x384xf32>
    %300 = arith.mulf %298, %299 : vector<8x384xf32>
    %cst_106 = arith.constant 5.000000e-01 : f32
    %301 = vector.broadcast %cst_106 : f32 to vector<8x384xf32>
    %302 = arith.addf %300, %301 : vector<8x384xf32>
    %303 = vector.extract_strided_slice %294 {offsets = [0, 384], sizes = [8, 128], strides = [1, 1]} : vector<8x512xf32> to vector<8x128xf32>
    %304 = math.tanh %303 : vector<8x128xf32>
    %305 = vector.extract_strided_slice %302 {offsets = [0, 0], sizes = [8, 128], strides = [1, 1]} : vector<8x384xf32> to vector<8x128xf32>
    %306 = vector.extract_strided_slice %302 {offsets = [0, 128], sizes = [8, 128], strides = [1, 1]} : vector<8x384xf32> to vector<8x128xf32>
    %307 = vector.extract_strided_slice %302 {offsets = [0, 256], sizes = [8, 128], strides = [1, 1]} : vector<8x384xf32> to vector<8x128xf32>
    %308 = arith.mulf %306, %286 : vector<8x128xf32>
    %309 = arith.mulf %305, %304 : vector<8x128xf32>
    %310 = arith.addf %308, %309 : vector<8x128xf32>
    %311 = math.tanh %310 : vector<8x128xf32>
    %312 = arith.mulf %307, %311 : vector<8x128xf32>
    %313 = arith.truncf %312 : vector<8x128xf32> to vector<8x128xbf16>
    %c2_i32_107 = arith.constant 2 : i32
    %314 = arith.index_cast %c2_i32_107 : i32 to index
    %c0_108 = arith.constant 0 : index
    %c0_109 = arith.constant 0 : index
    %315 = vector.load %arg11[%314, %c0_108, %c0_109] : memref<8x8x512xf32, #tpu.memory_space<vmem>>, vector<1x8x512xf32>
    %316 = vector.shape_cast %315 : vector<1x8x512xf32> to vector<8x512xf32>
    %cst_110 = arith.constant dense<0.000000e+00> : vector<8x512xf32>
    %317 = tpu.matmul %313, %263, %cst_110 {dimension_numbers = #tpu.dot_dimension_numbers<[1], [0], [0], [1], [0, 0, 1, 1], [], []>} : vector<8x128xbf16>, vector<128x512xbf16>, vector<8x512xf32> -> vector<8x512xf32>
    %318 = arith.addf %316, %317 : vector<8x512xf32>
    %319 = vector.extract_strided_slice %318 {offsets = [0, 0], sizes = [8, 384], strides = [1, 1]} : vector<8x512xf32> to vector<8x384xf32>
    %cst_111 = arith.constant 5.000000e-01 : f32
    %320 = vector.broadcast %cst_111 : f32 to vector<8x384xf32>
    %321 = arith.mulf %320, %319 : vector<8x384xf32>
    %322 = math.tanh %321 : vector<8x384xf32>
    %cst_112 = arith.constant 5.000000e-01 : f32
    %323 = vector.broadcast %cst_112 : f32 to vector<8x384xf32>
    %324 = arith.mulf %322, %323 : vector<8x384xf32>
    %cst_113 = arith.constant 5.000000e-01 : f32
    %325 = vector.broadcast %cst_113 : f32 to vector<8x384xf32>
    %326 = arith.addf %324, %325 : vector<8x384xf32>
    %327 = vector.extract_strided_slice %318 {offsets = [0, 384], sizes = [8, 128], strides = [1, 1]} : vector<8x512xf32> to vector<8x128xf32>
    %328 = math.tanh %327 : vector<8x128xf32>
    %329 = vector.extract_strided_slice %326 {offsets = [0, 0], sizes = [8, 128], strides = [1, 1]} : vector<8x384xf32> to vector<8x128xf32>
    %330 = vector.extract_strided_slice %326 {offsets = [0, 128], sizes = [8, 128], strides = [1, 1]} : vector<8x384xf32> to vector<8x128xf32>
    %331 = vector.extract_strided_slice %326 {offsets = [0, 256], sizes = [8, 128], strides = [1, 1]} : vector<8x384xf32> to vector<8x128xf32>
    %332 = arith.mulf %330, %310 : vector<8x128xf32>
    %333 = arith.mulf %329, %328 : vector<8x128xf32>
    %334 = arith.addf %332, %333 : vector<8x128xf32>
    %335 = math.tanh %334 : vector<8x128xf32>
    %336 = arith.mulf %331, %335 : vector<8x128xf32>
    %337 = arith.truncf %336 : vector<8x128xf32> to vector<8x128xbf16>
    %c3_i32_114 = arith.constant 3 : i32
    %338 = arith.index_cast %c3_i32_114 : i32 to index
    %c0_115 = arith.constant 0 : index
    %c0_116 = arith.constant 0 : index
    %339 = vector.load %arg11[%338, %c0_115, %c0_116] : memref<8x8x512xf32, #tpu.memory_space<vmem>>, vector<1x8x512xf32>
    %340 = vector.shape_cast %339 : vector<1x8x512xf32> to vector<8x512xf32>
    %cst_117 = arith.constant dense<0.000000e+00> : vector<8x512xf32>
    %341 = tpu.matmul %337, %263, %cst_117 {dimension_numbers = #tpu.dot_dimension_numbers<[1], [0], [0], [1], [0, 0, 1, 1], [], []>} : vector<8x128xbf16>, vector<128x512xbf16>, vector<8x512xf32> -> vector<8x512xf32>
    %342 = arith.addf %340, %341 : vector<8x512xf32>
    %343 = vector.extract_strided_slice %342 {offsets = [0, 0], sizes = [8, 384], strides = [1, 1]} : vector<8x512xf32> to vector<8x384xf32>
    %cst_118 = arith.constant 5.000000e-01 : f32
    %344 = vector.broadcast %cst_118 : f32 to vector<8x384xf32>
    %345 = arith.mulf %344, %343 : vector<8x384xf32>
    %346 = math.tanh %345 : vector<8x384xf32>
    %cst_119 = arith.constant 5.000000e-01 : f32
    %347 = vector.broadcast %cst_119 : f32 to vector<8x384xf32>
    %348 = arith.mulf %346, %347 : vector<8x384xf32>
    %cst_120 = arith.constant 5.000000e-01 : f32
    %349 = vector.broadcast %cst_120 : f32 to vector<8x384xf32>
    %350 = arith.addf %348, %349 : vector<8x384xf32>
    %351 = vector.extract_strided_slice %342 {offsets = [0, 384], sizes = [8, 128], strides = [1, 1]} : vector<8x512xf32> to vector<8x128xf32>
    %352 = math.tanh %351 : vector<8x128xf32>
    %353 = vector.extract_strided_slice %350 {offsets = [0, 0], sizes = [8, 128], strides = [1, 1]} : vector<8x384xf32> to vector<8x128xf32>
    %354 = vector.extract_strided_slice %350 {offsets = [0, 128], sizes = [8, 128], strides = [1, 1]} : vector<8x384xf32> to vector<8x128xf32>
    %355 = vector.extract_strided_slice %350 {offsets = [0, 256], sizes = [8, 128], strides = [1, 1]} : vector<8x384xf32> to vector<8x128xf32>
    %356 = arith.mulf %354, %334 : vector<8x128xf32>
    %357 = arith.mulf %353, %352 : vector<8x128xf32>
    %358 = arith.addf %356, %357 : vector<8x128xf32>
    %359 = math.tanh %358 : vector<8x128xf32>
    %360 = arith.mulf %355, %359 : vector<8x128xf32>
    %361 = arith.truncf %360 : vector<8x128xf32> to vector<8x128xbf16>
    %c4_i32_121 = arith.constant 4 : i32
    %362 = arith.index_cast %c4_i32_121 : i32 to index
    %c0_122 = arith.constant 0 : index
    %c0_123 = arith.constant 0 : index
    %363 = vector.load %arg11[%362, %c0_122, %c0_123] : memref<8x8x512xf32, #tpu.memory_space<vmem>>, vector<1x8x512xf32>
    %364 = vector.shape_cast %363 : vector<1x8x512xf32> to vector<8x512xf32>
    %cst_124 = arith.constant dense<0.000000e+00> : vector<8x512xf32>
    %365 = tpu.matmul %361, %263, %cst_124 {dimension_numbers = #tpu.dot_dimension_numbers<[1], [0], [0], [1], [0, 0, 1, 1], [], []>} : vector<8x128xbf16>, vector<128x512xbf16>, vector<8x512xf32> -> vector<8x512xf32>
    %366 = arith.addf %364, %365 : vector<8x512xf32>
    %367 = vector.extract_strided_slice %366 {offsets = [0, 0], sizes = [8, 384], strides = [1, 1]} : vector<8x512xf32> to vector<8x384xf32>
    %cst_125 = arith.constant 5.000000e-01 : f32
    %368 = vector.broadcast %cst_125 : f32 to vector<8x384xf32>
    %369 = arith.mulf %368, %367 : vector<8x384xf32>
    %370 = math.tanh %369 : vector<8x384xf32>
    %cst_126 = arith.constant 5.000000e-01 : f32
    %371 = vector.broadcast %cst_126 : f32 to vector<8x384xf32>
    %372 = arith.mulf %370, %371 : vector<8x384xf32>
    %cst_127 = arith.constant 5.000000e-01 : f32
    %373 = vector.broadcast %cst_127 : f32 to vector<8x384xf32>
    %374 = arith.addf %372, %373 : vector<8x384xf32>
    %375 = vector.extract_strided_slice %366 {offsets = [0, 384], sizes = [8, 128], strides = [1, 1]} : vector<8x512xf32> to vector<8x128xf32>
    %376 = math.tanh %375 : vector<8x128xf32>
    %377 = vector.extract_strided_slice %374 {offsets = [0, 0], sizes = [8, 128], strides = [1, 1]} : vector<8x384xf32> to vector<8x128xf32>
    %378 = vector.extract_strided_slice %374 {offsets = [0, 128], sizes = [8, 128], strides = [1, 1]} : vector<8x384xf32> to vector<8x128xf32>
    %379 = vector.extract_strided_slice %374 {offsets = [0, 256], sizes = [8, 128], strides = [1, 1]} : vector<8x384xf32> to vector<8x128xf32>
    %380 = arith.mulf %378, %358 : vector<8x128xf32>
    %381 = arith.mulf %377, %376 : vector<8x128xf32>
    %382 = arith.addf %380, %381 : vector<8x128xf32>
    %383 = math.tanh %382 : vector<8x128xf32>
    %384 = arith.mulf %379, %383 : vector<8x128xf32>
    %385 = arith.truncf %384 : vector<8x128xf32> to vector<8x128xbf16>
    %c5_i32_128 = arith.constant 5 : i32
    %386 = arith.index_cast %c5_i32_128 : i32 to index
    %c0_129 = arith.constant 0 : index
    %c0_130 = arith.constant 0 : index
    %387 = vector.load %arg11[%386, %c0_129, %c0_130] : memref<8x8x512xf32, #tpu.memory_space<vmem>>, vector<1x8x512xf32>
    %388 = vector.shape_cast %387 : vector<1x8x512xf32> to vector<8x512xf32>
    %cst_131 = arith.constant dense<0.000000e+00> : vector<8x512xf32>
    %389 = tpu.matmul %385, %263, %cst_131 {dimension_numbers = #tpu.dot_dimension_numbers<[1], [0], [0], [1], [0, 0, 1, 1], [], []>} : vector<8x128xbf16>, vector<128x512xbf16>, vector<8x512xf32> -> vector<8x512xf32>
    %390 = arith.addf %388, %389 : vector<8x512xf32>
    %391 = vector.extract_strided_slice %390 {offsets = [0, 0], sizes = [8, 384], strides = [1, 1]} : vector<8x512xf32> to vector<8x384xf32>
    %cst_132 = arith.constant 5.000000e-01 : f32
    %392 = vector.broadcast %cst_132 : f32 to vector<8x384xf32>
    %393 = arith.mulf %392, %391 : vector<8x384xf32>
    %394 = math.tanh %393 : vector<8x384xf32>
    %cst_133 = arith.constant 5.000000e-01 : f32
    %395 = vector.broadcast %cst_133 : f32 to vector<8x384xf32>
    %396 = arith.mulf %394, %395 : vector<8x384xf32>
    %cst_134 = arith.constant 5.000000e-01 : f32
    %397 = vector.broadcast %cst_134 : f32 to vector<8x384xf32>
    %398 = arith.addf %396, %397 : vector<8x384xf32>
    %399 = vector.extract_strided_slice %390 {offsets = [0, 384], sizes = [8, 128], strides = [1, 1]} : vector<8x512xf32> to vector<8x128xf32>
    %400 = math.tanh %399 : vector<8x128xf32>
    %401 = vector.extract_strided_slice %398 {offsets = [0, 0], sizes = [8, 128], strides = [1, 1]} : vector<8x384xf32> to vector<8x128xf32>
    %402 = vector.extract_strided_slice %398 {offsets = [0, 128], sizes = [8, 128], strides = [1, 1]} : vector<8x384xf32> to vector<8x128xf32>
    %403 = vector.extract_strided_slice %398 {offsets = [0, 256], sizes = [8, 128], strides = [1, 1]} : vector<8x384xf32> to vector<8x128xf32>
    %404 = arith.mulf %402, %382 : vector<8x128xf32>
    %405 = arith.mulf %401, %400 : vector<8x128xf32>
    %406 = arith.addf %404, %405 : vector<8x128xf32>
    %407 = math.tanh %406 : vector<8x128xf32>
    %408 = arith.mulf %403, %407 : vector<8x128xf32>
    %409 = arith.truncf %408 : vector<8x128xf32> to vector<8x128xbf16>
    %c6_i32_135 = arith.constant 6 : i32
    %410 = arith.index_cast %c6_i32_135 : i32 to index
    %c0_136 = arith.constant 0 : index
    %c0_137 = arith.constant 0 : index
    %411 = vector.load %arg11[%410, %c0_136, %c0_137] : memref<8x8x512xf32, #tpu.memory_space<vmem>>, vector<1x8x512xf32>
    %412 = vector.shape_cast %411 : vector<1x8x512xf32> to vector<8x512xf32>
    %cst_138 = arith.constant dense<0.000000e+00> : vector<8x512xf32>
    %413 = tpu.matmul %409, %263, %cst_138 {dimension_numbers = #tpu.dot_dimension_numbers<[1], [0], [0], [1], [0, 0, 1, 1], [], []>} : vector<8x128xbf16>, vector<128x512xbf16>, vector<8x512xf32> -> vector<8x512xf32>
    %414 = arith.addf %412, %413 : vector<8x512xf32>
    %415 = vector.extract_strided_slice %414 {offsets = [0, 0], sizes = [8, 384], strides = [1, 1]} : vector<8x512xf32> to vector<8x384xf32>
    %cst_139 = arith.constant 5.000000e-01 : f32
    %416 = vector.broadcast %cst_139 : f32 to vector<8x384xf32>
    %417 = arith.mulf %416, %415 : vector<8x384xf32>
    %418 = math.tanh %417 : vector<8x384xf32>
    %cst_140 = arith.constant 5.000000e-01 : f32
    %419 = vector.broadcast %cst_140 : f32 to vector<8x384xf32>
    %420 = arith.mulf %418, %419 : vector<8x384xf32>
    %cst_141 = arith.constant 5.000000e-01 : f32
    %421 = vector.broadcast %cst_141 : f32 to vector<8x384xf32>
    %422 = arith.addf %420, %421 : vector<8x384xf32>
    %423 = vector.extract_strided_slice %414 {offsets = [0, 384], sizes = [8, 128], strides = [1, 1]} : vector<8x512xf32> to vector<8x128xf32>
    %424 = math.tanh %423 : vector<8x128xf32>
    %425 = vector.extract_strided_slice %422 {offsets = [0, 0], sizes = [8, 128], strides = [1, 1]} : vector<8x384xf32> to vector<8x128xf32>
    %426 = vector.extract_strided_slice %422 {offsets = [0, 128], sizes = [8, 128], strides = [1, 1]} : vector<8x384xf32> to vector<8x128xf32>
    %427 = vector.extract_strided_slice %422 {offsets = [0, 256], sizes = [8, 128], strides = [1, 1]} : vector<8x384xf32> to vector<8x128xf32>
    %428 = arith.mulf %426, %406 : vector<8x128xf32>
    %429 = arith.mulf %425, %424 : vector<8x128xf32>
    %430 = arith.addf %428, %429 : vector<8x128xf32>
    %431 = math.tanh %430 : vector<8x128xf32>
    %432 = arith.mulf %427, %431 : vector<8x128xf32>
    %433 = arith.truncf %432 : vector<8x128xf32> to vector<8x128xbf16>
    %c7_i32_142 = arith.constant 7 : i32
    %434 = arith.index_cast %c7_i32_142 : i32 to index
    %c0_143 = arith.constant 0 : index
    %c0_144 = arith.constant 0 : index
    %435 = vector.load %arg11[%434, %c0_143, %c0_144] : memref<8x8x512xf32, #tpu.memory_space<vmem>>, vector<1x8x512xf32>
    %436 = vector.shape_cast %435 : vector<1x8x512xf32> to vector<8x512xf32>
    %cst_145 = arith.constant dense<0.000000e+00> : vector<8x512xf32>
    %437 = tpu.matmul %433, %263, %cst_145 {dimension_numbers = #tpu.dot_dimension_numbers<[1], [0], [0], [1], [0, 0, 1, 1], [], []>} : vector<8x128xbf16>, vector<128x512xbf16>, vector<8x512xf32> -> vector<8x512xf32>
    %438 = arith.addf %436, %437 : vector<8x512xf32>
    %439 = vector.extract_strided_slice %438 {offsets = [0, 0], sizes = [8, 384], strides = [1, 1]} : vector<8x512xf32> to vector<8x384xf32>
    %cst_146 = arith.constant 5.000000e-01 : f32
    %440 = vector.broadcast %cst_146 : f32 to vector<8x384xf32>
    %441 = arith.mulf %440, %439 : vector<8x384xf32>
    %442 = math.tanh %441 : vector<8x384xf32>
    %cst_147 = arith.constant 5.000000e-01 : f32
    %443 = vector.broadcast %cst_147 : f32 to vector<8x384xf32>
    %444 = arith.mulf %442, %443 : vector<8x384xf32>
    %cst_148 = arith.constant 5.000000e-01 : f32
    %445 = vector.broadcast %cst_148 : f32 to vector<8x384xf32>
    %446 = arith.addf %444, %445 : vector<8x384xf32>
    %447 = vector.extract_strided_slice %438 {offsets = [0, 384], sizes = [8, 128], strides = [1, 1]} : vector<8x512xf32> to vector<8x128xf32>
    %448 = math.tanh %447 : vector<8x128xf32>
    %449 = vector.extract_strided_slice %446 {offsets = [0, 0], sizes = [8, 128], strides = [1, 1]} : vector<8x384xf32> to vector<8x128xf32>
    %450 = vector.extract_strided_slice %446 {offsets = [0, 128], sizes = [8, 128], strides = [1, 1]} : vector<8x384xf32> to vector<8x128xf32>
    %451 = vector.extract_strided_slice %446 {offsets = [0, 256], sizes = [8, 128], strides = [1, 1]} : vector<8x384xf32> to vector<8x128xf32>
    %452 = arith.mulf %450, %430 : vector<8x128xf32>
    %453 = arith.mulf %449, %448 : vector<8x128xf32>
    %454 = arith.addf %452, %453 : vector<8x128xf32>
    %455 = math.tanh %454 : vector<8x128xf32>
    %456 = arith.mulf %451, %455 : vector<8x128xf32>
    %457 = arith.truncf %456 : vector<8x128xf32> to vector<8x128xbf16>
    %c8_i32_149 = arith.constant 8 : i32
    %c0_150 = arith.constant 0 : index
    %c0_151 = arith.constant 0 : index
    %458 = vector.load %arg7[%c0_150, %c0_151] : memref<128x128xbf16, #tpu.memory_space<vmem>>, vector<128x128xbf16>
    %c0_152 = arith.constant 0 : index
    %c0_153 = arith.constant 0 : index
    %459 = vector.load %arg8[%c0_152, %c0_153] : memref<1x128xf32, #tpu.memory_space<vmem>>, vector<1x128xf32>
    %cst_154 = arith.constant dense<0.000000e+00> : vector<8x128xf32>
    %460 = tpu.matmul %457, %458, %cst_154 {dimension_numbers = #tpu.dot_dimension_numbers<[1], [0], [0], [1], [0, 0, 1, 1], [], []>} : vector<8x128xbf16>, vector<128x128xbf16>, vector<8x128xf32> -> vector<8x128xf32>
    %461 = vector.broadcast %459 : vector<1x128xf32> to vector<8x128xf32>
    %462 = arith.addf %460, %461 : vector<8x128xf32>
    %c0_155 = arith.constant 0 : index
    %c0_156 = arith.constant 0 : index
    %463 = vector.load %arg9[%c0_155, %c0_156] : memref<8x128xf32, #tpu.memory_space<vmem>>, vector<8x128xf32>
    tpu.vector_store %arg9[%c0_155, %c0_156], %462 {strides = array<i32>} : memref<8x128xf32, #tpu.memory_space<vmem>>, vector<8x128xf32>,
    return
  }
}

</mosaic_0001>

<llo_original>
// kernel: forward.1
$region0: #{forward.1}
  #allocation0 [shape = 'u32[]', space=smem, size = 0x4, offset = 0x4, fixed_abs, tag = 'smem constant byte address 0x4 - core index']
  #allocation1 [shape = 'u32[144,128]{1,0:T(1,128)}', space=vmem, size = 0x12000, scoped, tag = 'internal scratch']
  #allocation2 [shape = 'f32[8,8,512]{2,1,0:T(8,128)}', space=vmem, size = 0x20000, scoped, tag = 'scratch operand']
  #allocation3 [shape = 'f32[8,8,512]{2,1,0:T(8,128)}', space=vmem, size = 0x20000, scoped, tag = 'scratch operand']
  %s0 = inlined_call_operand.vmem [shape: f32[8,8,128], index: 0, kind: input, shape index: {}]
  %s1 = inlined_call_operand.hbm [shape: bf16[128,512], index: 1, kind: input, shape index: {}]
  %s2 = inlined_call_operand.hbm [shape: bf16[128,512], index: 2, kind: input, shape index: {}]
  %s3 = inlined_call_operand.vmem [shape: f32[1,512], index: 3, kind: input, shape index: {}]
  %s4 = inlined_call_operand.hbm [shape: bf16[128,512], index: 4, kind: input, shape index: {}]
  %s5 = inlined_call_operand.hbm [shape: bf16[128,512], index: 5, kind: input, shape index: {}]
  %s6 = inlined_call_operand.vmem [shape: f32[1,512], index: 6, kind: input, shape index: {}]
  %s7 = inlined_call_operand.vmem [shape: bf16[128,128], index: 7, kind: input, shape index: {}]
  %s8 = inlined_call_operand.vmem [shape: f32[1,128], index: 8, kind: input, shape index: {}]
  %s9 = inlined_call_operand.vmem [shape: f32[8,128], index: 9, kind: output, shape index: {}]
  %s10 = sld [smem:[#allocation0]]
  $region62: #{forward.1} parent=0
    _
  %s12 = ssub.s32 1, %s10
  %s13 = scalar_select 0, %s12, %s10
  $region1: #{forward.1} parent=0
    #allocation4 [shape = 'u8[131072]{0}', space=vmem, size = 0x20000, scoped, tag = 'input window, operand 1, single buffered']
    #allocation5 [shape = 's32[1]{0}', space=sflag, size = 0x4, scoped, tag = 'scoped memory for forward.1']
    #allocation6 [shape = 'u8[131072]{0}', space=vmem, size = 0x20000, scoped, tag = 'input window, operand 2, single buffered']
    #allocation7 [shape = 's32[1]{0}', space=sflag, size = 0x4, scoped, tag = 'scoped memory for forward.1']
    #allocation8 [shape = 'u8[131072]{0}', space=vmem, size = 0x20000, scoped, tag = 'input window, operand 4, single buffered']
    #allocation9 [shape = 'u8[131072]{0}', space=vmem, size = 0x20000, scoped, tag = 'input window, operand 5, single buffered']
    #allocation10 [shape = 's32[1]{0}', space=sflag, size = 0x4, scoped, tag = 'scoped memory for forward.1']
    %14 = vsyncpa [#allocation5], 0
    %15 = vsyncpa [#allocation7], 0
    %16 = vsyncpa [#allocation10], 0
    // Predicated region
    $region2: #{forward.1} parent=1 // pred_check
      _
    $region3: #{forward.1} parent=1 // pred_check_branch
      %18 = sbr.rel (0) target = $region5
    $region4: #{forward.1} parent=1 // pred_region
      _
    $region5: #{forward.1} parent=1 // pred_fallthru
      _
    // Predicated region
    $region6: #{forward.1} parent=1 // pred_check
      _
    $region7: #{forward.1} parent=1 // pred_check_branch
      %20 = sbr.rel (0) target = $region9
    $region8: #{forward.1} parent=1 // pred_region
      %s22 = ssub.s32 4096, 4096
      %23 = vsyncadd [#allocation5], %s22
      %s24 = sshll.u32 [#allocation4], 4
      %s25 = int_to_ptr.vmem [resolvable:$true] %s24
      %30 = dma.hbm_to_vmem [thread:$0]  %s1, 4096, %s25, [#allocation5], 256, 256, 16
    $region9: #{forward.1} parent=1 // pred_fallthru
      _
    // Predicated region
    $region10: #{forward.1} parent=1 // pred_check
      _
    $region11: #{forward.1} parent=1 // pred_check_branch
      %32 = sbr.rel (0) target = $region13
    $region12: #{forward.1} parent=1 // pred_region
      %s34 = ssub.s32 4096, 4096
      %35 = vsyncadd [#allocation7], %s34
      %s36 = sshll.u32 [#allocation6], 4
      %s37 = int_to_ptr.vmem [resolvable:$true] %s36
      %42 = dma.hbm_to_vmem [thread:$0]  %s2, 4096, %s37, [#allocation7], 256, 256, 16
    $region13: #{forward.1} parent=1 // pred_fallthru
      _
    // Predicated region
    $region14: #{forward.1} parent=1 // pred_check
      _
    $region15: #{forward.1} parent=1 // pred_check_branch
      %44 = sbr.rel (0) target = $region17
    $region16: #{forward.1} parent=1 // pred_region
      _
    $region17: #{forward.1} parent=1 // pred_fallthru
      _
    // Predicated region
    $region18: #{forward.1} parent=1 // pred_check
      _
    $region19: #{forward.1} parent=1 // pred_check_branch
      %46 = sbr.rel (0) target = $region21
    $region20: #{forward.1} parent=1 // pred_region
      %s48 = ssub.s32 4096, 4096
      %49 = vsyncadd [#allocation7], %s48
      %s50 = sshll.u32 [#allocation8], 4
      %s51 = int_to_ptr.vmem [resolvable:$true] %s50
      %56 = dma.hbm_to_vmem [thread:$0]  %s4, 4096, %s51, [#allocation7], 256, 256, 16
    $region21: #{forward.1} parent=1 // pred_fallthru
      _
    // Predicated region
    $region22: #{forward.1} parent=1 // pred_check
      _
    $region23: #{forward.1} parent=1 // pred_check_branch
      %58 = sbr.rel (0) target = $region25
    $region24: #{forward.1} parent=1 // pred_region
      %s60 = ssub.s32 4096, 4096
      %61 = vsyncadd [#allocation10], %s60
      %s62 = sshll.u32 [#allocation9], 4
      %s63 = int_to_ptr.vmem [resolvable:$true] %s62
      %68 = dma.hbm_to_vmem [thread:$0]  %s5, 4096, %s63, [#allocation10], 256, 256, 16
    $region25: #{forward.1} parent=1 // pred_fallthru
      _
    // Predicated region
    $region26: #{forward.1} parent=1 // pred_check
      _
    $region27: #{forward.1} parent=1 // pred_check_branch
      %70 = sbr.rel (0) target = $region29
    $region28: #{forward.1} parent=1 // pred_region
      _
    $region29: #{forward.1} parent=1 // pred_fallthru
      _
    // Predicated region
    $region30: #{forward.1} parent=1 // pred_check
      _
    $region31: #{forward.1} parent=1 // pred_check_branch
      %72 = sbr.rel (0) target = $region33
    $region32: #{forward.1} parent=1 // pred_region
      _
    $region33: #{forward.1} parent=1 // pred_fallthru
      _
    // Predicated region
    $region34: #{forward.1} parent=1 // pred_check
      _
    $region35: #{forward.1} parent=1 // pred_check_branch
      %74 = sbr.rel (0) target = $region37
    $region36: #{forward.1} parent=1 // pred_region
      _
    $region37: #{forward.1} parent=1 // pred_fallthru
      _
    // Predicated region
    $region38: #{forward.1} parent=1 // pred_check
      _
    $region39: #{forward.1} parent=1 // pred_check_branch
      %76 = sbr.rel (0) target = $region41
    $region40: #{forward.1} parent=1 // pred_region
      %77 = dma.done [#allocation5], 4096
    $region41: #{forward.1} parent=1 // pred_fallthru
      _
    // Predicated region
    $region42: #{forward.1} parent=1 // pred_check
      _
    $region43: #{forward.1} parent=1 // pred_check_branch
      %79 = sbr.rel (0) target = $region45
    $region44: #{forward.1} parent=1 // pred_region
      %80 = dma.done [#allocation7], 4096
    $region45: #{forward.1} parent=1 // pred_fallthru
      _
    // Predicated region
    $region46: #{forward.1} parent=1 // pred_check
      _
    $region47: #{forward.1} parent=1 // pred_check_branch
      %82 = sbr.rel (0) target = $region49
    $region48: #{forward.1} parent=1 // pred_region
      %83 = dma.done [#allocation7], 4096
    $region49: #{forward.1} parent=1 // pred_fallthru
      _
    // Predicated region
    $region50: #{forward.1} parent=1 // pred_check
      _
    $region51: #{forward.1} parent=1 // pred_check_branch
      %85 = sbr.rel (0) target = $region53
    $region52: #{forward.1} parent=1 // pred_region
      %86 = dma.done [#allocation10], 4096
    $region53: #{forward.1} parent=1 // pred_fallthru
      _
    %v88 = vld [vmem:[#allocation4] sm:$0xff]
    %v89 = vld [vmem:[#allocation4 + $0x8] sm:$0xff]
    %v90 = vld [vmem:[#allocation4 + $0x10] sm:$0xff]
    %v91 = vld [vmem:[#allocation4 + $0x18] sm:$0xff]
    %v92 = vld [vmem:[#allocation4 + $0x20] sm:$0xff]
    %v93 = vld [vmem:[#allocation4 + $0x28] sm:$0xff]
    %v94 = vld [vmem:[#allocation4 + $0x30] sm:$0xff]
    %v95 = vld [vmem:[#allocation4 + $0x38] sm:$0xff]
    %v96 = vld [vmem:[#allocation4 + $0x40] sm:$0xff]
    %v97 = vld [vmem:[#allocation4 + $0x48] sm:$0xff]
    %v98 = vld [vmem:[#allocation4 + $0x50] sm:$0xff]
    %v99 = vld [vmem:[#allocation4 + $0x58] sm:$0xff]
    %v100 = vld [vmem:[#allocation4 + $0x60] sm:$0xff]
    %v101 = vld [vmem:[#allocation4 + $0x68] sm:$0xff]
    %v102 = vld [vmem:[#allocation4 + $0x70] sm:$0xff]
    %v103 = vld [vmem:[#allocation4 + $0x78] sm:$0xff]
    %v104 = vld [vmem:[#allocation4 + $0x80] sm:$0xff]
    %v105 = vld [vmem:[#allocation4 + $0x88] sm:$0xff]
    %v106 = vld [vmem:[#allocation4 + $0x90] sm:$0xff]
    %v107 = vld [vmem:[#allocation4 + $0x98] sm:$0xff]
    %v108 = vld [vmem:[#allocation4 + $0xa0] sm:$0xff]
    %v109 = vld [vmem:[#allocation4 + $0xa8] sm:$0xff]
    %v110 = vld [vmem:[#allocation4 + $0xb0] sm:$0xff]
    %v111 = vld [vmem:[#allocation4 + $0xb8] sm:$0xff]
    %v112 = vld [vmem:[#allocation4 + $0xc0] sm:$0xff]
    %v113 = vld [vmem:[#allocation4 + $0xc8] sm:$0xff]
    %v114 = vld [vmem:[#allocation4 + $0xd0] sm:$0xff]
    %v115 = vld [vmem:[#allocation4 + $0xd8] sm:$0xff]
    %v116 = vld [vmem:[#allocation4 + $0xe0] sm:$0xff]
    %v117 = vld [vmem:[#allocation4 + $0xe8] sm:$0xff]
    %v118 = vld [vmem:[#allocation4 + $0xf0] sm:$0xff]
    %v119 = vld [vmem:[#allocation4 + $0xf8] sm:$0xff]
    %v120 = vld [vmem:[%s3] sm:$0xf]
    %v121 = vld [vmem:[%s0] sm:$0xff]
    %v122 = vld [vmem:[%s0 + $0x8] sm:$0xff]
    %v123 = vld [vmem:[%s0 + $0x10] sm:$0xff]
    %v124 = vld [vmem:[%s0 + $0x18] sm:$0xff]
    %v125 = vld [vmem:[%s0 + $0x20] sm:$0xff]
    %v126 = vld [vmem:[%s0 + $0x28] sm:$0xff]
    %v127 = vld [vmem:[%s0 + $0x30] sm:$0xff]
    %v128 = vld [vmem:[%s0 + $0x38] sm:$0xff]
    %v129 = vpack.c.bf16 %v122, %v121
    %v130 = vpack.c.bf16 %v124, %v123
    %v131 = vpack.c.bf16 %v126, %v125
    %v132 = vpack.c.bf16 %v128, %v127
    %v134 = vlaneseq
    %v135 = vshrl.u32 %v134, 7
    %v136 = vsub.s32 0, %v135
    %v137 = vrot.slane %v120, %v136
    %v138 = vlaneseq
    %v139 = vshrl.u32 %v138, 7
    %v140 = vsub.s32 1, %v139
    %v141 = vrot.slane %v120, %v140
    %v142 = vlaneseq
    %v143 = vshrl.u32 %v142, 7
    %v144 = vsub.s32 2, %v143
    %v145 = vrot.slane %v120, %v144
    %v146 = vlaneseq
    %v147 = vshrl.u32 %v146, 7
    %v148 = vsub.s32 3, %v147
    %v149 = vrot.slane %v120, %v148
    %v186 = vunpack.c.l.b16 %v88
    %v187 = vunpack.c.h.b16 %v88
    %v188 = vunpack.c.l.b16 %v89
    %v189 = vunpack.c.h.b16 %v89
    %v190 = vunpack.c.l.b16 %v90
    %v191 = vunpack.c.h.b16 %v90
    %v192 = vunpack.c.l.b16 %v91
    %v193 = vunpack.c.h.b16 %v91
    %v194 = vunpack.c.l.b16 %v92
    %v195 = vunpack.c.h.b16 %v92
    %v196 = vunpack.c.l.b16 %v93
    %v197 = vunpack.c.h.b16 %v93
    %v198 = vunpack.c.l.b16 %v94
    %v199 = vunpack.c.h.b16 %v94
    %v200 = vunpack.c.l.b16 %v95
    %v201 = vunpack.c.h.b16 %v95
    %v202 = vunpack.c.l.b16 %v96
    %v203 = vunpack.c.h.b16 %v96
    %v204 = vunpack.c.l.b16 %v97
    %v205 = vunpack.c.h.b16 %v97
    %v206 = vunpack.c.l.b16 %v98
    %v207 = vunpack.c.h.b16 %v98
    %v208 = vunpack.c.l.b16 %v99
    %v209 = vunpack.c.h.b16 %v99
    %v210 = vunpack.c.l.b16 %v100
    %v211 = vunpack.c.h.b16 %v100
    %v212 = vunpack.c.l.b16 %v101
    %v213 = vunpack.c.h.b16 %v101
    %v214 = vunpack.c.l.b16 %v102
    %v215 = vunpack.c.h.b16 %v102
    %v216 = vunpack.c.l.b16 %v103
    %v217 = vunpack.c.h.b16 %v103
    %v218 = vunpack.c.l.b16 %v104
    %v219 = vunpack.c.h.b16 %v104
    %v220 = vunpack.c.l.b16 %v105
    %v221 = vunpack.c.h.b16 %v105
    %v222 = vunpack.c.l.b16 %v106
    %v223 = vunpack.c.h.b16 %v106
    %v224 = vunpack.c.l.b16 %v107
    %v225 = vunpack.c.h.b16 %v107
    %v226 = vunpack.c.l.b16 %v108
    %v227 = vunpack.c.h.b16 %v108
    %v228 = vunpack.c.l.b16 %v109
    %v229 = vunpack.c.h.b16 %v109
    %v230 = vunpack.c.l.b16 %v110
    %v231 = vunpack.c.h.b16 %v110
    %v232 = vunpack.c.l.b16 %v111
    %v233 = vunpack.c.h.b16 %v111
    %v234 = vunpack.c.l.b16 %v112
    %v235 = vunpack.c.h.b16 %v112
    %v236 = vunpack.c.l.b16 %v113
    %v237 = vunpack.c.h.b16 %v113
    %v238 = vunpack.c.l.b16 %v114
    %v239 = vunpack.c.h.b16 %v114
    %v240 = vunpack.c.l.b16 %v115
    %v241 = vunpack.c.h.b16 %v115
    %v242 = vunpack.c.l.b16 %v116
    %v243 = vunpack.c.h.b16 %v116
    %v244 = vunpack.c.l.b16 %v117
    %v245 = vunpack.c.h.b16 %v117
    %v246 = vunpack.c.l.b16 %v118
    %v247 = vunpack.c.h.b16 %v118
    %v248 = vunpack.c.l.b16 %v119
    %v249 = vunpack.c.h.b16 %v119
    %v250 = vpack.c.b16 %v190, %v186
    %v251 = vpack.c.b16 %v191, %v187
    %v252 = vpack.c.b16 %v192, %v188
    %v253 = vpack.c.b16 %v193, %v189
    %v254 = vpack.c.b16 %v198, %v194
    %v255 = vpack.c.b16 %v199, %v195
    %v256 = vpack.c.b16 %v200, %v196
    %v257 = vpack.c.b16 %v201, %v197
    %v258 = vpack.c.b16 %v206, %v202
    %v259 = vpack.c.b16 %v207, %v203
    %v260 = vpack.c.b16 %v208, %v204
    %v261 = vpack.c.b16 %v209, %v205
    %v262 = vpack.c.b16 %v214, %v210
    %v263 = vpack.c.b16 %v215, %v211
    %v264 = vpack.c.b16 %v216, %v212
    %v265 = vpack.c.b16 %v217, %v213
    %v266 = vpack.c.b16 %v222, %v218
    %v267 = vpack.c.b16 %v223, %v219
    %v268 = vpack.c.b16 %v224, %v220
    %v269 = vpack.c.b16 %v225, %v221
    %v270 = vpack.c.b16 %v230, %v226
    %v271 = vpack.c.b16 %v231, %v227
    %v272 = vpack.c.b16 %v232, %v228
    %v273 = vpack.c.b16 %v233, %v229
    %v274 = vpack.c.b16 %v238, %v234
    %v275 = vpack.c.b16 %v239, %v235
    %v276 = vpack.c.b16 %v240, %v236
    %v277 = vpack.c.b16 %v241, %v237
    %v278 = vpack.c.b16 %v246, %v242
    %v279 = vpack.c.b16 %v247, %v243
    %v280 = vpack.c.b16 %v248, %v244
    %v281 = vpack.c.b16 %v249, %v245
    %314 = vmatprep.subr.bf16.mxu0 %v251
    %315 = vmatpush1.bf16.msra.mxu0 %v250
    %316 = vmatprep.subr.bf16.mxu0 %v255
    %317 = vmatpush1.bf16.msra.mxu0 %v254
    %318 = vmatprep.subr.bf16.mxu0 %v259
    %319 = vmatpush1.bf16.msra.mxu0 %v258
    %320 = vmatprep.subr.bf16.mxu0 %v263
    %321 = vmatpush1.bf16.msra.mxu0 %v262
    %322 = vmatprep.subr.bf16.mxu0 %v267
    %323 = vmatpush1.bf16.msra.mxu0 %v266
    %324 = vmatprep.subr.bf16.mxu0 %v271
    %325 = vmatpush1.bf16.msra.mxu0 %v270
    %326 = vmatprep.subr.bf16.mxu0 %v275
    %327 = vmatpush1.bf16.msra.mxu0 %v274
    %328 = vmatprep.subr.bf16.mxu0 %v279
    %329 = vmatpush1.bf16.msra.mxu0 %v278
    %330 = vmatprep.subr.bf16.mxu0 0
    %331 = vmatpush1.bf16.msra.mxu0 0
    %332 = vmatprep.subr.bf16.mxu0 0
    %333 = vmatpush1.bf16.msra.mxu0 0
    %334 = vmatprep.subr.bf16.mxu0 0
    %335 = vmatpush1.bf16.msra.mxu0 0
    %336 = vmatprep.subr.bf16.mxu0 0
    %337 = vmatpush1.bf16.msra.mxu0 0
    %338 = vmatprep.subr.bf16.mxu0 0
    %339 = vmatpush1.bf16.msra.mxu0 0
    %340 = vmatprep.subr.bf16.mxu0 0
    %341 = vmatpush1.bf16.msra.mxu0 0
    %342 = vmatprep.subr.bf16.mxu0 0
    %343 = vmatpush1.bf16.msra.mxu0 0
    %344 = vmatprep.subr.bf16.mxu0 0
    %345 = vmatpush1.bf16.msra.mxu0 0
    %346 = vmatprep.mubr.bf16.mxu0 0
    %347 = vmatmul.mubr.bf16.gmra.mrb[0].mxu0 %v129
    %v348 = vpop.f32.mrb[0].mxu0
    %v349 = vadd.f32 %v137, %v348
    %v350 = vpop.f32.mrb[0].mxu0
    %v351 = vadd.f32 %v141, %v350
    %v352 = vpop.f32.mrb[0].mxu0
    %v353 = vadd.f32 %v137, %v352
    %v354 = vpop.f32.mrb[0].mxu0
    %v355 = vadd.f32 %v141, %v354
    %356 = vmatprep.mubr.bf16.mxu0 0
    %357 = vmatmul.mubr.bf16.gmra.mrb[0].mxu0 %v130
    %v358 = vpop.f32.mrb[0].mxu0
    %v359 = vadd.f32 %v137, %v358
    %v360 = vpop.f32.mrb[0].mxu0
    %v361 = vadd.f32 %v141, %v360
    %v362 = vpop.f32.mrb[0].mxu0
    %v363 = vadd.f32 %v137, %v362
    %v364 = vpop.f32.mrb[0].mxu0
    %v365 = vadd.f32 %v141, %v364
    %366 = vmatprep.mubr.bf16.mxu0 0
    %367 = vmatmul.mubr.bf16.gmra.mrb[0].mxu0 %v131
    %v368 = vpop.f32.mrb[0].mxu0
    %v369 = vadd.f32 %v137, %v368
    %v370 = vpop.f32.mrb[0].mxu0
    %v371 = vadd.f32 %v141, %v370
    %v372 = vpop.f32.mrb[0].mxu0
    %v373 = vadd.f32 %v137, %v372
    %v374 = vpop.f32.mrb[0].mxu0
    %v375 = vadd.f32 %v141, %v374
    %376 = vmatprep.mubr.bf16.mxu0 0
    %377 = vmatmul.mubr.bf16.gmra.mrb[0].mxu0 %v132
    %v378 = vpop.f32.mrb[0].mxu0
    %v379 = vadd.f32 %v137, %v378
    %v380 = vpop.f32.mrb[0].mxu0
    %v381 = vadd.f32 %v141, %v380
    %v382 = vpop.f32.mrb[0].mxu0
    %v383 = vadd.f32 %v137, %v382
    %v384 = vpop.f32.mrb[0].mxu0
    %v385 = vadd.f32 %v141, %v384
    %386 = vdwg.mxu0
    %387 = vmatprep.subr.bf16.mxu0 %v253
    %388 = vmatpush1.bf16.msra.mxu0 %v252
    %389 = vmatprep.subr.bf16.mxu0 %v257
    %390 = vmatpush1.bf16.msra.mxu0 %v256
    %391 = vmatprep.subr.bf16.mxu0 %v261
    %392 = vmatpush1.bf16.msra.mxu0 %v260
    %393 = vmatprep.subr.bf16.mxu0 %v265
    %394 = vmatpush1.bf16.msra.mxu0 %v264
    %395 = vmatprep.subr.bf16.mxu0 %v269
    %396 = vmatpush1.bf16.msra.mxu0 %v268
    %397 = vmatprep.subr.bf16.mxu0 %v273
    %398 = vmatpush1.bf16.msra.mxu0 %v272
    %399 = vmatprep.subr.bf16.mxu0 %v277
    %400 = vmatpush1.bf16.msra.mxu0 %v276
    %401 = vmatprep.subr.bf16.mxu0 %v281
    %402 = vmatpush1.bf16.msra.mxu0 %v280
    %403 = vmatprep.subr.bf16.mxu0 0
    %404 = vmatpush1.bf16.msra.mxu0 0
    %405 = vmatprep.subr.bf16.mxu0 0
    %406 = vmatpush1.bf16.msra.mxu0 0
    %407 = vmatprep.subr.bf16.mxu0 0
    %408 = vmatpush1.bf16.msra.mxu0 0
    %409 = vmatprep.subr.bf16.mxu0 0
    %410 = vmatpush1.bf16.msra.mxu0 0
    %411 = vmatprep.subr.bf16.mxu0 0
    %412 = vmatpush1.bf16.msra.mxu0 0
    %413 = vmatprep.subr.bf16.mxu0 0
    %414 = vmatpush1.bf16.msra.mxu0 0
    %415 = vmatprep.subr.bf16.mxu0 0
    %416 = vmatpush1.bf16.msra.mxu0 0
    %417 = vmatprep.subr.bf16.mxu0 0
    %418 = vmatpush1.bf16.msra.mxu0 0
    %419 = vmatprep.mubr.bf16.mxu0 0
    %420 = vmatmul.mubr.bf16.gmra.mrb[0].mxu0 %v129
    %v421 = vpop.f32.mrb[0].mxu0
    %v422 = vadd.f32 %v145, %v421
    %v423 = vpop.f32.mrb[0].mxu0
    %v424 = vadd.f32 %v149, %v423
    %v425 = vpop.f32.mrb[0].mxu0
    %v426 = vadd.f32 %v145, %v425
    %v427 = vpop.f32.mrb[0].mxu0
    %v428 = vadd.f32 %v149, %v427
    %429 = vmatprep.mubr.bf16.mxu0 0
    %430 = vmatmul.mubr.bf16.gmra.mrb[0].mxu0 %v130
    %v431 = vpop.f32.mrb[0].mxu0
    %v432 = vadd.f32 %v145, %v431
    %v433 = vpop.f32.mrb[0].mxu0
    %v434 = vadd.f32 %v149, %v433
    %v435 = vpop.f32.mrb[0].mxu0
    %v436 = vadd.f32 %v145, %v435
    %v437 = vpop.f32.mrb[0].mxu0
    %v438 = vadd.f32 %v149, %v437
    %439 = vmatprep.mubr.bf16.mxu0 0
    %440 = vmatmul.mubr.bf16.gmra.mrb[0].mxu0 %v131
    %v441 = vpop.f32.mrb[0].mxu0
    %v442 = vadd.f32 %v145, %v441
    %v443 = vpop.f32.mrb[0].mxu0
    %v444 = vadd.f32 %v149, %v443
    %v445 = vpop.f32.mrb[0].mxu0
    %v446 = vadd.f32 %v145, %v445
    %v447 = vpop.f32.mrb[0].mxu0
    %v448 = vadd.f32 %v149, %v447
    %449 = vmatprep.mubr.bf16.mxu0 0
    %450 = vmatmul.mubr.bf16.gmra.mrb[0].mxu0 %v132
    %v451 = vpop.f32.mrb[0].mxu0
    %v452 = vadd.f32 %v145, %v451
    %v453 = vpop.f32.mrb[0].mxu0
    %v454 = vadd.f32 %v149, %v453
    %v455 = vpop.f32.mrb[0].mxu0
    %v456 = vadd.f32 %v145, %v455
    %v457 = vpop.f32.mrb[0].mxu0
    %v458 = vadd.f32 %v149, %v457
    %459 = vdwg.mxu0
    %460 = vst [vmem:[#allocation2] sm:$0xff] %v349
    %461 = vst [vmem:[#allocation2 + $0x8] sm:$0xff] %v351
    %462 = vst [vmem:[#allocation2 + $0x10] sm:$0xff] %v422
    %463 = vst [vmem:[#allocation2 + $0x18] sm:$0xff] %v424
    %464 = vst [vmem:[#allocation2 + $0x20] sm:$0xff] %v353
    %465 = vst [vmem:[#allocation2 + $0x28] sm:$0xff] %v355
    %466 = vst [vmem:[#allocation2 + $0x30] sm:$0xff] %v426
    %467 = vst [vmem:[#allocation2 + $0x38] sm:$0xff] %v428
    %468 = vst [vmem:[#allocation2 + $0x40] sm:$0xff] %v359
    %469 = vst [vmem:[#allocation2 + $0x48] sm:$0xff] %v361
    %470 = vst [vmem:[#allocation2 + $0x50] sm:$0xff] %v432
    %471 = vst [vmem:[#allocation2 + $0x58] sm:$0xff] %v434
    %472 = vst [vmem:[#allocation2 + $0x60] sm:$0xff] %v363
    %473 = vst [vmem:[#allocation2 + $0x68] sm:$0xff] %v365
    %474 = vst [vmem:[#allocation2 + $0x70] sm:$0xff] %v436
    %475 = vst [vmem:[#allocation2 + $0x78] sm:$0xff] %v438
    %476 = vst [vmem:[#allocation2 + $0x80] sm:$0xff] %v369
    %477 = vst [vmem:[#allocation2 + $0x88] sm:$0xff] %v371
    %478 = vst [vmem:[#allocation2 + $0x90] sm:$0xff] %v442
    %479 = vst [vmem:[#allocation2 + $0x98] sm:$0xff] %v444
    %480 = vst [vmem:[#allocation2 + $0xa0] sm:$0xff] %v373
    %481 = vst [vmem:[#allocation2 + $0xa8] sm:$0xff] %v375
    %482 = vst [vmem:[#allocation2 + $0xb0] sm:$0xff] %v446
    %483 = vst [vmem:[#allocation2 + $0xb8] sm:$0xff] %v448
    %484 = vst [vmem:[#allocation2 + $0xc0] sm:$0xff] %v379
    %485 = vst [vmem:[#allocation2 + $0xc8] sm:$0xff] %v381
    %486 = vst [vmem:[#allocation2 + $0xd0] sm:$0xff] %v452
    %487 = vst [vmem:[#allocation2 + $0xd8] sm:$0xff] %v454
    %488 = vst [vmem:[#allocation2 + $0xe0] sm:$0xff] %v383
    %489 = vst [vmem:[#allocation2 + $0xe8] sm:$0xff] %v385
    %490 = vst [vmem:[#allocation2 + $0xf0] sm:$0xff] %v456
    %491 = vst [vmem:[#allocation2 + $0xf8] sm:$0xff] %v458
    %v492 = vld [vmem:[#allocation6] sm:$0xff]
    %v493 = vld [vmem:[#allocation6 + $0x8] sm:$0xff]
    %v494 = vld [vmem:[#allocation6 + $0x10] sm:$0xff]
    %v495 = vld [vmem:[#allocation6 + $0x18] sm:$0xff]
    %v496 = vld [vmem:[#allocation6 + $0x20] sm:$0xff]
    %v497 = vld [vmem:[#allocation6 + $0x28] sm:$0xff]
    %v498 = vld [vmem:[#allocation6 + $0x30] sm:$0xff]
    %v499 = vld [vmem:[#allocation6 + $0x38] sm:$0xff]
    %v500 = vld [vmem:[#allocation6 + $0x40] sm:$0xff]
    %v501 = vld [vmem:[#allocation6 + $0x48] sm:$0xff]
    %v502 = vld [vmem:[#allocation6 + $0x50] sm:$0xff]
    %v503 = vld [vmem:[#allocation6 + $0x58] sm:$0xff]
    %v504 = vld [vmem:[#allocation6 + $0x60] sm:$0xff]
    %v505 = vld [vmem:[#allocation6 + $0x68] sm:$0xff]
    %v506 = vld [vmem:[#allocation6 + $0x70] sm:$0xff]
    %v507 = vld [vmem:[#allocation6 + $0x78] sm:$0xff]
    %v508 = vld [vmem:[#allocation6 + $0x80] sm:$0xff]
    %v509 = vld [vmem:[#allocation6 + $0x88] sm:$0xff]
    %v510 = vld [vmem:[#allocation6 + $0x90] sm:$0xff]
    %v511 = vld [vmem:[#allocation6 + $0x98] sm:$0xff]
    %v512 = vld [vmem:[#allocation6 + $0xa0] sm:$0xff]
    %v513 = vld [vmem:[#allocation6 + $0xa8] sm:$0xff]
    %v514 = vld [vmem:[#allocation6 + $0xb0] sm:$0xff]
    %v515 = vld [vmem:[#allocation6 + $0xb8] sm:$0xff]
    %v516 = vld [vmem:[#allocation6 + $0xc0] sm:$0xff]
    %v517 = vld [vmem:[#allocation6 + $0xc8] sm:$0xff]
    %v518 = vld [vmem:[#allocation6 + $0xd0] sm:$0xff]
    %v519 = vld [vmem:[#allocation6 + $0xd8] sm:$0xff]
    %v520 = vld [vmem:[#allocation6 + $0xe0] sm:$0xff]
    %v521 = vld [vmem:[#allocation6 + $0xe8] sm:$0xff]
    %v522 = vld [vmem:[#allocation6 + $0xf0] sm:$0xff]
    %v523 = vld [vmem:[#allocation6 + $0xf8] sm:$0xff]
    %v524 = vld [vmem:[#allocation8] sm:$0xff]
    %v525 = vld [vmem:[#allocation8 + $0x8] sm:$0xff]
    %v526 = vld [vmem:[#allocation8 + $0x10] sm:$0xff]
    %v527 = vld [vmem:[#allocation8 + $0x18] sm:$0xff]
    %v528 = vld [vmem:[#allocation8 + $0x20] sm:$0xff]
    %v529 = vld [vmem:[#allocation8 + $0x28] sm:$0xff]
    %v530 = vld [vmem:[#allocation8 + $0x30] sm:$0xff]
    %v531 = vld [vmem:[#allocation8 + $0x38] sm:$0xff]
    %v532 = vld [vmem:[#allocation8 + $0x40] sm:$0xff]
    %v533 = vld [vmem:[#allocation8 + $0x48] sm:$0xff]
    %v534 = vld [vmem:[#allocation8 + $0x50] sm:$0xff]
    %v535 = vld [vmem:[#allocation8 + $0x58] sm:$0xff]
    %v536 = vld [vmem:[#allocation8 + $0x60] sm:$0xff]
    %v537 = vld [vmem:[#allocation8 + $0x68] sm:$0xff]
    %v538 = vld [vmem:[#allocation8 + $0x70] sm:$0xff]
    %v539 = vld [vmem:[#allocation8 + $0x78] sm:$0xff]
    %v540 = vld [vmem:[#allocation8 + $0x80] sm:$0xff]
    %v541 = vld [vmem:[#allocation8 + $0x88] sm:$0xff]
    %v542 = vld [vmem:[#allocation8 + $0x90] sm:$0xff]
    %v543 = vld [vmem:[#allocation8 + $0x98] sm:$0xff]
    %v544 = vld [vmem:[#allocation8 + $0xa0] sm:$0xff]
    %v545 = vld [vmem:[#allocation8 + $0xa8] sm:$0xff]
    %v546 = vld [vmem:[#allocation8 + $0xb0] sm:$0xff]
    %v547 = vld [vmem:[#allocation8 + $0xb8] sm:$0xff]
    %v548 = vld [vmem:[#allocation8 + $0xc0] sm:$0xff]
    %v549 = vld [vmem:[#allocation8 + $0xc8] sm:$0xff]
    %v550 = vld [vmem:[#allocation8 + $0xd0] sm:$0xff]
    %v551 = vld [vmem:[#allocation8 + $0xd8] sm:$0xff]
    %v552 = vld [vmem:[#allocation8 + $0xe0] sm:$0xff]
    %v553 = vld [vmem:[#allocation8 + $0xe8] sm:$0xff]
    %v554 = vld [vmem:[#allocation8 + $0xf0] sm:$0xff]
    %v555 = vld [vmem:[#allocation8 + $0xf8] sm:$0xff]
    %v556 = vld [vmem:[%s6] sm:$0xf]
    %v557 = vld [vmem:[#allocation2] sm:$0xff]
    %v558 = vld [vmem:[#allocation2 + $0x8] sm:$0xff]
    %v559 = vld [vmem:[#allocation2 + $0x10] sm:$0xff]
    %v560 = vld [vmem:[#allocation2 + $0x18] sm:$0xff]
    %v593 = vunpack.c.l.b16 %v492
    %v594 = vunpack.c.h.b16 %v492
    %v595 = vunpack.c.l.b16 %v493
    %v596 = vunpack.c.h.b16 %v493
    %v597 = vunpack.c.l.b16 %v494
    %v598 = vunpack.c.h.b16 %v494
    %v599 = vunpack.c.l.b16 %v495
    %v600 = vunpack.c.h.b16 %v495
    %v601 = vunpack.c.l.b16 %v496
    %v602 = vunpack.c.h.b16 %v496
    %v603 = vunpack.c.l.b16 %v497
    %v604 = vunpack.c.h.b16 %v497
    %v605 = vunpack.c.l.b16 %v498
    %v606 = vunpack.c.h.b16 %v498
    %v607 = vunpack.c.l.b16 %v499
    %v608 = vunpack.c.h.b16 %v499
    %v609 = vunpack.c.l.b16 %v500
    %v610 = vunpack.c.h.b16 %v500
    %v611 = vunpack.c.l.b16 %v501
    %v612 = vunpack.c.h.b16 %v501
    %v613 = vunpack.c.l.b16 %v502
    %v614 = vunpack.c.h.b16 %v502
    %v615 = vunpack.c.l.b16 %v503
    %v616 = vunpack.c.h.b16 %v503
    %v617 = vunpack.c.l.b16 %v504
    %v618 = vunpack.c.h.b16 %v504
    %v619 = vunpack.c.l.b16 %v505
    %v620 = vunpack.c.h.b16 %v505
    %v621 = vunpack.c.l.b16 %v506
    %v622 = vunpack.c.h.b16 %v506
    %v623 = vunpack.c.l.b16 %v507
    %v624 = vunpack.c.h.b16 %v507
    %v625 = vunpack.c.l.b16 %v508
    %v626 = vunpack.c.h.b16 %v508
    %v627 = vunpack.c.l.b16 %v509
    %v628 = vunpack.c.h.b16 %v509
    %v629 = vunpack.c.l.b16 %v510
    %v630 = vunpack.c.h.b16 %v510
    %v631 = vunpack.c.l.b16 %v511
    %v632 = vunpack.c.h.b16 %v511
    %v633 = vunpack.c.l.b16 %v512
    %v634 = vunpack.c.h.b16 %v512
    %v635 = vunpack.c.l.b16 %v513
    %v636 = vunpack.c.h.b16 %v513
    %v637 = vunpack.c.l.b16 %v514
    %v638 = vunpack.c.h.b16 %v514
    %v639 = vunpack.c.l.b16 %v515
    %v640 = vunpack.c.h.b16 %v515
    %v641 = vunpack.c.l.b16 %v516
    %v642 = vunpack.c.h.b16 %v516
    %v643 = vunpack.c.l.b16 %v517
    %v644 = vunpack.c.h.b16 %v517
    %v645 = vunpack.c.l.b16 %v518
    %v646 = vunpack.c.h.b16 %v518
    %v647 = vunpack.c.l.b16 %v519
    %v648 = vunpack.c.h.b16 %v519
    %v649 = vunpack.c.l.b16 %v520
    %v650 = vunpack.c.h.b16 %v520
    %v651 = vunpack.c.l.b16 %v521
    %v652 = vunpack.c.h.b16 %v521
    %v653 = vunpack.c.l.b16 %v522
    %v654 = vunpack.c.h.b16 %v522
    %v655 = vunpack.c.l.b16 %v523
    %v656 = vunpack.c.h.b16 %v523
    %v657 = vpack.c.b16 %v597, %v593
    %v658 = vpack.c.b16 %v598, %v594
    %v659 = vpack.c.b16 %v599, %v595
    %v660 = vpack.c.b16 %v600, %v596
    %v661 = vpack.c.b16 %v605, %v601
    %v662 = vpack.c.b16 %v606, %v602
    %v663 = vpack.c.b16 %v607, %v603
    %v664 = vpack.c.b16 %v608, %v604
    %v665 = vpack.c.b16 %v613, %v609
    %v666 = vpack.c.b16 %v614, %v610
    %v667 = vpack.c.b16 %v615, %v611
    %v668 = vpack.c.b16 %v616, %v612
    %v669 = vpack.c.b16 %v621, %v617
    %v670 = vpack.c.b16 %v622, %v618
    %v671 = vpack.c.b16 %v623, %v619
    %v672 = vpack.c.b16 %v624, %v620
    %v673 = vpack.c.b16 %v629, %v625
    %v674 = vpack.c.b16 %v630, %v626
    %v675 = vpack.c.b16 %v631, %v627
    %v676 = vpack.c.b16 %v632, %v628
    %v677 = vpack.c.b16 %v637, %v633
    %v678 = vpack.c.b16 %v638, %v634
    %v679 = vpack.c.b16 %v639, %v635
    %v680 = vpack.c.b16 %v640, %v636
    %v681 = vpack.c.b16 %v645, %v641
    %v682 = vpack.c.b16 %v646, %v642
    %v683 = vpack.c.b16 %v647, %v643
    %v684 = vpack.c.b16 %v648, %v644
    %v685 = vpack.c.b16 %v653, %v649
    %v686 = vpack.c.b16 %v654, %v650
    %v687 = vpack.c.b16 %v655, %v651
    %v688 = vpack.c.b16 %v656, %v652
    %721 = vmatprep.subr.bf16.mxu0 %v658
    %722 = vmatpush1.bf16.msra.mxu0 %v657
    %723 = vmatprep.subr.bf16.mxu0 %v662
    %724 = vmatpush1.bf16.msra.mxu0 %v661
    %725 = vmatprep.subr.bf16.mxu0 %v666
    %726 = vmatpush1.bf16.msra.mxu0 %v665
    %727 = vmatprep.subr.bf16.mxu0 %v670
    %728 = vmatpush1.bf16.msra.mxu0 %v669
    %729 = vmatprep.subr.bf16.mxu0 %v674
    %730 = vmatpush1.bf16.msra.mxu0 %v673
    %731 = vmatprep.subr.bf16.mxu0 %v678
    %732 = vmatpush1.bf16.msra.mxu0 %v677
    %733 = vmatprep.subr.bf16.mxu0 %v682
    %734 = vmatpush1.bf16.msra.mxu0 %v681
    %735 = vmatprep.subr.bf16.mxu0 %v686
    %736 = vmatpush1.bf16.msra.mxu0 %v685
    %737 = vmatprep.subr.bf16.mxu0 0
    %738 = vmatpush1.bf16.msra.mxu0 0
    %739 = vmatprep.subr.bf16.mxu0 0
    %740 = vmatpush1.bf16.msra.mxu0 0
    %741 = vmatprep.subr.bf16.mxu0 0
    %742 = vmatpush1.bf16.msra.mxu0 0
    %743 = vmatprep.subr.bf16.mxu0 0
    %744 = vmatpush1.bf16.msra.mxu0 0
    %745 = vmatprep.subr.bf16.mxu0 0
    %746 = vmatpush1.bf16.msra.mxu0 0
    %747 = vmatprep.subr.bf16.mxu0 0
    %748 = vmatpush1.bf16.msra.mxu0 0
    %749 = vmatprep.subr.bf16.mxu0 0
    %750 = vmatpush1.bf16.msra.mxu0 0
    %751 = vmatprep.subr.bf16.mxu0 0
    %752 = vmatpush1.bf16.msra.mxu0 0
    %753 = vmatprep.mubr.bf16.mxu0 0
    %754 = vmatmul.mubr.bf16.gmra.mrb[0].mxu0 0
    %v755 = vpop.f32.mrb[0].mxu0
    %v756 = vadd.f32 0.0, %v755
    %v757 = vpop.f32.mrb[0].mxu0
    %v758 = vadd.f32 0.0, %v757
    %v759 = vpop.f32.mrb[0].mxu0
    %v760 = vpop.f32.mrb[0].mxu0
    %761 = vdwg.mxu0
    %762 = vmatprep.subr.bf16.mxu0 %v660
    %763 = vmatpush1.bf16.msra.mxu0 %v659
    %764 = vmatprep.subr.bf16.mxu0 %v664
    %765 = vmatpush1.bf16.msra.mxu0 %v663
    %766 = vmatprep.subr.bf16.mxu0 %v668
    %767 = vmatpush1.bf16.msra.mxu0 %v667
    %768 = vmatprep.subr.bf16.mxu0 %v672
    %769 = vmatpush1.bf16.msra.mxu0 %v671
    %770 = vmatprep.subr.bf16.mxu0 %v676
    %771 = vmatpush1.bf16.msra.mxu0 %v675
    %772 = vmatprep.subr.bf16.mxu0 %v680
    %773 = vmatpush1.bf16.msra.mxu0 %v679
    %774 = vmatprep.subr.bf16.mxu0 %v684
    %775 = vmatpush1.bf16.msra.mxu0 %v683
    %776 = vmatprep.subr.bf16.mxu0 %v688
    %777 = vmatpush1.bf16.msra.mxu0 %v687
    %778 = vmatprep.subr.bf16.mxu0 0
    %779 = vmatpush1.bf16.msra.mxu0 0
    %780 = vmatprep.subr.bf16.mxu0 0
    %781 = vmatpush1.bf16.msra.mxu0 0
    %782 = vmatprep.subr.bf16.mxu0 0
    %783 = vmatpush1.bf16.msra.mxu0 0
    %784 = vmatprep.subr.bf16.mxu0 0
    %785 = vmatpush1.bf16.msra.mxu0 0
    %786 = vmatprep.subr.bf16.mxu0 0
    %787 = vmatpush1.bf16.msra.mxu0 0
    %788 = vmatprep.subr.bf16.mxu0 0
    %789 = vmatpush1.bf16.msra.mxu0 0
    %790 = vmatprep.subr.bf16.mxu0 0
    %791 = vmatpush1.bf16.msra.mxu0 0
    %792 = vmatprep.subr.bf16.mxu0 0
    %793 = vmatpush1.bf16.msra.mxu0 0
    %794 = vmatprep.mubr.bf16.mxu0 0
    %795 = vmatmul.mubr.bf16.gmra.mrb[0].mxu0 0
    %v796 = vpop.f32.mrb[0].mxu0
    %v797 = vadd.f32 0.0, %v796
    %v798 = vpop.f32.mrb[0].mxu0
    %v799 = vadd.f32 0.0, %v798
    %v800 = vpop.f32.mrb[0].mxu0
    %v801 = vpop.f32.mrb[0].mxu0
    %802 = vdwg.mxu0
    %v803 = vadd.f32 %v557, %v756
    %v804 = vadd.f32 %v558, %v758
    %v805 = vadd.f32 %v559, %v797
    %v806 = vadd.f32 %v560, %v799
    %v807 = vmul.f32 %v803, 0.5
    %v808 = vmul.f32 %v804, 0.5
    %v809 = vmul.f32 %v805, 0.5
    %v810 = vtanh.pop %v807
    %v811 = vtanh.pop %v808
    %v812 = vtanh.pop %v809
    %v813 = vmul.f32 %v810, 0.5
    %v814 = vmul.f32 %v811, 0.5
    %v815 = vmul.f32 %v812, 0.5
    %v816 = vadd.f32 %v813, 0.5
    %v817 = vadd.f32 %v814, 0.5
    %v818 = vadd.f32 %v815, 0.5
    %v819 = vtanh.pop %v806
    %v820 = vmul.f32 %v817, 0.0
    %v821 = vmul.f32 %v816, %v819
    %v822 = vadd.f32 %v820, %v821
    %v823 = vtanh.pop %v822
    %v824 = vmul.f32 %v818, %v823
    %v825 = vpack.c.bf16 %v824, %v824
    %v827 = vlaneseq
    %v828 = vshrl.u32 %v827, 7
    %v829 = vsub.s32 0, %v828
    %v830 = vrot.slane %v556, %v829
    %v831 = vlaneseq
    %v832 = vshrl.u32 %v831, 7
    %v833 = vsub.s32 1, %v832
    %v834 = vrot.slane %v556, %v833
    %v835 = vlaneseq
    %v836 = vshrl.u32 %v835, 7
    %v837 = vsub.s32 2, %v836
    %v838 = vrot.slane %v556, %v837
    %v839 = vlaneseq
    %v840 = vshrl.u32 %v839, 7
    %v841 = vsub.s32 3, %v840
    %v842 = vrot.slane %v556, %v841
    %v879 = vunpack.c.l.b16 %v524
    %v880 = vunpack.c.h.b16 %v524
    %v881 = vunpack.c.l.b16 %v525
    %v882 = vunpack.c.h.b16 %v525
    %v883 = vunpack.c.l.b16 %v526
    %v884 = vunpack.c.h.b16 %v526
    %v885 = vunpack.c.l.b16 %v527
    %v886 = vunpack.c.h.b16 %v527
    %v887 = vunpack.c.l.b16 %v528
    %v888 = vunpack.c.h.b16 %v528
    %v889 = vunpack.c.l.b16 %v529
    %v890 = vunpack.c.h.b16 %v529
    %v891 = vunpack.c.l.b16 %v530
    %v892 = vunpack.c.h.b16 %v530
    %v893 = vunpack.c.l.b16 %v531
    %v894 = vunpack.c.h.b16 %v531
    %v895 = vunpack.c.l.b16 %v532
    %v896 = vunpack.c.h.b16 %v532
    %v897 = vunpack.c.l.b16 %v533
    %v898 = vunpack.c.h.b16 %v533
    %v899 = vunpack.c.l.b16 %v534
    %v900 = vunpack.c.h.b16 %v534
    %v901 = vunpack.c.l.b16 %v535
    %v902 = vunpack.c.h.b16 %v535
    %v903 = vunpack.c.l.b16 %v536
    %v904 = vunpack.c.h.b16 %v536
    %v905 = vunpack.c.l.b16 %v537
    %v906 = vunpack.c.h.b16 %v537
    %v907 = vunpack.c.l.b16 %v538
    %v908 = vunpack.c.h.b16 %v538
    %v909 = vunpack.c.l.b16 %v539
    %v910 = vunpack.c.h.b16 %v539
    %v911 = vunpack.c.l.b16 %v540
    %v912 = vunpack.c.h.b16 %v540
    %v913 = vunpack.c.l.b16 %v541
    %v914 = vunpack.c.h.b16 %v541
    %v915 = vunpack.c.l.b16 %v542
    %v916 = vunpack.c.h.b16 %v542
    %v917 = vunpack.c.l.b16 %v543
    %v918 = vunpack.c.h.b16 %v543
    %v919 = vunpack.c.l.b16 %v544
    %v920 = vunpack.c.h.b16 %v544
    %v921 = vunpack.c.l.b16 %v545
    %v922 = vunpack.c.h.b16 %v545
    %v923 = vunpack.c.l.b16 %v546
    %v924 = vunpack.c.h.b16 %v546
    %v925 = vunpack.c.l.b16 %v547
    %v926 = vunpack.c.h.b16 %v547
    %v927 = vunpack.c.l.b16 %v548
    %v928 = vunpack.c.h.b16 %v548
    %v929 = vunpack.c.l.b16 %v549
    %v930 = vunpack.c.h.b16 %v549
    %v931 = vunpack.c.l.b16 %v550
    %v932 = vunpack.c.h.b16 %v550
    %v933 = vunpack.c.l.b16 %v551
    %v934 = vunpack.c.h.b16 %v551
    %v935 = vunpack.c.l.b16 %v552
    %v936 = vunpack.c.h.b16 %v552
    %v937 = vunpack.c.l.b16 %v553
    %v938 = vunpack.c.h.b16 %v553
    %v939 = vunpack.c.l.b16 %v554
    %v940 = vunpack.c.h.b16 %v554
    %v941 = vunpack.c.l.b16 %v555
    %v942 = vunpack.c.h.b16 %v555
    %v943 = vpack.c.b16 %v883, %v879
    %v944 = vpack.c.b16 %v884, %v880
    %v945 = vpack.c.b16 %v885, %v881
    %v946 = vpack.c.b16 %v886, %v882
    %v947 = vpack.c.b16 %v891, %v887
    %v948 = vpack.c.b16 %v892, %v888
    %v949 = vpack.c.b16 %v893, %v889
    %v950 = vpack.c.b16 %v894, %v890
    %v951 = vpack.c.b16 %v899, %v895
    %v952 = vpack.c.b16 %v900, %v896
    %v953 = vpack.c.b16 %v901, %v897
    %v954 = vpack.c.b16 %v902, %v898
    %v955 = vpack.c.b16 %v907, %v903
    %v956 = vpack.c.b16 %v908, %v904
    %v957 = vpack.c.b16 %v909, %v905
    %v958 = vpack.c.b16 %v910, %v906
    %v959 = vpack.c.b16 %v915, %v911
    %v960 = vpack.c.b16 %v916, %v912
    %v961 = vpack.c.b16 %v917, %v913
    %v962 = vpack.c.b16 %v918, %v914
    %v963 = vpack.c.b16 %v923, %v919
    %v964 = vpack.c.b16 %v924, %v920
    %v965 = vpack.c.b16 %v925, %v921
    %v966 = vpack.c.b16 %v926, %v922
    %v967 = vpack.c.b16 %v931, %v927
    %v968 = vpack.c.b16 %v932, %v928
    %v969 = vpack.c.b16 %v933, %v929
    %v970 = vpack.c.b16 %v934, %v930
    %v971 = vpack.c.b16 %v939, %v935
    %v972 = vpack.c.b16 %v940, %v936
    %v973 = vpack.c.b16 %v941, %v937
    %v974 = vpack.c.b16 %v942, %v938
    %1007 = vmatprep.subr.bf16.mxu0 %v944
    %1008 = vmatpush1.bf16.msra.mxu0 %v943
    %1009 = vmatprep.subr.bf16.mxu0 %v948
    %1010 = vmatpush1.bf16.msra.mxu0 %v947
    %1011 = vmatprep.subr.bf16.mxu0 %v952
    %1012 = vmatpush1.bf16.msra.mxu0 %v951
    %1013 = vmatprep.subr.bf16.mxu0 %v956
    %1014 = vmatpush1.bf16.msra.mxu0 %v955
    %1015 = vmatprep.subr.bf16.mxu0 %v960
    %1016 = vmatpush1.bf16.msra.mxu0 %v959
    %1017 = vmatprep.subr.bf16.mxu0 %v964
    %1018 = vmatpush1.bf16.msra.mxu0 %v963
    %1019 = vmatprep.subr.bf16.mxu0 %v968
    %1020 = vmatpush1.bf16.msra.mxu0 %v967
    %1021 = vmatprep.subr.bf16.mxu0 %v972
    %1022 = vmatpush1.bf16.msra.mxu0 %v971
    %1023 = vmatprep.subr.bf16.mxu0 0
    %1024 = vmatpush1.bf16.msra.mxu0 0
    %1025 = vmatprep.subr.bf16.mxu0 0
    %1026 = vmatpush1.bf16.msra.mxu0 0
    %1027 = vmatprep.subr.bf16.mxu0 0
    %1028 = vmatpush1.bf16.msra.mxu0 0
    %1029 = vmatprep.subr.bf16.mxu0 0
    %1030 = vmatpush1.bf16.msra.mxu0 0
    %1031 = vmatprep.subr.bf16.mxu0 0
    %1032 = vmatpush1.bf16.msra.mxu0 0
    %1033 = vmatprep.subr.bf16.mxu0 0
    %1034 = vmatpush1.bf16.msra.mxu0 0
    %1035 = vmatprep.subr.bf16.mxu0 0
    %1036 = vmatpush1.bf16.msra.mxu0 0
    %1037 = vmatprep.subr.bf16.mxu0 0
    %1038 = vmatpush1.bf16.msra.mxu0 0
    %1039 = vmatprep.mubr.bf16.mxu0 0
    %1040 = vmatmul.mubr.bf16.gmra.mrb[0].mxu0 %v825
    %v1041 = vpop.f32.mrb[0].mxu0
    %v1042 = vadd.f32 %v830, %v1041
    %v1043 = vpop.f32.mrb[0].mxu0
    %v1044 = vadd.f32 %v834, %v1043
    %v1045 = vpop.f32.mrb[0].mxu0
    %v1046 = vpop.f32.mrb[0].mxu0
    %1047 = vdwg.mxu0
    %1048 = vmatprep.subr.bf16.mxu0 %v946
    %1049 = vmatpush1.bf16.msra.mxu0 %v945
    %1050 = vmatprep.subr.bf16.mxu0 %v950
    %1051 = vmatpush1.bf16.msra.mxu0 %v949
    %1052 = vmatprep.subr.bf16.mxu0 %v954
    %1053 = vmatpush1.bf16.msra.mxu0 %v953
    %1054 = vmatprep.subr.bf16.mxu0 %v958
    %1055 = vmatpush1.bf16.msra.mxu0 %v957
    %1056 = vmatprep.subr.bf16.mxu0 %v962
    %1057 = vmatpush1.bf16.msra.mxu0 %v961
    %1058 = vmatprep.subr.bf16.mxu0 %v966
    %1059 = vmatpush1.bf16.msra.mxu0 %v965
    %1060 = vmatprep.subr.bf16.mxu0 %v970
    %1061 = vmatpush1.bf16.msra.mxu0 %v969
    %1062 = vmatprep.subr.bf16.mxu0 %v974
    %1063 = vmatpush1.bf16.msra.mxu0 %v973
    %1064 = vmatprep.subr.bf16.mxu0 0
    %1065 = vmatpush1.bf16.msra.mxu0 0
    %1066 = vmatprep.subr.bf16.mxu0 0
    %1067 = vmatpush1.bf16.msra.mxu0 0
    %1068 = vmatprep.subr.bf16.mxu0 0
    %1069 = vmatpush1.bf16.msra.mxu0 0
    %1070 = vmatprep.subr.bf16.mxu0 0
    %1071 = vmatpush1.bf16.msra.mxu0 0
    %1072 = vmatprep.subr.bf16.mxu0 0
    %1073 = vmatpush1.bf16.msra.mxu0 0
    %1074 = vmatprep.subr.bf16.mxu0 0
    %1075 = vmatpush1.bf16.msra.mxu0 0
    %1076 = vmatprep.subr.bf16.mxu0 0
    %1077 = vmatpush1.bf16.msra.mxu0 0
    %1078 = vmatprep.subr.bf16.mxu0 0
    %1079 = vmatpush1.bf16.msra.mxu0 0
    %1080 = vmatprep.mubr.bf16.mxu0 0
    %1081 = vmatmul.mubr.bf16.gmra.mrb[0].mxu0 %v825
    %v1082 = vpop.f32.mrb[0].mxu0
    %v1083 = vadd.f32 %v838, %v1082
    %v1084 = vpop.f32.mrb[0].mxu0
    %v1085 = vadd.f32 %v842, %v1084
    %v1086 = vpop.f32.mrb[0].mxu0
    %v1087 = vpop.f32.mrb[0].mxu0
    %1088 = vdwg.mxu0
    %1089 = vst [vmem:[#allocation3] sm:$0xff] %v1042
    %1090 = vst [vmem:[#allocation3 + $0x8] sm:$0xff] %v1044
    %1091 = vst [vmem:[#allocation3 + $0x10] sm:$0xff] %v1083
    %1092 = vst [vmem:[#allocation3 + $0x18] sm:$0xff] %v1085
    %s1093 = scalar_lea.vmem [#allocation2], 32
    %v1094 = vld [vmem:[%s1093] sm:$0xff]
    %v1095 = vld [vmem:[%s1093 + $0x8] sm:$0xff]
    %v1096 = vld [vmem:[%s1093 + $0x10] sm:$0xff]
    %v1097 = vld [vmem:[%s1093 + $0x18] sm:$0xff]
    %1098 = vmatprep.subr.bf16.mxu0 %v658
    %1099 = vmatpush1.bf16.msra.mxu0 %v657
    %1100 = vmatprep.subr.bf16.mxu0 %v662
    %1101 = vmatpush1.bf16.msra.mxu0 %v661
    %1102 = vmatprep.subr.bf16.mxu0 %v666
    %1103 = vmatpush1.bf16.msra.mxu0 %v665
    %1104 = vmatprep.subr.bf16.mxu0 %v670
    %1105 = vmatpush1.bf16.msra.mxu0 %v669
    %1106 = vmatprep.subr.bf16.mxu0 %v674
    %1107 = vmatpush1.bf16.msra.mxu0 %v673
    %1108 = vmatprep.subr.bf16.mxu0 %v678
    %1109 = vmatpush1.bf16.msra.mxu0 %v677
    %1110 = vmatprep.subr.bf16.mxu0 %v682
    %1111 = vmatpush1.bf16.msra.mxu0 %v681
    %1112 = vmatprep.subr.bf16.mxu0 %v686
    %1113 = vmatpush1.bf16.msra.mxu0 %v685
    %1114 = vmatprep.subr.bf16.mxu0 0
    %1115 = vmatpush1.bf16.msra.mxu0 0
    %1116 = vmatprep.subr.bf16.mxu0 0
    %1117 = vmatpush1.bf16.msra.mxu0 0
    %1118 = vmatprep.subr.bf16.mxu0 0
    %1119 = vmatpush1.bf16.msra.mxu0 0
    %1120 = vmatprep.subr.bf16.mxu0 0
    %1121 = vmatpush1.bf16.msra.mxu0 0
    %1122 = vmatprep.subr.bf16.mxu0 0
    %1123 = vmatpush1.bf16.msra.mxu0 0
    %1124 = vmatprep.subr.bf16.mxu0 0
    %1125 = vmatpush1.bf16.msra.mxu0 0
    %1126 = vmatprep.subr.bf16.mxu0 0
    %1127 = vmatpush1.bf16.msra.mxu0 0
    %1128 = vmatprep.subr.bf16.mxu0 0
    %1129 = vmatpush1.bf16.msra.mxu0 0
    %1130 = vmatprep.mubr.bf16.mxu0 0
    %1131 = vmatmul.mubr.bf16.gmra.mrb[0].mxu0 %v825
    %v1132 = vpop.f32.mrb[0].mxu0
    %v1133 = vadd.f32 0.0, %v1132
    %v1134 = vpop.f32.mrb[0].mxu0
    %v1135 = vadd.f32 0.0, %v1134
    %v1136 = vpop.f32.mrb[0].mxu0
    %v1137 = vpop.f32.mrb[0].mxu0
    %1138 = vdwg.mxu0
    %1139 = vmatprep.subr.bf16.mxu0 %v660
    %1140 = vmatpush1.bf16.msra.mxu0 %v659
    %1141 = vmatprep.subr.bf16.mxu0 %v664
    %1142 = vmatpush1.bf16.msra.mxu0 %v663
    %1143 = vmatprep.subr.bf16.mxu0 %v668
    %1144 = vmatpush1.bf16.msra.mxu0 %v667
    %1145 = vmatprep.subr.bf16.mxu0 %v672
    %1146 = vmatpush1.bf16.msra.mxu0 %v671
    %1147 = vmatprep.subr.bf16.mxu0 %v676
    %1148 = vmatpush1.bf16.msra.mxu0 %v675
    %1149 = vmatprep.subr.bf16.mxu0 %v680
    %1150 = vmatpush1.bf16.msra.mxu0 %v679
    %1151 = vmatprep.subr.bf16.mxu0 %v684
    %1152 = vmatpush1.bf16.msra.mxu0 %v683
    %1153 = vmatprep.subr.bf16.mxu0 %v688
    %1154 = vmatpush1.bf16.msra.mxu0 %v687
    %1155 = vmatprep.subr.bf16.mxu0 0
    %1156 = vmatpush1.bf16.msra.mxu0 0
    %1157 = vmatprep.subr.bf16.mxu0 0
    %1158 = vmatpush1.bf16.msra.mxu0 0
    %1159 = vmatprep.subr.bf16.mxu0 0
    %1160 = vmatpush1.bf16.msra.mxu0 0
    %1161 = vmatprep.subr.bf16.mxu0 0
    %1162 = vmatpush1.bf16.msra.mxu0 0
    %1163 = vmatprep.subr.bf16.mxu0 0
    %1164 = vmatpush1.bf16.msra.mxu0 0
    %1165 = vmatprep.subr.bf16.mxu0 0
    %1166 = vmatpush1.bf16.msra.mxu0 0
    %1167 = vmatprep.subr.bf16.mxu0 0
    %1168 = vmatpush1.bf16.msra.mxu0 0
    %1169 = vmatprep.subr.bf16.mxu0 0
    %1170 = vmatpush1.bf16.msra.mxu0 0
    %1171 = vmatprep.mubr.bf16.mxu0 0
    %1172 = vmatmul.mubr.bf16.gmra.mrb[0].mxu0 %v825
    %v1173 = vpop.f32.mrb[0].mxu0
    %v1174 = vadd.f32 0.0, %v1173
    %v1175 = vpop.f32.mrb[0].mxu0
    %v1176 = vadd.f32 0.0, %v1175
    %v1177 = vpop.f32.mrb[0].mxu0
    %v1178 = vpop.f32.mrb[0].mxu0
    %1179 = vdwg.mxu0
    %v1180 = vadd.f32 %v1094, %v1133
    %v1181 = vadd.f32 %v1095, %v1135
    %v1182 = vadd.f32 %v1096, %v1174
    %v1183 = vadd.f32 %v1097, %v1176
    %v1184 = vmul.f32 %v1180, 0.5
    %v1185 = vmul.f32 %v1181, 0.5
    %v1186 = vmul.f32 %v1182, 0.5
    %v1187 = vtanh.pop %v1184
    %v1188 = vtanh.pop %v1185
    %v1189 = vtanh.pop %v1186
    %v1190 = vmul.f32 %v1187, 0.5
    %v1191 = vmul.f32 %v1188, 0.5
    %v1192 = vmul.f32 %v1189, 0.5
    %v1193 = vadd.f32 %v1190, 0.5
    %v1194 = vadd.f32 %v1191, 0.5
    %v1195 = vadd.f32 %v1192, 0.5
    %v1196 = vtanh.pop %v1183
    %v1197 = vmul.f32 %v1194, %v822
    %v1198 = vmul.f32 %v1193, %v1196
    %v1199 = vadd.f32 %v1197, %v1198
    %v1200 = vtanh.pop %v1199
    %v1201 = vmul.f32 %v1195, %v1200
    %v1202 = vpack.c.bf16 %v1201, %v1201
    %1203 = vmatprep.subr.bf16.mxu0 %v944
    %1204 = vmatpush1.bf16.msra.mxu0 %v943
    %1205 = vmatprep.subr.bf16.mxu0 %v948
    %1206 = vmatpush1.bf16.msra.mxu0 %v947
    %1207 = vmatprep.subr.bf16.mxu0 %v952
    %1208 = vmatpush1.bf16.msra.mxu0 %v951
    %1209 = vmatprep.subr.bf16.mxu0 %v956
    %1210 = vmatpush1.bf16.msra.mxu0 %v955
    %1211 = vmatprep.subr.bf16.mxu0 %v960
    %1212 = vmatpush1.bf16.msra.mxu0 %v959
    %1213 = vmatprep.subr.bf16.mxu0 %v964
    %1214 = vmatpush1.bf16.msra.mxu0 %v963
    %1215 = vmatprep.subr.bf16.mxu0 %v968
    %1216 = vmatpush1.bf16.msra.mxu0 %v967
    %1217 = vmatprep.subr.bf16.mxu0 %v972
    %1218 = vmatpush1.bf16.msra.mxu0 %v971
    %1219 = vmatprep.subr.bf16.mxu0 0
    %1220 = vmatpush1.bf16.msra.mxu0 0
    %1221 = vmatprep.subr.bf16.mxu0 0
    %1222 = vmatpush1.bf16.msra.mxu0 0
    %1223 = vmatprep.subr.bf16.mxu0 0
    %1224 = vmatpush1.bf16.msra.mxu0 0
    %1225 = vmatprep.subr.bf16.mxu0 0
    %1226 = vmatpush1.bf16.msra.mxu0 0
    %1227 = vmatprep.subr.bf16.mxu0 0
    %1228 = vmatpush1.bf16.msra.mxu0 0
    %1229 = vmatprep.subr.bf16.mxu0 0
    %1230 = vmatpush1.bf16.msra.mxu0 0
    %1231 = vmatprep.subr.bf16.mxu0 0
    %1232 = vmatpush1.bf16.msra.mxu0 0
    %1233 = vmatprep.subr.bf16.mxu0 0
    %1234 = vmatpush1.bf16.msra.mxu0 0
    %1235 = vmatprep.mubr.bf16.mxu0 0
    %1236 = vmatmul.mubr.bf16.gmra.mrb[0].mxu0 %v1202
    %v1237 = vpop.f32.mrb[0].mxu0
    %v1238 = vadd.f32 %v830, %v1237
    %v1239 = vpop.f32.mrb[0].mxu0
    %v1240 = vadd.f32 %v834, %v1239
    %v1241 = vpop.f32.mrb[0].mxu0
    %v1242 = vpop.f32.mrb[0].mxu0
    %1243 = vdwg.mxu0
    %1244 = vmatprep.subr.bf16.mxu0 %v946
    %1245 = vmatpush1.bf16.msra.mxu0 %v945
    %1246 = vmatprep.subr.bf16.mxu0 %v950
    %1247 = vmatpush1.bf16.msra.mxu0 %v949
    %1248 = vmatprep.subr.bf16.mxu0 %v954
    %1249 = vmatpush1.bf16.msra.mxu0 %v953
    %1250 = vmatprep.subr.bf16.mxu0 %v958
    %1251 = vmatpush1.bf16.msra.mxu0 %v957
    %1252 = vmatprep.subr.bf16.mxu0 %v962
    %1253 = vmatpush1.bf16.msra.mxu0 %v961
    %1254 = vmatprep.subr.bf16.mxu0 %v966
    %1255 = vmatpush1.bf16.msra.mxu0 %v965
    %1256 = vmatprep.subr.bf16.mxu0 %v970
    %1257 = vmatpush1.bf16.msra.mxu0 %v969
    %1258 = vmatprep.subr.bf16.mxu0 %v974
    %1259 = vmatpush1.bf16.msra.mxu0 %v973
    %1260 = vmatprep.subr.bf16.mxu0 0
    %1261 = vmatpush1.bf16.msra.mxu0 0
    %1262 = vmatprep.subr.bf16.mxu0 0
    %1263 = vmatpush1.bf16.msra.mxu0 0
    %1264 = vmatprep.subr.bf16.mxu0 0
    %1265 = vmatpush1.bf16.msra.mxu0 0
    %1266 = vmatprep.subr.bf16.mxu0 0
    %1267 = vmatpush1.bf16.msra.mxu0 0
    %1268 = vmatprep.subr.bf16.mxu0 0
    %1269 = vmatpush1.bf16.msra.mxu0 0
    %1270 = vmatprep.subr.bf16.mxu0 0
    %1271 = vmatpush1.bf16.msra.mxu0 0
    %1272 = vmatprep.subr.bf16.mxu0 0
    %1273 = vmatpush1.bf16.msra.mxu0 0
    %1274 = vmatprep.subr.bf16.mxu0 0
    %1275 = vmatpush1.bf16.msra.mxu0 0
    %1276 = vmatprep.mubr.bf16.mxu0 0
    %1277 = vmatmul.mubr.bf16.gmra.mrb[0].mxu0 %v1202
    %v1278 = vpop.f32.mrb[0].mxu0
    %v1279 = vadd.f32 %v838, %v1278
    %v1280 = vpop.f32.mrb[0].mxu0
    %v1281 = vadd.f32 %v842, %v1280
    %v1282 = vpop.f32.mrb[0].mxu0
    %v1283 = vpop.f32.mrb[0].mxu0
    %1284 = vdwg.mxu0
    %s1285 = scalar_lea.vmem [#allocation3], 32
    %1286 = vst [vmem:[%s1285] sm:$0xff] %v1238
    %1287 = vst [vmem:[%s1285 + $0x8] sm:$0xff] %v1240
    %1288 = vst [vmem:[%s1285 + $0x10] sm:$0xff] %v1279
    %1289 = vst [vmem:[%s1285 + $0x18] sm:$0xff] %v1281
    %s1290 = scalar_lea.vmem [#allocation2], 64
    %v1291 = vld [vmem:[%s1290] sm:$0xff]
    %v1292 = vld [vmem:[%s1290 + $0x8] sm:$0xff]
    %v1293 = vld [vmem:[%s1290 + $0x10] sm:$0xff]
    %v1294 = vld [vmem:[%s1290 + $0x18] sm:$0xff]
    %1295 = vmatprep.subr.bf16.mxu0 %v658
    %1296 = vmatpush1.bf16.msra.mxu0 %v657
    %1297 = vmatprep.subr.bf16.mxu0 %v662
    %1298 = vmatpush1.bf16.msra.mxu0 %v661
    %1299 = vmatprep.subr.bf16.mxu0 %v666
    %1300 = vmatpush1.bf16.msra.mxu0 %v665
    %1301 = vmatprep.subr.bf16.mxu0 %v670
    %1302 = vmatpush1.bf16.msra.mxu0 %v669
    %1303 = vmatprep.subr.bf16.mxu0 %v674
    %1304 = vmatpush1.bf16.msra.mxu0 %v673
    %1305 = vmatprep.subr.bf16.mxu0 %v678
    %1306 = vmatpush1.bf16.msra.mxu0 %v677
    %1307 = vmatprep.subr.bf16.mxu0 %v682
    %1308 = vmatpush1.bf16.msra.mxu0 %v681
    %1309 = vmatprep.subr.bf16.mxu0 %v686
    %1310 = vmatpush1.bf16.msra.mxu0 %v685
    %1311 = vmatprep.subr.bf16.mxu0 0
    %1312 = vmatpush1.bf16.msra.mxu0 0
    %1313 = vmatprep.subr.bf16.mxu0 0
    %1314 = vmatpush1.bf16.msra.mxu0 0
    %1315 = vmatprep.subr.bf16.mxu0 0
    %1316 = vmatpush1.bf16.msra.mxu0 0
    %1317 = vmatprep.subr.bf16.mxu0 0
    %1318 = vmatpush1.bf16.msra.mxu0 0
    %1319 = vmatprep.subr.bf16.mxu0 0
    %1320 = vmatpush1.bf16.msra.mxu0 0
    %1321 = vmatprep.subr.bf16.mxu0 0
    %1322 = vmatpush1.bf16.msra.mxu0 0
    %1323 = vmatprep.subr.bf16.mxu0 0
    %1324 = vmatpush1.bf16.msra.mxu0 0
    %1325 = vmatprep.subr.bf16.mxu0 0
    %1326 = vmatpush1.bf16.msra.mxu0 0
    %1327 = vmatprep.mubr.bf16.mxu0 0
    %1328 = vmatmul.mubr.bf16.gmra.mrb[0].mxu0 %v1202
    %v1329 = vpop.f32.mrb[0].mxu0
    %v1330 = vadd.f32 0.0, %v1329
    %v1331 = vpop.f32.mrb[0].mxu0
    %v1332 = vadd.f32 0.0, %v1331
    %v1333 = vpop.f32.mrb[0].mxu0
    %v1334 = vpop.f32.mrb[0].mxu0
    %1335 = vdwg.mxu0
    %1336 = vmatprep.subr.bf16.mxu0 %v660
    %1337 = vmatpush1.bf16.msra.mxu0 %v659
    %1338 = vmatprep.subr.bf16.mxu0 %v664
    %1339 = vmatpush1.bf16.msra.mxu0 %v663
    %1340 = vmatprep.subr.bf16.mxu0 %v668
    %1341 = vmatpush1.bf16.msra.mxu0 %v667
    %1342 = vmatprep.subr.bf16.mxu0 %v672
    %1343 = vmatpush1.bf16.msra.mxu0 %v671
    %1344 = vmatprep.subr.bf16.mxu0 %v676
    %1345 = vmatpush1.bf16.msra.mxu0 %v675
    %1346 = vmatprep.subr.bf16.mxu0 %v680
    %1347 = vmatpush1.bf16.msra.mxu0 %v679
    %1348 = vmatprep.subr.bf16.mxu0 %v684
    %1349 = vmatpush1.bf16.msra.mxu0 %v683
    %1350 = vmatprep.subr.bf16.mxu0 %v688
    %1351 = vmatpush1.bf16.msra.mxu0 %v687
    %1352 = vmatprep.subr.bf16.mxu0 0
    %1353 = vmatpush1.bf16.msra.mxu0 0
    %1354 = vmatprep.subr.bf16.mxu0 0
    %1355 = vmatpush1.bf16.msra.mxu0 0
    %1356 = vmatprep.subr.bf16.mxu0 0
    %1357 = vmatpush1.bf16.msra.mxu0 0
    %1358 = vmatprep.subr.bf16.mxu0 0
    %1359 = vmatpush1.bf16.msra.mxu0 0
    %1360 = vmatprep.subr.bf16.mxu0 0
    %1361 = vmatpush1.bf16.msra.mxu0 0
    %1362 = vmatprep.subr.bf16.mxu0 0
    %1363 = vmatpush1.bf16.msra.mxu0 0
    %1364 = vmatprep.subr.bf16.mxu0 0
    %1365 = vmatpush1.bf16.msra.mxu0 0
    %1366 = vmatprep.subr.bf16.mxu0 0
    %1367 = vmatpush1.bf16.msra.mxu0 0
    %1368 = vmatprep.mubr.bf16.mxu0 0
    %1369 = vmatmul.mubr.bf16.gmra.mrb[0].mxu0 %v1202
    %v1370 = vpop.f32.mrb[0].mxu0
    %v1371 = vadd.f32 0.0, %v1370
    %v1372 = vpop.f32.mrb[0].mxu0
    %v1373 = vadd.f32 0.0, %v1372
    %v1374 = vpop.f32.mrb[0].mxu0
    %v1375 = vpop.f32.mrb[0].mxu0
    %1376 = vdwg.mxu0
    %v1377 = vadd.f32 %v1291, %v1330
    %v1378 = vadd.f32 %v1292, %v1332
    %v1379 = vadd.f32 %v1293, %v1371
    %v1380 = vadd.f32 %v1294, %v1373
    %v1381 = vmul.f32 %v1377, 0.5
    %v1382 = vmul.f32 %v1378, 0.5
    %v1383 = vmul.f32 %v1379, 0.5
    %v1384 = vtanh.pop %v1381
    %v1385 = vtanh.pop %v1382
    %v1386 = vtanh.pop %v1383
    %v1387 = vmul.f32 %v1384, 0.5
    %v1388 = vmul.f32 %v1385, 0.5
    %v1389 = vmul.f32 %v1386, 0.5
    %v1390 = vadd.f32 %v1387, 0.5
    %v1391 = vadd.f32 %v1388, 0.5
    %v1392 = vadd.f32 %v1389, 0.5
    %v1393 = vtanh.pop %v1380
    %v1394 = vmul.f32 %v1391, %v1199
    %v1395 = vmul.f32 %v1390, %v1393
    %v1396 = vadd.f32 %v1394, %v1395
    %v1397 = vtanh.pop %v1396
    %v1398 = vmul.f32 %v1392, %v1397
    %v1399 = vpack.c.bf16 %v1398, %v1398
    %1400 = vmatprep.subr.bf16.mxu0 %v944
    %1401 = vmatpush1.bf16.msra.mxu0 %v943
    %1402 = vmatprep.subr.bf16.mxu0 %v948
    %1403 = vmatpush1.bf16.msra.mxu0 %v947
    %1404 = vmatprep.subr.bf16.mxu0 %v952
    %1405 = vmatpush1.bf16.msra.mxu0 %v951
    %1406 = vmatprep.subr.bf16.mxu0 %v956
    %1407 = vmatpush1.bf16.msra.mxu0 %v955
    %1408 = vmatprep.subr.bf16.mxu0 %v960
    %1409 = vmatpush1.bf16.msra.mxu0 %v959
    %1410 = vmatprep.subr.bf16.mxu0 %v964
    %1411 = vmatpush1.bf16.msra.mxu0 %v963
    %1412 = vmatprep.subr.bf16.mxu0 %v968
    %1413 = vmatpush1.bf16.msra.mxu0 %v967
    %1414 = vmatprep.subr.bf16.mxu0 %v972
    %1415 = vmatpush1.bf16.msra.mxu0 %v971
    %1416 = vmatprep.subr.bf16.mxu0 0
    %1417 = vmatpush1.bf16.msra.mxu0 0
    %1418 = vmatprep.subr.bf16.mxu0 0
    %1419 = vmatpush1.bf16.msra.mxu0 0
    %1420 = vmatprep.subr.bf16.mxu0 0
    %1421 = vmatpush1.bf16.msra.mxu0 0
    %1422 = vmatprep.subr.bf16.mxu0 0
    %1423 = vmatpush1.bf16.msra.mxu0 0
    %1424 = vmatprep.subr.bf16.mxu0 0
    %1425 = vmatpush1.bf16.msra.mxu0 0
    %1426 = vmatprep.subr.bf16.mxu0 0
    %1427 = vmatpush1.bf16.msra.mxu0 0
    %1428 = vmatprep.subr.bf16.mxu0 0
    %1429 = vmatpush1.bf16.msra.mxu0 0
    %1430 = vmatprep.subr.bf16.mxu0 0
    %1431 = vmatpush1.bf16.msra.mxu0 0
    %1432 = vmatprep.mubr.bf16.mxu0 0
    %1433 = vmatmul.mubr.bf16.gmra.mrb[0].mxu0 %v1399
    %v1434 = vpop.f32.mrb[0].mxu0
    %v1435 = vadd.f32 %v830, %v1434
    %v1436 = vpop.f32.mrb[0].mxu0
    %v1437 = vadd.f32 %v834, %v1436
    %v1438 = vpop.f32.mrb[0].mxu0
    %v1439 = vpop.f32.mrb[0].mxu0
    %1440 = vdwg.mxu0
    %1441 = vmatprep.subr.bf16.mxu0 %v946
    %1442 = vmatpush1.bf16.msra.mxu0 %v945
    %1443 = vmatprep.subr.bf16.mxu0 %v950
    %1444 = vmatpush1.bf16.msra.mxu0 %v949
    %1445 = vmatprep.subr.bf16.mxu0 %v954
    %1446 = vmatpush1.bf16.msra.mxu0 %v953
    %1447 = vmatprep.subr.bf16.mxu0 %v958
    %1448 = vmatpush1.bf16.msra.mxu0 %v957
    %1449 = vmatprep.subr.bf16.mxu0 %v962
    %1450 = vmatpush1.bf16.msra.mxu0 %v961
    %1451 = vmatprep.subr.bf16.mxu0 %v966
    %1452 = vmatpush1.bf16.msra.mxu0 %v965
    %1453 = vmatprep.subr.bf16.mxu0 %v970
    %1454 = vmatpush1.bf16.msra.mxu0 %v969
    %1455 = vmatprep.subr.bf16.mxu0 %v974
    %1456 = vmatpush1.bf16.msra.mxu0 %v973
    %1457 = vmatprep.subr.bf16.mxu0 0
    %1458 = vmatpush1.bf16.msra.mxu0 0
    %1459 = vmatprep.subr.bf16.mxu0 0
    %1460 = vmatpush1.bf16.msra.mxu0 0
    %1461 = vmatprep.subr.bf16.mxu0 0
    %1462 = vmatpush1.bf16.msra.mxu0 0
    %1463 = vmatprep.subr.bf16.mxu0 0
    %1464 = vmatpush1.bf16.msra.mxu0 0
    %1465 = vmatprep.subr.bf16.mxu0 0
    %1466 = vmatpush1.bf16.msra.mxu0 0
    %1467 = vmatprep.subr.bf16.mxu0 0
    %1468 = vmatpush1.bf16.msra.mxu0 0
    %1469 = vmatprep.subr.bf16.mxu0 0
    %1470 = vmatpush1.bf16.msra.mxu0 0
    %1471 = vmatprep.subr.bf16.mxu0 0
    %1472 = vmatpush1.bf16.msra.mxu0 0
    %1473 = vmatprep.mubr.bf16.mxu0 0
    %1474 = vmatmul.mubr.bf16.gmra.mrb[0].mxu0 %v1399
    %v1475 = vpop.f32.mrb[0].mxu0
    %v1476 = vadd.f32 %v838, %v1475
    %v1477 = vpop.f32.mrb[0].mxu0
    %v1478 = vadd.f32 %v842, %v1477
    %v1479 = vpop.f32.mrb[0].mxu0
    %v1480 = vpop.f32.mrb[0].mxu0
    %1481 = vdwg.mxu0
    %s1482 = scalar_lea.vmem [#allocation3], 64
    %1483 = vst [vmem:[%s1482] sm:$0xff] %v1435
    %1484 = vst [vmem:[%s1482 + $0x8] sm:$0xff] %v1437
    %1485 = vst [vmem:[%s1482 + $0x10] sm:$0xff] %v1476
    %1486 = vst [vmem:[%s1482 + $0x18] sm:$0xff] %v1478
    %s1487 = scalar_lea.vmem [#allocation2], 96
    %v1488 = vld [vmem:[%s1487] sm:$0xff]
    %v1489 = vld [vmem:[%s1487 + $0x8] sm:$0xff]
    %v1490 = vld [vmem:[%s1487 + $0x10] sm:$0xff]
    %v1491 = vld [vmem:[%s1487 + $0x18] sm:$0xff]
    %1492 = vmatprep.subr.bf16.mxu0 %v658
    %1493 = vmatpush1.bf16.msra.mxu0 %v657
    %1494 = vmatprep.subr.bf16.mxu0 %v662
    %1495 = vmatpush1.bf16.msra.mxu0 %v661
    %1496 = vmatprep.subr.bf16.mxu0 %v666
    %1497 = vmatpush1.bf16.msra.mxu0 %v665
    %1498 = vmatprep.subr.bf16.mxu0 %v670
    %1499 = vmatpush1.bf16.msra.mxu0 %v669
    %1500 = vmatprep.subr.bf16.mxu0 %v674
    %1501 = vmatpush1.bf16.msra.mxu0 %v673
    %1502 = vmatprep.subr.bf16.mxu0 %v678
    %1503 = vmatpush1.bf16.msra.mxu0 %v677
    %1504 = vmatprep.subr.bf16.mxu0 %v682
    %1505 = vmatpush1.bf16.msra.mxu0 %v681
    %1506 = vmatprep.subr.bf16.mxu0 %v686
    %1507 = vmatpush1.bf16.msra.mxu0 %v685
    %1508 = vmatprep.subr.bf16.mxu0 0
    %1509 = vmatpush1.bf16.msra.mxu0 0
    %1510 = vmatprep.subr.bf16.mxu0 0
    %1511 = vmatpush1.bf16.msra.mxu0 0
    %1512 = vmatprep.subr.bf16.mxu0 0
    %1513 = vmatpush1.bf16.msra.mxu0 0
    %1514 = vmatprep.subr.bf16.mxu0 0
    %1515 = vmatpush1.bf16.msra.mxu0 0
    %1516 = vmatprep.subr.bf16.mxu0 0
    %1517 = vmatpush1.bf16.msra.mxu0 0
    %1518 = vmatprep.subr.bf16.mxu0 0
    %1519 = vmatpush1.bf16.msra.mxu0 0
    %1520 = vmatprep.subr.bf16.mxu0 0
    %1521 = vmatpush1.bf16.msra.mxu0 0
    %1522 = vmatprep.subr.bf16.mxu0 0
    %1523 = vmatpush1.bf16.msra.mxu0 0
    %1524 = vmatprep.mubr.bf16.mxu0 0
    %1525 = vmatmul.mubr.bf16.gmra.mrb[0].mxu0 %v1399
    %v1526 = vpop.f32.mrb[0].mxu0
    %v1527 = vadd.f32 0.0, %v1526
    %v1528 = vpop.f32.mrb[0].mxu0
    %v1529 = vadd.f32 0.0, %v1528
    %v1530 = vpop.f32.mrb[0].mxu0
    %v1531 = vpop.f32.mrb[0].mxu0
    %1532 = vdwg.mxu0
    %1533 = vmatprep.subr.bf16.mxu0 %v660
    %1534 = vmatpush1.bf16.msra.mxu0 %v659
    %1535 = vmatprep.subr.bf16.mxu0 %v664
    %1536 = vmatpush1.bf16.msra.mxu0 %v663
    %1537 = vmatprep.subr.bf16.mxu0 %v668
    %1538 = vmatpush1.bf16.msra.mxu0 %v667
    %1539 = vmatprep.subr.bf16.mxu0 %v672
    %1540 = vmatpush1.bf16.msra.mxu0 %v671
    %1541 = vmatprep.subr.bf16.mxu0 %v676
    %1542 = vmatpush1.bf16.msra.mxu0 %v675
    %1543 = vmatprep.subr.bf16.mxu0 %v680
    %1544 = vmatpush1.bf16.msra.mxu0 %v679
    %1545 = vmatprep.subr.bf16.mxu0 %v684
    %1546 = vmatpush1.bf16.msra.mxu0 %v683
    %1547 = vmatprep.subr.bf16.mxu0 %v688
    %1548 = vmatpush1.bf16.msra.mxu0 %v687
    %1549 = vmatprep.subr.bf16.mxu0 0
    %1550 = vmatpush1.bf16.msra.mxu0 0
    %1551 = vmatprep.subr.bf16.mxu0 0
    %1552 = vmatpush1.bf16.msra.mxu0 0
    %1553 = vmatprep.subr.bf16.mxu0 0
    %1554 = vmatpush1.bf16.msra.mxu0 0
    %1555 = vmatprep.subr.bf16.mxu0 0
    %1556 = vmatpush1.bf16.msra.mxu0 0
    %1557 = vmatprep.subr.bf16.mxu0 0
    %1558 = vmatpush1.bf16.msra.mxu0 0
    %1559 = vmatprep.subr.bf16.mxu0 0
    %1560 = vmatpush1.bf16.msra.mxu0 0
    %1561 = vmatprep.subr.bf16.mxu0 0
    %1562 = vmatpush1.bf16.msra.mxu0 0
    %1563 = vmatprep.subr.bf16.mxu0 0
    %1564 = vmatpush1.bf16.msra.mxu0 0
    %1565 = vmatprep.mubr.bf16.mxu0 0
    %1566 = vmatmul.mubr.bf16.gmra.mrb[0].mxu0 %v1399
    %v1567 = vpop.f32.mrb[0].mxu0
    %v1568 = vadd.f32 0.0, %v1567
    %v1569 = vpop.f32.mrb[0].mxu0
    %v1570 = vadd.f32 0.0, %v1569
    %v1571 = vpop.f32.mrb[0].mxu0
    %v1572 = vpop.f32.mrb[0].mxu0
    %1573 = vdwg.mxu0
    %v1574 = vadd.f32 %v1488, %v1527
    %v1575 = vadd.f32 %v1489, %v1529
    %v1576 = vadd.f32 %v1490, %v1568
    %v1577 = vadd.f32 %v1491, %v1570
    %v1578 = vmul.f32 %v1574, 0.5
    %v1579 = vmul.f32 %v1575, 0.5
    %v1580 = vmul.f32 %v1576, 0.5
    %v1581 = vtanh.pop %v1578
    %v1582 = vtanh.pop %v1579
    %v1583 = vtanh.pop %v1580
    %v1584 = vmul.f32 %v1581, 0.5
    %v1585 = vmul.f32 %v1582, 0.5
    %v1586 = vmul.f32 %v1583, 0.5
    %v1587 = vadd.f32 %v1584, 0.5
    %v1588 = vadd.f32 %v1585, 0.5
    %v1589 = vadd.f32 %v1586, 0.5
    %v1590 = vtanh.pop %v1577
    %v1591 = vmul.f32 %v1588, %v1396
    %v1592 = vmul.f32 %v1587, %v1590
    %v1593 = vadd.f32 %v1591, %v1592
    %v1594 = vtanh.pop %v1593
    %v1595 = vmul.f32 %v1589, %v1594
    %v1596 = vpack.c.bf16 %v1595, %v1595
    %1597 = vmatprep.subr.bf16.mxu0 %v944
    %1598 = vmatpush1.bf16.msra.mxu0 %v943
    %1599 = vmatprep.subr.bf16.mxu0 %v948
    %1600 = vmatpush1.bf16.msra.mxu0 %v947
    %1601 = vmatprep.subr.bf16.mxu0 %v952
    %1602 = vmatpush1.bf16.msra.mxu0 %v951
    %1603 = vmatprep.subr.bf16.mxu0 %v956
    %1604 = vmatpush1.bf16.msra.mxu0 %v955
    %1605 = vmatprep.subr.bf16.mxu0 %v960
    %1606 = vmatpush1.bf16.msra.mxu0 %v959
    %1607 = vmatprep.subr.bf16.mxu0 %v964
    %1608 = vmatpush1.bf16.msra.mxu0 %v963
    %1609 = vmatprep.subr.bf16.mxu0 %v968
    %1610 = vmatpush1.bf16.msra.mxu0 %v967
    %1611 = vmatprep.subr.bf16.mxu0 %v972
    %1612 = vmatpush1.bf16.msra.mxu0 %v971
    %1613 = vmatprep.subr.bf16.mxu0 0
    %1614 = vmatpush1.bf16.msra.mxu0 0
    %1615 = vmatprep.subr.bf16.mxu0 0
    %1616 = vmatpush1.bf16.msra.mxu0 0
    %1617 = vmatprep.subr.bf16.mxu0 0
    %1618 = vmatpush1.bf16.msra.mxu0 0
    %1619 = vmatprep.subr.bf16.mxu0 0
    %1620 = vmatpush1.bf16.msra.mxu0 0
    %1621 = vmatprep.subr.bf16.mxu0 0
    %1622 = vmatpush1.bf16.msra.mxu0 0
    %1623 = vmatprep.subr.bf16.mxu0 0
    %1624 = vmatpush1.bf16.msra.mxu0 0
    %1625 = vmatprep.subr.bf16.mxu0 0
    %1626 = vmatpush1.bf16.msra.mxu0 0
    %1627 = vmatprep.subr.bf16.mxu0 0
    %1628 = vmatpush1.bf16.msra.mxu0 0
    %1629 = vmatprep.mubr.bf16.mxu0 0
    %1630 = vmatmul.mubr.bf16.gmra.mrb[0].mxu0 %v1596
    %v1631 = vpop.f32.mrb[0].mxu0
    %v1632 = vadd.f32 %v830, %v1631
    %v1633 = vpop.f32.mrb[0].mxu0
    %v1634 = vadd.f32 %v834, %v1633
    %v1635 = vpop.f32.mrb[0].mxu0
    %v1636 = vpop.f32.mrb[0].mxu0
    %1637 = vdwg.mxu0
    %1638 = vmatprep.subr.bf16.mxu0 %v946
    %1639 = vmatpush1.bf16.msra.mxu0 %v945
    %1640 = vmatprep.subr.bf16.mxu0 %v950
    %1641 = vmatpush1.bf16.msra.mxu0 %v949
    %1642 = vmatprep.subr.bf16.mxu0 %v954
    %1643 = vmatpush1.bf16.msra.mxu0 %v953
    %1644 = vmatprep.subr.bf16.mxu0 %v958
    %1645 = vmatpush1.bf16.msra.mxu0 %v957
    %1646 = vmatprep.subr.bf16.mxu0 %v962
    %1647 = vmatpush1.bf16.msra.mxu0 %v961
    %1648 = vmatprep.subr.bf16.mxu0 %v966
    %1649 = vmatpush1.bf16.msra.mxu0 %v965
    %1650 = vmatprep.subr.bf16.mxu0 %v970
    %1651 = vmatpush1.bf16.msra.mxu0 %v969
    %1652 = vmatprep.subr.bf16.mxu0 %v974
    %1653 = vmatpush1.bf16.msra.mxu0 %v973
    %1654 = vmatprep.subr.bf16.mxu0 0
    %1655 = vmatpush1.bf16.msra.mxu0 0
    %1656 = vmatprep.subr.bf16.mxu0 0
    %1657 = vmatpush1.bf16.msra.mxu0 0
    %1658 = vmatprep.subr.bf16.mxu0 0
    %1659 = vmatpush1.bf16.msra.mxu0 0
    %1660 = vmatprep.subr.bf16.mxu0 0
    %1661 = vmatpush1.bf16.msra.mxu0 0
    %1662 = vmatprep.subr.bf16.mxu0 0
    %1663 = vmatpush1.bf16.msra.mxu0 0
    %1664 = vmatprep.subr.bf16.mxu0 0
    %1665 = vmatpush1.bf16.msra.mxu0 0
    %1666 = vmatprep.subr.bf16.mxu0 0
    %1667 = vmatpush1.bf16.msra.mxu0 0
    %1668 = vmatprep.subr.bf16.mxu0 0
    %1669 = vmatpush1.bf16.msra.mxu0 0
    %1670 = vmatprep.mubr.bf16.mxu0 0
    %1671 = vmatmul.mubr.bf16.gmra.mrb[0].mxu0 %v1596
    %v1672 = vpop.f32.mrb[0].mxu0
    %v1673 = vadd.f32 %v838, %v1672
    %v1674 = vpop.f32.mrb[0].mxu0
    %v1675 = vadd.f32 %v842, %v1674
    %v1676 = vpop.f32.mrb[0].mxu0
    %v1677 = vpop.f32.mrb[0].mxu0
    %1678 = vdwg.mxu0
    %s1679 = scalar_lea.vmem [#allocation3], 96
    %1680 = vst [vmem:[%s1679] sm:$0xff] %v1632
    %1681 = vst [vmem:[%s1679 + $0x8] sm:$0xff] %v1634
    %1682 = vst [vmem:[%s1679 + $0x10] sm:$0xff] %v1673
    %1683 = vst [vmem:[%s1679 + $0x18] sm:$0xff] %v1675
    %s1684 = scalar_lea.vmem [#allocation2], 128
    %v1685 = vld [vmem:[%s1684] sm:$0xff]
    %v1686 = vld [vmem:[%s1684 + $0x8] sm:$0xff]
    %v1687 = vld [vmem:[%s1684 + $0x10] sm:$0xff]
    %v1688 = vld [vmem:[%s1684 + $0x18] sm:$0xff]
    %1689 = vmatprep.subr.bf16.mxu0 %v658
    %1690 = vmatpush1.bf16.msra.mxu0 %v657
    %1691 = vmatprep.subr.bf16.mxu0 %v662
    %1692 = vmatpush1.bf16.msra.mxu0 %v661
    %1693 = vmatprep.subr.bf16.mxu0 %v666
    %1694 = vmatpush1.bf16.msra.mxu0 %v665
    %1695 = vmatprep.subr.bf16.mxu0 %v670
    %1696 = vmatpush1.bf16.msra.mxu0 %v669
    %1697 = vmatprep.subr.bf16.mxu0 %v674
    %1698 = vmatpush1.bf16.msra.mxu0 %v673
    %1699 = vmatprep.subr.bf16.mxu0 %v678
    %1700 = vmatpush1.bf16.msra.mxu0 %v677
    %1701 = vmatprep.subr.bf16.mxu0 %v682
    %1702 = vmatpush1.bf16.msra.mxu0 %v681
    %1703 = vmatprep.subr.bf16.mxu0 %v686
    %1704 = vmatpush1.bf16.msra.mxu0 %v685
    %1705 = vmatprep.subr.bf16.mxu0 0
    %1706 = vmatpush1.bf16.msra.mxu0 0
    %1707 = vmatprep.subr.bf16.mxu0 0
    %1708 = vmatpush1.bf16.msra.mxu0 0
    %1709 = vmatprep.subr.bf16.mxu0 0
    %1710 = vmatpush1.bf16.msra.mxu0 0
    %1711 = vmatprep.subr.bf16.mxu0 0
    %1712 = vmatpush1.bf16.msra.mxu0 0
    %1713 = vmatprep.subr.bf16.mxu0 0
    %1714 = vmatpush1.bf16.msra.mxu0 0
    %1715 = vmatprep.subr.bf16.mxu0 0
    %1716 = vmatpush1.bf16.msra.mxu0 0
    %1717 = vmatprep.subr.bf16.mxu0 0
    %1718 = vmatpush1.bf16.msra.mxu0 0
    %1719 = vmatprep.subr.bf16.mxu0 0
    %1720 = vmatpush1.bf16.msra.mxu0 0
    %1721 = vmatprep.mubr.bf16.mxu0 0
    %1722 = vmatmul.mubr.bf16.gmra.mrb[0].mxu0 %v1596
    %v1723 = vpop.f32.mrb[0].mxu0
    %v1724 = vadd.f32 0.0, %v1723
    %v1725 = vpop.f32.mrb[0].mxu0
    %v1726 = vadd.f32 0.0, %v1725
    %v1727 = vpop.f32.mrb[0].mxu0
    %v1728 = vpop.f32.mrb[0].mxu0
    %1729 = vdwg.mxu0
    %1730 = vmatprep.subr.bf16.mxu0 %v660
    %1731 = vmatpush1.bf16.msra.mxu0 %v659
    %1732 = vmatprep.subr.bf16.mxu0 %v664
    %1733 = vmatpush1.bf16.msra.mxu0 %v663
    %1734 = vmatprep.subr.bf16.mxu0 %v668
    %1735 = vmatpush1.bf16.msra.mxu0 %v667
    %1736 = vmatprep.subr.bf16.mxu0 %v672
    %1737 = vmatpush1.bf16.msra.mxu0 %v671
    %1738 = vmatprep.subr.bf16.mxu0 %v676
    %1739 = vmatpush1.bf16.msra.mxu0 %v675
    %1740 = vmatprep.subr.bf16.mxu0 %v680
    %1741 = vmatpush1.bf16.msra.mxu0 %v679
    %1742 = vmatprep.subr.bf16.mxu0 %v684
    %1743 = vmatpush1.bf16.msra.mxu0 %v683
    %1744 = vmatprep.subr.bf16.mxu0 %v688
    %1745 = vmatpush1.bf16.msra.mxu0 %v687
    %1746 = vmatprep.subr.bf16.mxu0 0
    %1747 = vmatpush1.bf16.msra.mxu0 0
    %1748 = vmatprep.subr.bf16.mxu0 0
    %1749 = vmatpush1.bf16.msra.mxu0 0
    %1750 = vmatprep.subr.bf16.mxu0 0
    %1751 = vmatpush1.bf16.msra.mxu0 0
    %1752 = vmatprep.subr.bf16.mxu0 0
    %1753 = vmatpush1.bf16.msra.mxu0 0
    %1754 = vmatprep.subr.bf16.mxu0 0
    %1755 = vmatpush1.bf16.msra.mxu0 0
    %1756 = vmatprep.subr.bf16.mxu0 0
    %1757 = vmatpush1.bf16.msra.mxu0 0
    %1758 = vmatprep.subr.bf16.mxu0 0
    %1759 = vmatpush1.bf16.msra.mxu0 0
    %1760 = vmatprep.subr.bf16.mxu0 0
    %1761 = vmatpush1.bf16.msra.mxu0 0
    %1762 = vmatprep.mubr.bf16.mxu0 0
    %1763 = vmatmul.mubr.bf16.gmra.mrb[0].mxu0 %v1596
    %v1764 = vpop.f32.mrb[0].mxu0
    %v1765 = vadd.f32 0.0, %v1764
    %v1766 = vpop.f32.mrb[0].mxu0
    %v1767 = vadd.f32 0.0, %v1766
    %v1768 = vpop.f32.mrb[0].mxu0
    %v1769 = vpop.f32.mrb[0].mxu0
    %1770 = vdwg.mxu0
    %v1771 = vadd.f32 %v1685, %v1724
    %v1772 = vadd.f32 %v1686, %v1726
    %v1773 = vadd.f32 %v1687, %v1765
    %v1774 = vadd.f32 %v1688, %v1767
    %v1775 = vmul.f32 %v1771, 0.5
    %v1776 = vmul.f32 %v1772, 0.5
    %v1777 = vmul.f32 %v1773, 0.5
    %v1778 = vtanh.pop %v1775
    %v1779 = vtanh.pop %v1776
    %v1780 = vtanh.pop %v1777
    %v1781 = vmul.f32 %v1778, 0.5
    %v1782 = vmul.f32 %v1779, 0.5
    %v1783 = vmul.f32 %v1780, 0.5
    %v1784 = vadd.f32 %v1781, 0.5
    %v1785 = vadd.f32 %v1782, 0.5
    %v1786 = vadd.f32 %v1783, 0.5
    %v1787 = vtanh.pop %v1774
    %v1788 = vmul.f32 %v1785, %v1593
    %v1789 = vmul.f32 %v1784, %v1787
    %v1790 = vadd.f32 %v1788, %v1789
    %v1791 = vtanh.pop %v1790
    %v1792 = vmul.f32 %v1786, %v1791
    %v1793 = vpack.c.bf16 %v1792, %v1792
    %1794 = vmatprep.subr.bf16.mxu0 %v944
    %1795 = vmatpush1.bf16.msra.mxu0 %v943
    %1796 = vmatprep.subr.bf16.mxu0 %v948
    %1797 = vmatpush1.bf16.msra.mxu0 %v947
    %1798 = vmatprep.subr.bf16.mxu0 %v952
    %1799 = vmatpush1.bf16.msra.mxu0 %v951
    %1800 = vmatprep.subr.bf16.mxu0 %v956
    %1801 = vmatpush1.bf16.msra.mxu0 %v955
    %1802 = vmatprep.subr.bf16.mxu0 %v960
    %1803 = vmatpush1.bf16.msra.mxu0 %v959
    %1804 = vmatprep.subr.bf16.mxu0 %v964
    %1805 = vmatpush1.bf16.msra.mxu0 %v963
    %1806 = vmatprep.subr.bf16.mxu0 %v968
    %1807 = vmatpush1.bf16.msra.mxu0 %v967
    %1808 = vmatprep.subr.bf16.mxu0 %v972
    %1809 = vmatpush1.bf16.msra.mxu0 %v971
    %1810 = vmatprep.subr.bf16.mxu0 0
    %1811 = vmatpush1.bf16.msra.mxu0 0
    %1812 = vmatprep.subr.bf16.mxu0 0
    %1813 = vmatpush1.bf16.msra.mxu0 0
    %1814 = vmatprep.subr.bf16.mxu0 0
    %1815 = vmatpush1.bf16.msra.mxu0 0
    %1816 = vmatprep.subr.bf16.mxu0 0
    %1817 = vmatpush1.bf16.msra.mxu0 0
    %1818 = vmatprep.subr.bf16.mxu0 0
    %1819 = vmatpush1.bf16.msra.mxu0 0
    %1820 = vmatprep.subr.bf16.mxu0 0
    %1821 = vmatpush1.bf16.msra.mxu0 0
    %1822 = vmatprep.subr.bf16.mxu0 0
    %1823 = vmatpush1.bf16.msra.mxu0 0
    %1824 = vmatprep.subr.bf16.mxu0 0
    %1825 = vmatpush1.bf16.msra.mxu0 0
    %1826 = vmatprep.mubr.bf16.mxu0 0
    %1827 = vmatmul.mubr.bf16.gmra.mrb[0].mxu0 %v1793
    %v1828 = vpop.f32.mrb[0].mxu0
    %v1829 = vadd.f32 %v830, %v1828
    %v1830 = vpop.f32.mrb[0].mxu0
    %v1831 = vadd.f32 %v834, %v1830
    %v1832 = vpop.f32.mrb[0].mxu0
    %v1833 = vpop.f32.mrb[0].mxu0
    %1834 = vdwg.mxu0
    %1835 = vmatprep.subr.bf16.mxu0 %v946
    %1836 = vmatpush1.bf16.msra.mxu0 %v945
    %1837 = vmatprep.subr.bf16.mxu0 %v950
    %1838 = vmatpush1.bf16.msra.mxu0 %v949
    %1839 = vmatprep.subr.bf16.mxu0 %v954
    %1840 = vmatpush1.bf16.msra.mxu0 %v953
    %1841 = vmatprep.subr.bf16.mxu0 %v958
    %1842 = vmatpush1.bf16.msra.mxu0 %v957
    %1843 = vmatprep.subr.bf16.mxu0 %v962
    %1844 = vmatpush1.bf16.msra.mxu0 %v961
    %1845 = vmatprep.subr.bf16.mxu0 %v966
    %1846 = vmatpush1.bf16.msra.mxu0 %v965
    %1847 = vmatprep.subr.bf16.mxu0 %v970
    %1848 = vmatpush1.bf16.msra.mxu0 %v969
    %1849 = vmatprep.subr.bf16.mxu0 %v974
    %1850 = vmatpush1.bf16.msra.mxu0 %v973
    %1851 = vmatprep.subr.bf16.mxu0 0
    %1852 = vmatpush1.bf16.msra.mxu0 0
    %1853 = vmatprep.subr.bf16.mxu0 0
    %1854 = vmatpush1.bf16.msra.mxu0 0
    %1855 = vmatprep.subr.bf16.mxu0 0
    %1856 = vmatpush1.bf16.msra.mxu0 0
    %1857 = vmatprep.subr.bf16.mxu0 0
    %1858 = vmatpush1.bf16.msra.mxu0 0
    %1859 = vmatprep.subr.bf16.mxu0 0
    %1860 = vmatpush1.bf16.msra.mxu0 0
    %1861 = vmatprep.subr.bf16.mxu0 0
    %1862 = vmatpush1.bf16.msra.mxu0 0
    %1863 = vmatprep.subr.bf16.mxu0 0
    %1864 = vmatpush1.bf16.msra.mxu0 0
    %1865 = vmatprep.subr.bf16.mxu0 0
    %1866 = vmatpush1.bf16.msra.mxu0 0
    %1867 = vmatprep.mubr.bf16.mxu0 0
    %1868 = vmatmul.mubr.bf16.gmra.mrb[0].mxu0 %v1793
    %v1869 = vpop.f32.mrb[0].mxu0
    %v1870 = vadd.f32 %v838, %v1869
    %v1871 = vpop.f32.mrb[0].mxu0
    %v1872 = vadd.f32 %v842, %v1871
    %v1873 = vpop.f32.mrb[0].mxu0
    %v1874 = vpop.f32.mrb[0].mxu0
    %1875 = vdwg.mxu0
    %s1876 = scalar_lea.vmem [#allocation3], 128
    %1877 = vst [vmem:[%s1876] sm:$0xff] %v1829
    %1878 = vst [vmem:[%s1876 + $0x8] sm:$0xff] %v1831
    %1879 = vst [vmem:[%s1876 + $0x10] sm:$0xff] %v1870
    %1880 = vst [vmem:[%s1876 + $0x18] sm:$0xff] %v1872
    %s1881 = scalar_lea.vmem [#allocation2], 160
    %v1882 = vld [vmem:[%s1881] sm:$0xff]
    %v1883 = vld [vmem:[%s1881 + $0x8] sm:$0xff]
    %v1884 = vld [vmem:[%s1881 + $0x10] sm:$0xff]
    %v1885 = vld [vmem:[%s1881 + $0x18] sm:$0xff]
    %1886 = vmatprep.subr.bf16.mxu0 %v658
    %1887 = vmatpush1.bf16.msra.mxu0 %v657
    %1888 = vmatprep.subr.bf16.mxu0 %v662
    %1889 = vmatpush1.bf16.msra.mxu0 %v661
    %1890 = vmatprep.subr.bf16.mxu0 %v666
    %1891 = vmatpush1.bf16.msra.mxu0 %v665
    %1892 = vmatprep.subr.bf16.mxu0 %v670
    %1893 = vmatpush1.bf16.msra.mxu0 %v669
    %1894 = vmatprep.subr.bf16.mxu0 %v674
    %1895 = vmatpush1.bf16.msra.mxu0 %v673
    %1896 = vmatprep.subr.bf16.mxu0 %v678
    %1897 = vmatpush1.bf16.msra.mxu0 %v677
    %1898 = vmatprep.subr.bf16.mxu0 %v682
    %1899 = vmatpush1.bf16.msra.mxu0 %v681
    %1900 = vmatprep.subr.bf16.mxu0 %v686
    %1901 = vmatpush1.bf16.msra.mxu0 %v685
    %1902 = vmatprep.subr.bf16.mxu0 0
    %1903 = vmatpush1.bf16.msra.mxu0 0
    %1904 = vmatprep.subr.bf16.mxu0 0
    %1905 = vmatpush1.bf16.msra.mxu0 0
    %1906 = vmatprep.subr.bf16.mxu0 0
    %1907 = vmatpush1.bf16.msra.mxu0 0
    %1908 = vmatprep.subr.bf16.mxu0 0
    %1909 = vmatpush1.bf16.msra.mxu0 0
    %1910 = vmatprep.subr.bf16.mxu0 0
    %1911 = vmatpush1.bf16.msra.mxu0 0
    %1912 = vmatprep.subr.bf16.mxu0 0
    %1913 = vmatpush1.bf16.msra.mxu0 0
    %1914 = vmatprep.subr.bf16.mxu0 0
    %1915 = vmatpush1.bf16.msra.mxu0 0
    %1916 = vmatprep.subr.bf16.mxu0 0
    %1917 = vmatpush1.bf16.msra.mxu0 0
    %1918 = vmatprep.mubr.bf16.mxu0 0
    %1919 = vmatmul.mubr.bf16.gmra.mrb[0].mxu0 %v1793
    %v1920 = vpop.f32.mrb[0].mxu0
    %v1921 = vadd.f32 0.0, %v1920
    %v1922 = vpop.f32.mrb[0].mxu0
    %v1923 = vadd.f32 0.0, %v1922
    %v1924 = vpop.f32.mrb[0].mxu0
    %v1925 = vpop.f32.mrb[0].mxu0
    %1926 = vdwg.mxu0
    %1927 = vmatprep.subr.bf16.mxu0 %v660
    %1928 = vmatpush1.bf16.msra.mxu0 %v659
    %1929 = vmatprep.subr.bf16.mxu0 %v664
    %1930 = vmatpush1.bf16.msra.mxu0 %v663
    %1931 = vmatprep.subr.bf16.mxu0 %v668
    %1932 = vmatpush1.bf16.msra.mxu0 %v667
    %1933 = vmatprep.subr.bf16.mxu0 %v672
    %1934 = vmatpush1.bf16.msra.mxu0 %v671
    %1935 = vmatprep.subr.bf16.mxu0 %v676
    %1936 = vmatpush1.bf16.msra.mxu0 %v675
    %1937 = vmatprep.subr.bf16.mxu0 %v680
    %1938 = vmatpush1.bf16.msra.mxu0 %v679
    %1939 = vmatprep.subr.bf16.mxu0 %v684
    %1940 = vmatpush1.bf16.msra.mxu0 %v683
    %1941 = vmatprep.subr.bf16.mxu0 %v688
    %1942 = vmatpush1.bf16.msra.mxu0 %v687
    %1943 = vmatprep.subr.bf16.mxu0 0
    %1944 = vmatpush1.bf16.msra.mxu0 0
    %1945 = vmatprep.subr.bf16.mxu0 0
    %1946 = vmatpush1.bf16.msra.mxu0 0
    %1947 = vmatprep.subr.bf16.mxu0 0
    %1948 = vmatpush1.bf16.msra.mxu0 0
    %1949 = vmatprep.subr.bf16.mxu0 0
    %1950 = vmatpush1.bf16.msra.mxu0 0
    %1951 = vmatprep.subr.bf16.mxu0 0
    %1952 = vmatpush1.bf16.msra.mxu0 0
    %1953 = vmatprep.subr.bf16.mxu0 0
    %1954 = vmatpush1.bf16.msra.mxu0 0
    %1955 = vmatprep.subr.bf16.mxu0 0
    %1956 = vmatpush1.bf16.msra.mxu0 0
    %1957 = vmatprep.subr.bf16.mxu0 0
    %1958 = vmatpush1.bf16.msra.mxu0 0
    %1959 = vmatprep.mubr.bf16.mxu0 0
    %1960 = vmatmul.mubr.bf16.gmra.mrb[0].mxu0 %v1793
    %v1961 = vpop.f32.mrb[0].mxu0
    %v1962 = vadd.f32 0.0, %v1961
    %v1963 = vpop.f32.mrb[0].mxu0
    %v1964 = vadd.f32 0.0, %v1963
    %v1965 = vpop.f32.mrb[0].mxu0
    %v1966 = vpop.f32.mrb[0].mxu0
    %1967 = vdwg.mxu0
    %v1968 = vadd.f32 %v1882, %v1921
    %v1969 = vadd.f32 %v1883, %v1923
    %v1970 = vadd.f32 %v1884, %v1962
    %v1971 = vadd.f32 %v1885, %v1964
    %v1972 = vmul.f32 %v1968, 0.5
    %v1973 = vmul.f32 %v1969, 0.5
    %v1974 = vmul.f32 %v1970, 0.5
    %v1975 = vtanh.pop %v1972
    %v1976 = vtanh.pop %v1973
    %v1977 = vtanh.pop %v1974
    %v1978 = vmul.f32 %v1975, 0.5
    %v1979 = vmul.f32 %v1976, 0.5
    %v1980 = vmul.f32 %v1977, 0.5
    %v1981 = vadd.f32 %v1978, 0.5
    %v1982 = vadd.f32 %v1979, 0.5
    %v1983 = vadd.f32 %v1980, 0.5
    %v1984 = vtanh.pop %v1971
    %v1985 = vmul.f32 %v1982, %v1790
    %v1986 = vmul.f32 %v1981, %v1984
    %v1987 = vadd.f32 %v1985, %v1986
    %v1988 = vtanh.pop %v1987
    %v1989 = vmul.f32 %v1983, %v1988
    %v1990 = vpack.c.bf16 %v1989, %v1989
    %1991 = vmatprep.subr.bf16.mxu0 %v944
    %1992 = vmatpush1.bf16.msra.mxu0 %v943
    %1993 = vmatprep.subr.bf16.mxu0 %v948
    %1994 = vmatpush1.bf16.msra.mxu0 %v947
    %1995 = vmatprep.subr.bf16.mxu0 %v952
    %1996 = vmatpush1.bf16.msra.mxu0 %v951
    %1997 = vmatprep.subr.bf16.mxu0 %v956
    %1998 = vmatpush1.bf16.msra.mxu0 %v955
    %1999 = vmatprep.subr.bf16.mxu0 %v960
    %2000 = vmatpush1.bf16.msra.mxu0 %v959
    %2001 = vmatprep.subr.bf16.mxu0 %v964
    %2002 = vmatpush1.bf16.msra.mxu0 %v963
    %2003 = vmatprep.subr.bf16.mxu0 %v968
    %2004 = vmatpush1.bf16.msra.mxu0 %v967
    %2005 = vmatprep.subr.bf16.mxu0 %v972
    %2006 = vmatpush1.bf16.msra.mxu0 %v971
    %2007 = vmatprep.subr.bf16.mxu0 0
    %2008 = vmatpush1.bf16.msra.mxu0 0
    %2009 = vmatprep.subr.bf16.mxu0 0
    %2010 = vmatpush1.bf16.msra.mxu0 0
    %2011 = vmatprep.subr.bf16.mxu0 0
    %2012 = vmatpush1.bf16.msra.mxu0 0
    %2013 = vmatprep.subr.bf16.mxu0 0
    %2014 = vmatpush1.bf16.msra.mxu0 0
    %2015 = vmatprep.subr.bf16.mxu0 0
    %2016 = vmatpush1.bf16.msra.mxu0 0
    %2017 = vmatprep.subr.bf16.mxu0 0
    %2018 = vmatpush1.bf16.msra.mxu0 0
    %2019 = vmatprep.subr.bf16.mxu0 0
    %2020 = vmatpush1.bf16.msra.mxu0 0
    %2021 = vmatprep.subr.bf16.mxu0 0
    %2022 = vmatpush1.bf16.msra.mxu0 0
    %2023 = vmatprep.mubr.bf16.mxu0 0
    %2024 = vmatmul.mubr.bf16.gmra.mrb[0].mxu0 %v1990
    %v2025 = vpop.f32.mrb[0].mxu0
    %v2026 = vadd.f32 %v830, %v2025
    %v2027 = vpop.f32.mrb[0].mxu0
    %v2028 = vadd.f32 %v834, %v2027
    %v2029 = vpop.f32.mrb[0].mxu0
    %v2030 = vpop.f32.mrb[0].mxu0
    %2031 = vdwg.mxu0
    %2032 = vmatprep.subr.bf16.mxu0 %v946
    %2033 = vmatpush1.bf16.msra.mxu0 %v945
    %2034 = vmatprep.subr.bf16.mxu0 %v950
    %2035 = vmatpush1.bf16.msra.mxu0 %v949
    %2036 = vmatprep.subr.bf16.mxu0 %v954
    %2037 = vmatpush1.bf16.msra.mxu0 %v953
    %2038 = vmatprep.subr.bf16.mxu0 %v958
    %2039 = vmatpush1.bf16.msra.mxu0 %v957
    %2040 = vmatprep.subr.bf16.mxu0 %v962
    %2041 = vmatpush1.bf16.msra.mxu0 %v961
    %2042 = vmatprep.subr.bf16.mxu0 %v966
    %2043 = vmatpush1.bf16.msra.mxu0 %v965
    %2044 = vmatprep.subr.bf16.mxu0 %v970
    %2045 = vmatpush1.bf16.msra.mxu0 %v969
    %2046 = vmatprep.subr.bf16.mxu0 %v974
    %2047 = vmatpush1.bf16.msra.mxu0 %v973
    %2048 = vmatprep.subr.bf16.mxu0 0
    %2049 = vmatpush1.bf16.msra.mxu0 0
    %2050 = vmatprep.subr.bf16.mxu0 0
    %2051 = vmatpush1.bf16.msra.mxu0 0
    %2052 = vmatprep.subr.bf16.mxu0 0
    %2053 = vmatpush1.bf16.msra.mxu0 0
    %2054 = vmatprep.subr.bf16.mxu0 0
    %2055 = vmatpush1.bf16.msra.mxu0 0
    %2056 = vmatprep.subr.bf16.mxu0 0
    %2057 = vmatpush1.bf16.msra.mxu0 0
    %2058 = vmatprep.subr.bf16.mxu0 0
    %2059 = vmatpush1.bf16.msra.mxu0 0
    %2060 = vmatprep.subr.bf16.mxu0 0
    %2061 = vmatpush1.bf16.msra.mxu0 0
    %2062 = vmatprep.subr.bf16.mxu0 0
    %2063 = vmatpush1.bf16.msra.mxu0 0
    %2064 = vmatprep.mubr.bf16.mxu0 0
    %2065 = vmatmul.mubr.bf16.gmra.mrb[0].mxu0 %v1990
    %v2066 = vpop.f32.mrb[0].mxu0
    %v2067 = vadd.f32 %v838, %v2066
    %v2068 = vpop.f32.mrb[0].mxu0
    %v2069 = vadd.f32 %v842, %v2068
    %v2070 = vpop.f32.mrb[0].mxu0
    %v2071 = vpop.f32.mrb[0].mxu0
    %2072 = vdwg.mxu0
    %s2073 = scalar_lea.vmem [#allocation3], 160
    %2074 = vst [vmem:[%s2073] sm:$0xff] %v2026
    %2075 = vst [vmem:[%s2073 + $0x8] sm:$0xff] %v2028
    %2076 = vst [vmem:[%s2073 + $0x10] sm:$0xff] %v2067
    %2077 = vst [vmem:[%s2073 + $0x18] sm:$0xff] %v2069
    %s2078 = scalar_lea.vmem [#allocation2], 192
    %v2079 = vld [vmem:[%s2078] sm:$0xff]
    %v2080 = vld [vmem:[%s2078 + $0x8] sm:$0xff]
    %v2081 = vld [vmem:[%s2078 + $0x10] sm:$0xff]
    %v2082 = vld [vmem:[%s2078 + $0x18] sm:$0xff]
    %2083 = vmatprep.subr.bf16.mxu0 %v658
    %2084 = vmatpush1.bf16.msra.mxu0 %v657
    %2085 = vmatprep.subr.bf16.mxu0 %v662
    %2086 = vmatpush1.bf16.msra.mxu0 %v661
    %2087 = vmatprep.subr.bf16.mxu0 %v666
    %2088 = vmatpush1.bf16.msra.mxu0 %v665
    %2089 = vmatprep.subr.bf16.mxu0 %v670
    %2090 = vmatpush1.bf16.msra.mxu0 %v669
    %2091 = vmatprep.subr.bf16.mxu0 %v674
    %2092 = vmatpush1.bf16.msra.mxu0 %v673
    %2093 = vmatprep.subr.bf16.mxu0 %v678
    %2094 = vmatpush1.bf16.msra.mxu0 %v677
    %2095 = vmatprep.subr.bf16.mxu0 %v682
    %2096 = vmatpush1.bf16.msra.mxu0 %v681
    %2097 = vmatprep.subr.bf16.mxu0 %v686
    %2098 = vmatpush1.bf16.msra.mxu0 %v685
    %2099 = vmatprep.subr.bf16.mxu0 0
    %2100 = vmatpush1.bf16.msra.mxu0 0
    %2101 = vmatprep.subr.bf16.mxu0 0
    %2102 = vmatpush1.bf16.msra.mxu0 0
    %2103 = vmatprep.subr.bf16.mxu0 0
    %2104 = vmatpush1.bf16.msra.mxu0 0
    %2105 = vmatprep.subr.bf16.mxu0 0
    %2106 = vmatpush1.bf16.msra.mxu0 0
    %2107 = vmatprep.subr.bf16.mxu0 0
    %2108 = vmatpush1.bf16.msra.mxu0 0
    %2109 = vmatprep.subr.bf16.mxu0 0
    %2110 = vmatpush1.bf16.msra.mxu0 0
    %2111 = vmatprep.subr.bf16.mxu0 0
    %2112 = vmatpush1.bf16.msra.mxu0 0
    %2113 = vmatprep.subr.bf16.mxu0 0
    %2114 = vmatpush1.bf16.msra.mxu0 0
    %2115 = vmatprep.mubr.bf16.mxu0 0
    %2116 = vmatmul.mubr.bf16.gmra.mrb[0].mxu0 %v1990
    %v2117 = vpop.f32.mrb[0].mxu0
    %v2118 = vadd.f32 0.0, %v2117
    %v2119 = vpop.f32.mrb[0].mxu0
    %v2120 = vadd.f32 0.0, %v2119
    %v2121 = vpop.f32.mrb[0].mxu0
    %v2122 = vpop.f32.mrb[0].mxu0
    %2123 = vdwg.mxu0
    %2124 = vmatprep.subr.bf16.mxu0 %v660
    %2125 = vmatpush1.bf16.msra.mxu0 %v659
    %2126 = vmatprep.subr.bf16.mxu0 %v664
    %2127 = vmatpush1.bf16.msra.mxu0 %v663
    %2128 = vmatprep.subr.bf16.mxu0 %v668
    %2129 = vmatpush1.bf16.msra.mxu0 %v667
    %2130 = vmatprep.subr.bf16.mxu0 %v672
    %2131 = vmatpush1.bf16.msra.mxu0 %v671
    %2132 = vmatprep.subr.bf16.mxu0 %v676
    %2133 = vmatpush1.bf16.msra.mxu0 %v675
    %2134 = vmatprep.subr.bf16.mxu0 %v680
    %2135 = vmatpush1.bf16.msra.mxu0 %v679
    %2136 = vmatprep.subr.bf16.mxu0 %v684
    %2137 = vmatpush1.bf16.msra.mxu0 %v683
    %2138 = vmatprep.subr.bf16.mxu0 %v688
    %2139 = vmatpush1.bf16.msra.mxu0 %v687
    %2140 = vmatprep.subr.bf16.mxu0 0
    %2141 = vmatpush1.bf16.msra.mxu0 0
    %2142 = vmatprep.subr.bf16.mxu0 0
    %2143 = vmatpush1.bf16.msra.mxu0 0
    %2144 = vmatprep.subr.bf16.mxu0 0
    %2145 = vmatpush1.bf16.msra.mxu0 0
    %2146 = vmatprep.subr.bf16.mxu0 0
    %2147 = vmatpush1.bf16.msra.mxu0 0
    %2148 = vmatprep.subr.bf16.mxu0 0
    %2149 = vmatpush1.bf16.msra.mxu0 0
    %2150 = vmatprep.subr.bf16.mxu0 0
    %2151 = vmatpush1.bf16.msra.mxu0 0
    %2152 = vmatprep.subr.bf16.mxu0 0
    %2153 = vmatpush1.bf16.msra.mxu0 0
    %2154 = vmatprep.subr.bf16.mxu0 0
    %2155 = vmatpush1.bf16.msra.mxu0 0
    %2156 = vmatprep.mubr.bf16.mxu0 0
    %2157 = vmatmul.mubr.bf16.gmra.mrb[0].mxu0 %v1990
    %v2158 = vpop.f32.mrb[0].mxu0
    %v2159 = vadd.f32 0.0, %v2158
    %v2160 = vpop.f32.mrb[0].mxu0
    %v2161 = vadd.f32 0.0, %v2160
    %v2162 = vpop.f32.mrb[0].mxu0
    %v2163 = vpop.f32.mrb[0].mxu0
    %2164 = vdwg.mxu0
    %v2165 = vadd.f32 %v2079, %v2118
    %v2166 = vadd.f32 %v2080, %v2120
    %v2167 = vadd.f32 %v2081, %v2159
    %v2168 = vadd.f32 %v2082, %v2161
    %v2169 = vmul.f32 %v2165, 0.5
    %v2170 = vmul.f32 %v2166, 0.5
    %v2171 = vmul.f32 %v2167, 0.5
    %v2172 = vtanh.pop %v2169
    %v2173 = vtanh.pop %v2170
    %v2174 = vtanh.pop %v2171
    %v2175 = vmul.f32 %v2172, 0.5
    %v2176 = vmul.f32 %v2173, 0.5
    %v2177 = vmul.f32 %v2174, 0.5
    %v2178 = vadd.f32 %v2175, 0.5
    %v2179 = vadd.f32 %v2176, 0.5
    %v2180 = vadd.f32 %v2177, 0.5
    %v2181 = vtanh.pop %v2168
    %v2182 = vmul.f32 %v2179, %v1987
    %v2183 = vmul.f32 %v2178, %v2181
    %v2184 = vadd.f32 %v2182, %v2183
    %v2185 = vtanh.pop %v2184
    %v2186 = vmul.f32 %v2180, %v2185
    %v2187 = vpack.c.bf16 %v2186, %v2186
    %2188 = vmatprep.subr.bf16.mxu0 %v944
    %2189 = vmatpush1.bf16.msra.mxu0 %v943
    %2190 = vmatprep.subr.bf16.mxu0 %v948
    %2191 = vmatpush1.bf16.msra.mxu0 %v947
    %2192 = vmatprep.subr.bf16.mxu0 %v952
    %2193 = vmatpush1.bf16.msra.mxu0 %v951
    %2194 = vmatprep.subr.bf16.mxu0 %v956
    %2195 = vmatpush1.bf16.msra.mxu0 %v955
    %2196 = vmatprep.subr.bf16.mxu0 %v960
    %2197 = vmatpush1.bf16.msra.mxu0 %v959
    %2198 = vmatprep.subr.bf16.mxu0 %v964
    %2199 = vmatpush1.bf16.msra.mxu0 %v963
    %2200 = vmatprep.subr.bf16.mxu0 %v968
    %2201 = vmatpush1.bf16.msra.mxu0 %v967
    %2202 = vmatprep.subr.bf16.mxu0 %v972
    %2203 = vmatpush1.bf16.msra.mxu0 %v971
    %2204 = vmatprep.subr.bf16.mxu0 0
    %2205 = vmatpush1.bf16.msra.mxu0 0
    %2206 = vmatprep.subr.bf16.mxu0 0
    %2207 = vmatpush1.bf16.msra.mxu0 0
    %2208 = vmatprep.subr.bf16.mxu0 0
    %2209 = vmatpush1.bf16.msra.mxu0 0
    %2210 = vmatprep.subr.bf16.mxu0 0
    %2211 = vmatpush1.bf16.msra.mxu0 0
    %2212 = vmatprep.subr.bf16.mxu0 0
    %2213 = vmatpush1.bf16.msra.mxu0 0
    %2214 = vmatprep.subr.bf16.mxu0 0
    %2215 = vmatpush1.bf16.msra.mxu0 0
    %2216 = vmatprep.subr.bf16.mxu0 0
    %2217 = vmatpush1.bf16.msra.mxu0 0
    %2218 = vmatprep.subr.bf16.mxu0 0
    %2219 = vmatpush1.bf16.msra.mxu0 0
    %2220 = vmatprep.mubr.bf16.mxu0 0
    %2221 = vmatmul.mubr.bf16.gmra.mrb[0].mxu0 %v2187
    %v2222 = vpop.f32.mrb[0].mxu0
    %v2223 = vadd.f32 %v830, %v2222
    %v2224 = vpop.f32.mrb[0].mxu0
    %v2225 = vadd.f32 %v834, %v2224
    %v2226 = vpop.f32.mrb[0].mxu0
    %v2227 = vpop.f32.mrb[0].mxu0
    %2228 = vdwg.mxu0
    %2229 = vmatprep.subr.bf16.mxu0 %v946
    %2230 = vmatpush1.bf16.msra.mxu0 %v945
    %2231 = vmatprep.subr.bf16.mxu0 %v950
    %2232 = vmatpush1.bf16.msra.mxu0 %v949
    %2233 = vmatprep.subr.bf16.mxu0 %v954
    %2234 = vmatpush1.bf16.msra.mxu0 %v953
    %2235 = vmatprep.subr.bf16.mxu0 %v958
    %2236 = vmatpush1.bf16.msra.mxu0 %v957
    %2237 = vmatprep.subr.bf16.mxu0 %v962
    %2238 = vmatpush1.bf16.msra.mxu0 %v961
    %2239 = vmatprep.subr.bf16.mxu0 %v966
    %2240 = vmatpush1.bf16.msra.mxu0 %v965
    %2241 = vmatprep.subr.bf16.mxu0 %v970
    %2242 = vmatpush1.bf16.msra.mxu0 %v969
    %2243 = vmatprep.subr.bf16.mxu0 %v974
    %2244 = vmatpush1.bf16.msra.mxu0 %v973
    %2245 = vmatprep.subr.bf16.mxu0 0
    %2246 = vmatpush1.bf16.msra.mxu0 0
    %2247 = vmatprep.subr.bf16.mxu0 0
    %2248 = vmatpush1.bf16.msra.mxu0 0
    %2249 = vmatprep.subr.bf16.mxu0 0
    %2250 = vmatpush1.bf16.msra.mxu0 0
    %2251 = vmatprep.subr.bf16.mxu0 0
    %2252 = vmatpush1.bf16.msra.mxu0 0
    %2253 = vmatprep.subr.bf16.mxu0 0
    %2254 = vmatpush1.bf16.msra.mxu0 0
    %2255 = vmatprep.subr.bf16.mxu0 0
    %2256 = vmatpush1.bf16.msra.mxu0 0
    %2257 = vmatprep.subr.bf16.mxu0 0
    %2258 = vmatpush1.bf16.msra.mxu0 0
    %2259 = vmatprep.subr.bf16.mxu0 0
    %2260 = vmatpush1.bf16.msra.mxu0 0
    %2261 = vmatprep.mubr.bf16.mxu0 0
    %2262 = vmatmul.mubr.bf16.gmra.mrb[0].mxu0 %v2187
    %v2263 = vpop.f32.mrb[0].mxu0
    %v2264 = vadd.f32 %v838, %v2263
    %v2265 = vpop.f32.mrb[0].mxu0
    %v2266 = vadd.f32 %v842, %v2265
    %v2267 = vpop.f32.mrb[0].mxu0
    %v2268 = vpop.f32.mrb[0].mxu0
    %2269 = vdwg.mxu0
    %s2270 = scalar_lea.vmem [#allocation3], 192
    %2271 = vst [vmem:[%s2270] sm:$0xff] %v2223
    %2272 = vst [vmem:[%s2270 + $0x8] sm:$0xff] %v2225
    %2273 = vst [vmem:[%s2270 + $0x10] sm:$0xff] %v2264
    %2274 = vst [vmem:[%s2270 + $0x18] sm:$0xff] %v2266
    %s2275 = scalar_lea.vmem [#allocation2], 224
    %v2276 = vld [vmem:[%s2275] sm:$0xff]
    %v2277 = vld [vmem:[%s2275 + $0x8] sm:$0xff]
    %v2278 = vld [vmem:[%s2275 + $0x10] sm:$0xff]
    %v2279 = vld [vmem:[%s2275 + $0x18] sm:$0xff]
    %2280 = vmatprep.subr.bf16.mxu0 %v658
    %2281 = vmatpush1.bf16.msra.mxu0 %v657
    %2282 = vmatprep.subr.bf16.mxu0 %v662
    %2283 = vmatpush1.bf16.msra.mxu0 %v661
    %2284 = vmatprep.subr.bf16.mxu0 %v666
    %2285 = vmatpush1.bf16.msra.mxu0 %v665
    %2286 = vmatprep.subr.bf16.mxu0 %v670
    %2287 = vmatpush1.bf16.msra.mxu0 %v669
    %2288 = vmatprep.subr.bf16.mxu0 %v674
    %2289 = vmatpush1.bf16.msra.mxu0 %v673
    %2290 = vmatprep.subr.bf16.mxu0 %v678
    %2291 = vmatpush1.bf16.msra.mxu0 %v677
    %2292 = vmatprep.subr.bf16.mxu0 %v682
    %2293 = vmatpush1.bf16.msra.mxu0 %v681
    %2294 = vmatprep.subr.bf16.mxu0 %v686
    %2295 = vmatpush1.bf16.msra.mxu0 %v685
    %2296 = vmatprep.subr.bf16.mxu0 0
    %2297 = vmatpush1.bf16.msra.mxu0 0
    %2298 = vmatprep.subr.bf16.mxu0 0
    %2299 = vmatpush1.bf16.msra.mxu0 0
    %2300 = vmatprep.subr.bf16.mxu0 0
    %2301 = vmatpush1.bf16.msra.mxu0 0
    %2302 = vmatprep.subr.bf16.mxu0 0
    %2303 = vmatpush1.bf16.msra.mxu0 0
    %2304 = vmatprep.subr.bf16.mxu0 0
    %2305 = vmatpush1.bf16.msra.mxu0 0
    %2306 = vmatprep.subr.bf16.mxu0 0
    %2307 = vmatpush1.bf16.msra.mxu0 0
    %2308 = vmatprep.subr.bf16.mxu0 0
    %2309 = vmatpush1.bf16.msra.mxu0 0
    %2310 = vmatprep.subr.bf16.mxu0 0
    %2311 = vmatpush1.bf16.msra.mxu0 0
    %2312 = vmatprep.mubr.bf16.mxu0 0
    %2313 = vmatmul.mubr.bf16.gmra.mrb[0].mxu0 %v2187
    %v2314 = vpop.f32.mrb[0].mxu0
    %v2315 = vadd.f32 0.0, %v2314
    %v2316 = vpop.f32.mrb[0].mxu0
    %v2317 = vadd.f32 0.0, %v2316
    %v2318 = vpop.f32.mrb[0].mxu0
    %v2319 = vpop.f32.mrb[0].mxu0
    %2320 = vdwg.mxu0
    %2321 = vmatprep.subr.bf16.mxu0 %v660
    %2322 = vmatpush1.bf16.msra.mxu0 %v659
    %2323 = vmatprep.subr.bf16.mxu0 %v664
    %2324 = vmatpush1.bf16.msra.mxu0 %v663
    %2325 = vmatprep.subr.bf16.mxu0 %v668
    %2326 = vmatpush1.bf16.msra.mxu0 %v667
    %2327 = vmatprep.subr.bf16.mxu0 %v672
    %2328 = vmatpush1.bf16.msra.mxu0 %v671
    %2329 = vmatprep.subr.bf16.mxu0 %v676
    %2330 = vmatpush1.bf16.msra.mxu0 %v675
    %2331 = vmatprep.subr.bf16.mxu0 %v680
    %2332 = vmatpush1.bf16.msra.mxu0 %v679
    %2333 = vmatprep.subr.bf16.mxu0 %v684
    %2334 = vmatpush1.bf16.msra.mxu0 %v683
    %2335 = vmatprep.subr.bf16.mxu0 %v688
    %2336 = vmatpush1.bf16.msra.mxu0 %v687
    %2337 = vmatprep.subr.bf16.mxu0 0
    %2338 = vmatpush1.bf16.msra.mxu0 0
    %2339 = vmatprep.subr.bf16.mxu0 0
    %2340 = vmatpush1.bf16.msra.mxu0 0
    %2341 = vmatprep.subr.bf16.mxu0 0
    %2342 = vmatpush1.bf16.msra.mxu0 0
    %2343 = vmatprep.subr.bf16.mxu0 0
    %2344 = vmatpush1.bf16.msra.mxu0 0
    %2345 = vmatprep.subr.bf16.mxu0 0
    %2346 = vmatpush1.bf16.msra.mxu0 0
    %2347 = vmatprep.subr.bf16.mxu0 0
    %2348 = vmatpush1.bf16.msra.mxu0 0
    %2349 = vmatprep.subr.bf16.mxu0 0
    %2350 = vmatpush1.bf16.msra.mxu0 0
    %2351 = vmatprep.subr.bf16.mxu0 0
    %2352 = vmatpush1.bf16.msra.mxu0 0
    %2353 = vmatprep.mubr.bf16.mxu0 0
    %2354 = vmatmul.mubr.bf16.gmra.mrb[0].mxu0 %v2187
    %v2355 = vpop.f32.mrb[0].mxu0
    %v2356 = vadd.f32 0.0, %v2355
    %v2357 = vpop.f32.mrb[0].mxu0
    %v2358 = vadd.f32 0.0, %v2357
    %v2359 = vpop.f32.mrb[0].mxu0
    %v2360 = vpop.f32.mrb[0].mxu0
    %2361 = vdwg.mxu0
    %v2362 = vadd.f32 %v2276, %v2315
    %v2363 = vadd.f32 %v2277, %v2317
    %v2364 = vadd.f32 %v2278, %v2356
    %v2365 = vadd.f32 %v2279, %v2358
    %v2366 = vmul.f32 %v2362, 0.5
    %v2367 = vmul.f32 %v2363, 0.5
    %v2368 = vmul.f32 %v2364, 0.5
    %v2369 = vtanh.pop %v2366
    %v2370 = vtanh.pop %v2367
    %v2371 = vtanh.pop %v2368
    %v2372 = vmul.f32 %v2369, 0.5
    %v2373 = vmul.f32 %v2370, 0.5
    %v2374 = vmul.f32 %v2371, 0.5
    %v2375 = vadd.f32 %v2372, 0.5
    %v2376 = vadd.f32 %v2373, 0.5
    %v2377 = vadd.f32 %v2374, 0.5
    %v2378 = vtanh.pop %v2365
    %v2379 = vmul.f32 %v2376, %v2184
    %v2380 = vmul.f32 %v2375, %v2378
    %v2381 = vadd.f32 %v2379, %v2380
    %v2382 = vtanh.pop %v2381
    %v2383 = vmul.f32 %v2377, %v2382
    %v2384 = vpack.c.bf16 %v2383, %v2383
    %2385 = vmatprep.subr.bf16.mxu0 %v944
    %2386 = vmatpush1.bf16.msra.mxu0 %v943
    %2387 = vmatprep.subr.bf16.mxu0 %v948
    %2388 = vmatpush1.bf16.msra.mxu0 %v947
    %2389 = vmatprep.subr.bf16.mxu0 %v952
    %2390 = vmatpush1.bf16.msra.mxu0 %v951
    %2391 = vmatprep.subr.bf16.mxu0 %v956
    %2392 = vmatpush1.bf16.msra.mxu0 %v955
    %2393 = vmatprep.subr.bf16.mxu0 %v960
    %2394 = vmatpush1.bf16.msra.mxu0 %v959
    %2395 = vmatprep.subr.bf16.mxu0 %v964
    %2396 = vmatpush1.bf16.msra.mxu0 %v963
    %2397 = vmatprep.subr.bf16.mxu0 %v968
    %2398 = vmatpush1.bf16.msra.mxu0 %v967
    %2399 = vmatprep.subr.bf16.mxu0 %v972
    %2400 = vmatpush1.bf16.msra.mxu0 %v971
    %2401 = vmatprep.subr.bf16.mxu0 0
    %2402 = vmatpush1.bf16.msra.mxu0 0
    %2403 = vmatprep.subr.bf16.mxu0 0
    %2404 = vmatpush1.bf16.msra.mxu0 0
    %2405 = vmatprep.subr.bf16.mxu0 0
    %2406 = vmatpush1.bf16.msra.mxu0 0
    %2407 = vmatprep.subr.bf16.mxu0 0
    %2408 = vmatpush1.bf16.msra.mxu0 0
    %2409 = vmatprep.subr.bf16.mxu0 0
    %2410 = vmatpush1.bf16.msra.mxu0 0
    %2411 = vmatprep.subr.bf16.mxu0 0
    %2412 = vmatpush1.bf16.msra.mxu0 0
    %2413 = vmatprep.subr.bf16.mxu0 0
    %2414 = vmatpush1.bf16.msra.mxu0 0
    %2415 = vmatprep.subr.bf16.mxu0 0
    %2416 = vmatpush1.bf16.msra.mxu0 0
    %2417 = vmatprep.mubr.bf16.mxu0 0
    %2418 = vmatmul.mubr.bf16.gmra.mrb[0].mxu0 %v2384
    %v2419 = vpop.f32.mrb[0].mxu0
    %v2420 = vadd.f32 %v830, %v2419
    %v2421 = vpop.f32.mrb[0].mxu0
    %v2422 = vadd.f32 %v834, %v2421
    %v2423 = vpop.f32.mrb[0].mxu0
    %v2424 = vpop.f32.mrb[0].mxu0
    %2425 = vdwg.mxu0
    %2426 = vmatprep.subr.bf16.mxu0 %v946
    %2427 = vmatpush1.bf16.msra.mxu0 %v945
    %2428 = vmatprep.subr.bf16.mxu0 %v950
    %2429 = vmatpush1.bf16.msra.mxu0 %v949
    %2430 = vmatprep.subr.bf16.mxu0 %v954
    %2431 = vmatpush1.bf16.msra.mxu0 %v953
    %2432 = vmatprep.subr.bf16.mxu0 %v958
    %2433 = vmatpush1.bf16.msra.mxu0 %v957
    %2434 = vmatprep.subr.bf16.mxu0 %v962
    %2435 = vmatpush1.bf16.msra.mxu0 %v961
    %2436 = vmatprep.subr.bf16.mxu0 %v966
    %2437 = vmatpush1.bf16.msra.mxu0 %v965
    %2438 = vmatprep.subr.bf16.mxu0 %v970
    %2439 = vmatpush1.bf16.msra.mxu0 %v969
    %2440 = vmatprep.subr.bf16.mxu0 %v974
    %2441 = vmatpush1.bf16.msra.mxu0 %v973
    %2442 = vmatprep.subr.bf16.mxu0 0
    %2443 = vmatpush1.bf16.msra.mxu0 0
    %2444 = vmatprep.subr.bf16.mxu0 0
    %2445 = vmatpush1.bf16.msra.mxu0 0
    %2446 = vmatprep.subr.bf16.mxu0 0
    %2447 = vmatpush1.bf16.msra.mxu0 0
    %2448 = vmatprep.subr.bf16.mxu0 0
    %2449 = vmatpush1.bf16.msra.mxu0 0
    %2450 = vmatprep.subr.bf16.mxu0 0
    %2451 = vmatpush1.bf16.msra.mxu0 0
    %2452 = vmatprep.subr.bf16.mxu0 0
    %2453 = vmatpush1.bf16.msra.mxu0 0
    %2454 = vmatprep.subr.bf16.mxu0 0
    %2455 = vmatpush1.bf16.msra.mxu0 0
    %2456 = vmatprep.subr.bf16.mxu0 0
    %2457 = vmatpush1.bf16.msra.mxu0 0
    %2458 = vmatprep.mubr.bf16.mxu0 0
    %2459 = vmatmul.mubr.bf16.gmra.mrb[0].mxu0 %v2384
    %v2460 = vpop.f32.mrb[0].mxu0
    %v2461 = vadd.f32 %v838, %v2460
    %v2462 = vpop.f32.mrb[0].mxu0
    %v2463 = vadd.f32 %v842, %v2462
    %v2464 = vpop.f32.mrb[0].mxu0
    %v2465 = vpop.f32.mrb[0].mxu0
    %2466 = vdwg.mxu0
    %s2467 = scalar_lea.vmem [#allocation3], 224
    %2468 = vst [vmem:[%s2467] sm:$0xff] %v2420
    %2469 = vst [vmem:[%s2467 + $0x8] sm:$0xff] %v2422
    %2470 = vst [vmem:[%s2467 + $0x10] sm:$0xff] %v2461
    %2471 = vst [vmem:[%s2467 + $0x18] sm:$0xff] %v2463
    %v2472 = vld [vmem:[#allocation9] sm:$0xff]
    %v2473 = vld [vmem:[#allocation9 + $0x8] sm:$0xff]
    %v2474 = vld [vmem:[#allocation9 + $0x10] sm:$0xff]
    %v2475 = vld [vmem:[#allocation9 + $0x18] sm:$0xff]
    %v2476 = vld [vmem:[#allocation9 + $0x20] sm:$0xff]
    %v2477 = vld [vmem:[#allocation9 + $0x28] sm:$0xff]
    %v2478 = vld [vmem:[#allocation9 + $0x30] sm:$0xff]
    %v2479 = vld [vmem:[#allocation9 + $0x38] sm:$0xff]
    %v2480 = vld [vmem:[#allocation9 + $0x40] sm:$0xff]
    %v2481 = vld [vmem:[#allocation9 + $0x48] sm:$0xff]
    %v2482 = vld [vmem:[#allocation9 + $0x50] sm:$0xff]
    %v2483 = vld [vmem:[#allocation9 + $0x58] sm:$0xff]
    %v2484 = vld [vmem:[#allocation9 + $0x60] sm:$0xff]
    %v2485 = vld [vmem:[#allocation9 + $0x68] sm:$0xff]
    %v2486 = vld [vmem:[#allocation9 + $0x70] sm:$0xff]
    %v2487 = vld [vmem:[#allocation9 + $0x78] sm:$0xff]
    %v2488 = vld [vmem:[#allocation9 + $0x80] sm:$0xff]
    %v2489 = vld [vmem:[#allocation9 + $0x88] sm:$0xff]
    %v2490 = vld [vmem:[#allocation9 + $0x90] sm:$0xff]
    %v2491 = vld [vmem:[#allocation9 + $0x98] sm:$0xff]
    %v2492 = vld [vmem:[#allocation9 + $0xa0] sm:$0xff]
    %v2493 = vld [vmem:[#allocation9 + $0xa8] sm:$0xff]
    %v2494 = vld [vmem:[#allocation9 + $0xb0] sm:$0xff]
    %v2495 = vld [vmem:[#allocation9 + $0xb8] sm:$0xff]
    %v2496 = vld [vmem:[#allocation9 + $0xc0] sm:$0xff]
    %v2497 = vld [vmem:[#allocation9 + $0xc8] sm:$0xff]
    %v2498 = vld [vmem:[#allocation9 + $0xd0] sm:$0xff]
    %v2499 = vld [vmem:[#allocation9 + $0xd8] sm:$0xff]
    %v2500 = vld [vmem:[#allocation9 + $0xe0] sm:$0xff]
    %v2501 = vld [vmem:[#allocation9 + $0xe8] sm:$0xff]
    %v2502 = vld [vmem:[#allocation9 + $0xf0] sm:$0xff]
    %v2503 = vld [vmem:[#allocation9 + $0xf8] sm:$0xff]
    %v2504 = vld [vmem:[#allocation3] sm:$0xff]
    %v2505 = vld [vmem:[#allocation3 + $0x8] sm:$0xff]
    %v2506 = vld [vmem:[#allocation3 + $0x10] sm:$0xff]
    %v2507 = vld [vmem:[#allocation3 + $0x18] sm:$0xff]
    %v2540 = vunpack.c.l.b16 %v2472
    %v2541 = vunpack.c.h.b16 %v2472
    %v2542 = vunpack.c.l.b16 %v2473
    %v2543 = vunpack.c.h.b16 %v2473
    %v2544 = vunpack.c.l.b16 %v2474
    %v2545 = vunpack.c.h.b16 %v2474
    %v2546 = vunpack.c.l.b16 %v2475
    %v2547 = vunpack.c.h.b16 %v2475
    %v2548 = vunpack.c.l.b16 %v2476
    %v2549 = vunpack.c.h.b16 %v2476
    %v2550 = vunpack.c.l.b16 %v2477
    %v2551 = vunpack.c.h.b16 %v2477
    %v2552 = vunpack.c.l.b16 %v2478
    %v2553 = vunpack.c.h.b16 %v2478
    %v2554 = vunpack.c.l.b16 %v2479
    %v2555 = vunpack.c.h.b16 %v2479
    %v2556 = vunpack.c.l.b16 %v2480
    %v2557 = vunpack.c.h.b16 %v2480
    %v2558 = vunpack.c.l.b16 %v2481
    %v2559 = vunpack.c.h.b16 %v2481
    %v2560 = vunpack.c.l.b16 %v2482
    %v2561 = vunpack.c.h.b16 %v2482
    %v2562 = vunpack.c.l.b16 %v2483
    %v2563 = vunpack.c.h.b16 %v2483
    %v2564 = vunpack.c.l.b16 %v2484
    %v2565 = vunpack.c.h.b16 %v2484
    %v2566 = vunpack.c.l.b16 %v2485
    %v2567 = vunpack.c.h.b16 %v2485
    %v2568 = vunpack.c.l.b16 %v2486
    %v2569 = vunpack.c.h.b16 %v2486
    %v2570 = vunpack.c.l.b16 %v2487
    %v2571 = vunpack.c.h.b16 %v2487
    %v2572 = vunpack.c.l.b16 %v2488
    %v2573 = vunpack.c.h.b16 %v2488
    %v2574 = vunpack.c.l.b16 %v2489
    %v2575 = vunpack.c.h.b16 %v2489
    %v2576 = vunpack.c.l.b16 %v2490
    %v2577 = vunpack.c.h.b16 %v2490
    %v2578 = vunpack.c.l.b16 %v2491
    %v2579 = vunpack.c.h.b16 %v2491
    %v2580 = vunpack.c.l.b16 %v2492
    %v2581 = vunpack.c.h.b16 %v2492
    %v2582 = vunpack.c.l.b16 %v2493
    %v2583 = vunpack.c.h.b16 %v2493
    %v2584 = vunpack.c.l.b16 %v2494
    %v2585 = vunpack.c.h.b16 %v2494
    %v2586 = vunpack.c.l.b16 %v2495
    %v2587 = vunpack.c.h.b16 %v2495
    %v2588 = vunpack.c.l.b16 %v2496
    %v2589 = vunpack.c.h.b16 %v2496
    %v2590 = vunpack.c.l.b16 %v2497
    %v2591 = vunpack.c.h.b16 %v2497
    %v2592 = vunpack.c.l.b16 %v2498
    %v2593 = vunpack.c.h.b16 %v2498
    %v2594 = vunpack.c.l.b16 %v2499
    %v2595 = vunpack.c.h.b16 %v2499
    %v2596 = vunpack.c.l.b16 %v2500
    %v2597 = vunpack.c.h.b16 %v2500
    %v2598 = vunpack.c.l.b16 %v2501
    %v2599 = vunpack.c.h.b16 %v2501
    %v2600 = vunpack.c.l.b16 %v2502
    %v2601 = vunpack.c.h.b16 %v2502
    %v2602 = vunpack.c.l.b16 %v2503
    %v2603 = vunpack.c.h.b16 %v2503
    %v2604 = vpack.c.b16 %v2544, %v2540
    %v2605 = vpack.c.b16 %v2545, %v2541
    %v2606 = vpack.c.b16 %v2546, %v2542
    %v2607 = vpack.c.b16 %v2547, %v2543
    %v2608 = vpack.c.b16 %v2552, %v2548
    %v2609 = vpack.c.b16 %v2553, %v2549
    %v2610 = vpack.c.b16 %v2554, %v2550
    %v2611 = vpack.c.b16 %v2555, %v2551
    %v2612 = vpack.c.b16 %v2560, %v2556
    %v2613 = vpack.c.b16 %v2561, %v2557
    %v2614 = vpack.c.b16 %v2562, %v2558
    %v2615 = vpack.c.b16 %v2563, %v2559
    %v2616 = vpack.c.b16 %v2568, %v2564
    %v2617 = vpack.c.b16 %v2569, %v2565
    %v2618 = vpack.c.b16 %v2570, %v2566
    %v2619 = vpack.c.b16 %v2571, %v2567
    %v2620 = vpack.c.b16 %v2576, %v2572
    %v2621 = vpack.c.b16 %v2577, %v2573
    %v2622 = vpack.c.b16 %v2578, %v2574
    %v2623 = vpack.c.b16 %v2579, %v2575
    %v2624 = vpack.c.b16 %v2584, %v2580
    %v2625 = vpack.c.b16 %v2585, %v2581
    %v2626 = vpack.c.b16 %v2586, %v2582
    %v2627 = vpack.c.b16 %v2587, %v2583
    %v2628 = vpack.c.b16 %v2592, %v2588
    %v2629 = vpack.c.b16 %v2593, %v2589
    %v2630 = vpack.c.b16 %v2594, %v2590
    %v2631 = vpack.c.b16 %v2595, %v2591
    %v2632 = vpack.c.b16 %v2600, %v2596
    %v2633 = vpack.c.b16 %v2601, %v2597
    %v2634 = vpack.c.b16 %v2602, %v2598
    %v2635 = vpack.c.b16 %v2603, %v2599
    %2668 = vmatprep.subr.bf16.mxu0 %v2605
    %2669 = vmatpush1.bf16.msra.mxu0 %v2604
    %2670 = vmatprep.subr.bf16.mxu0 %v2609
    %2671 = vmatpush1.bf16.msra.mxu0 %v2608
    %2672 = vmatprep.subr.bf16.mxu0 %v2613
    %2673 = vmatpush1.bf16.msra.mxu0 %v2612
    %2674 = vmatprep.subr.bf16.mxu0 %v2617
    %2675 = vmatpush1.bf16.msra.mxu0 %v2616
    %2676 = vmatprep.subr.bf16.mxu0 %v2621
    %2677 = vmatpush1.bf16.msra.mxu0 %v2620
    %2678 = vmatprep.subr.bf16.mxu0 %v2625
    %2679 = vmatpush1.bf16.msra.mxu0 %v2624
    %2680 = vmatprep.subr.bf16.mxu0 %v2629
    %2681 = vmatpush1.bf16.msra.mxu0 %v2628
    %2682 = vmatprep.subr.bf16.mxu0 %v2633
    %2683 = vmatpush1.bf16.msra.mxu0 %v2632
    %2684 = vmatprep.subr.bf16.mxu0 0
    %2685 = vmatpush1.bf16.msra.mxu0 0
    %2686 = vmatprep.subr.bf16.mxu0 0
    %2687 = vmatpush1.bf16.msra.mxu0 0
    %2688 = vmatprep.subr.bf16.mxu0 0
    %2689 = vmatpush1.bf16.msra.mxu0 0
    %2690 = vmatprep.subr.bf16.mxu0 0
    %2691 = vmatpush1.bf16.msra.mxu0 0
    %2692 = vmatprep.subr.bf16.mxu0 0
    %2693 = vmatpush1.bf16.msra.mxu0 0
    %2694 = vmatprep.subr.bf16.mxu0 0
    %2695 = vmatpush1.bf16.msra.mxu0 0
    %2696 = vmatprep.subr.bf16.mxu0 0
    %2697 = vmatpush1.bf16.msra.mxu0 0
    %2698 = vmatprep.subr.bf16.mxu0 0
    %2699 = vmatpush1.bf16.msra.mxu0 0
    %2700 = vmatprep.mubr.bf16.mxu0 0
    %2701 = vmatmul.mubr.bf16.gmra.mrb[0].mxu0 0
    %v2702 = vpop.f32.mrb[0].mxu0
    %v2703 = vadd.f32 0.0, %v2702
    %v2704 = vpop.f32.mrb[0].mxu0
    %v2705 = vadd.f32 0.0, %v2704
    %v2706 = vpop.f32.mrb[0].mxu0
    %v2707 = vpop.f32.mrb[0].mxu0
    %2708 = vdwg.mxu0
    %2709 = vmatprep.subr.bf16.mxu0 %v2607
    %2710 = vmatpush1.bf16.msra.mxu0 %v2606
    %2711 = vmatprep.subr.bf16.mxu0 %v2611
    %2712 = vmatpush1.bf16.msra.mxu0 %v2610
    %2713 = vmatprep.subr.bf16.mxu0 %v2615
    %2714 = vmatpush1.bf16.msra.mxu0 %v2614
    %2715 = vmatprep.subr.bf16.mxu0 %v2619
    %2716 = vmatpush1.bf16.msra.mxu0 %v2618
    %2717 = vmatprep.subr.bf16.mxu0 %v2623
    %2718 = vmatpush1.bf16.msra.mxu0 %v2622
    %2719 = vmatprep.subr.bf16.mxu0 %v2627
    %2720 = vmatpush1.bf16.msra.mxu0 %v2626
    %2721 = vmatprep.subr.bf16.mxu0 %v2631
    %2722 = vmatpush1.bf16.msra.mxu0 %v2630
    %2723 = vmatprep.subr.bf16.mxu0 %v2635
    %2724 = vmatpush1.bf16.msra.mxu0 %v2634
    %2725 = vmatprep.subr.bf16.mxu0 0
    %2726 = vmatpush1.bf16.msra.mxu0 0
    %2727 = vmatprep.subr.bf16.mxu0 0
    %2728 = vmatpush1.bf16.msra.mxu0 0
    %2729 = vmatprep.subr.bf16.mxu0 0
    %2730 = vmatpush1.bf16.msra.mxu0 0
    %2731 = vmatprep.subr.bf16.mxu0 0
    %2732 = vmatpush1.bf16.msra.mxu0 0
    %2733 = vmatprep.subr.bf16.mxu0 0
    %2734 = vmatpush1.bf16.msra.mxu0 0
    %2735 = vmatprep.subr.bf16.mxu0 0
    %2736 = vmatpush1.bf16.msra.mxu0 0
    %2737 = vmatprep.subr.bf16.mxu0 0
    %2738 = vmatpush1.bf16.msra.mxu0 0
    %2739 = vmatprep.subr.bf16.mxu0 0
    %2740 = vmatpush1.bf16.msra.mxu0 0
    %2741 = vmatprep.mubr.bf16.mxu0 0
    %2742 = vmatmul.mubr.bf16.gmra.mrb[0].mxu0 0
    %v2743 = vpop.f32.mrb[0].mxu0
    %v2744 = vadd.f32 0.0, %v2743
    %v2745 = vpop.f32.mrb[0].mxu0
    %v2746 = vadd.f32 0.0, %v2745
    %v2747 = vpop.f32.mrb[0].mxu0
    %v2748 = vpop.f32.mrb[0].mxu0
    %2749 = vdwg.mxu0
    %v2750 = vadd.f32 %v2504, %v2703
    %v2751 = vadd.f32 %v2505, %v2705
    %v2752 = vadd.f32 %v2506, %v2744
    %v2753 = vadd.f32 %v2507, %v2746
    %v2754 = vmul.f32 %v2750, 0.5
    %v2755 = vmul.f32 %v2751, 0.5
    %v2756 = vmul.f32 %v2752, 0.5
    %v2757 = vtanh.pop %v2754
    %v2758 = vtanh.pop %v2755
    %v2759 = vtanh.pop %v2756
    %v2760 = vmul.f32 %v2757, 0.5
    %v2761 = vmul.f32 %v2758, 0.5
    %v2762 = vmul.f32 %v2759, 0.5
    %v2763 = vadd.f32 %v2760, 0.5
    %v2764 = vadd.f32 %v2761, 0.5
    %v2765 = vadd.f32 %v2762, 0.5
    %v2766 = vtanh.pop %v2753
    %v2767 = vmul.f32 %v2764, 0.0
    %v2768 = vmul.f32 %v2763, %v2766
    %v2769 = vadd.f32 %v2767, %v2768
    %v2770 = vtanh.pop %v2769
    %v2771 = vmul.f32 %v2765, %v2770
    %v2772 = vpack.c.bf16 %v2771, %v2771
    %v2773 = vld [vmem:[%s1285] sm:$0xff]
    %v2774 = vld [vmem:[%s1285 + $0x8] sm:$0xff]
    %v2775 = vld [vmem:[%s1285 + $0x10] sm:$0xff]
    %v2776 = vld [vmem:[%s1285 + $0x18] sm:$0xff]
    %2777 = vmatprep.subr.bf16.mxu0 %v2605
    %2778 = vmatpush1.bf16.msra.mxu0 %v2604
    %2779 = vmatprep.subr.bf16.mxu0 %v2609
    %2780 = vmatpush1.bf16.msra.mxu0 %v2608
    %2781 = vmatprep.subr.bf16.mxu0 %v2613
    %2782 = vmatpush1.bf16.msra.mxu0 %v2612
    %2783 = vmatprep.subr.bf16.mxu0 %v2617
    %2784 = vmatpush1.bf16.msra.mxu0 %v2616
    %2785 = vmatprep.subr.bf16.mxu0 %v2621
    %2786 = vmatpush1.bf16.msra.mxu0 %v2620
    %2787 = vmatprep.subr.bf16.mxu0 %v2625
    %2788 = vmatpush1.bf16.msra.mxu0 %v2624
    %2789 = vmatprep.subr.bf16.mxu0 %v2629
    %2790 = vmatpush1.bf16.msra.mxu0 %v2628
    %2791 = vmatprep.subr.bf16.mxu0 %v2633
    %2792 = vmatpush1.bf16.msra.mxu0 %v2632
    %2793 = vmatprep.subr.bf16.mxu0 0
    %2794 = vmatpush1.bf16.msra.mxu0 0
    %2795 = vmatprep.subr.bf16.mxu0 0
    %2796 = vmatpush1.bf16.msra.mxu0 0
    %2797 = vmatprep.subr.bf16.mxu0 0
    %2798 = vmatpush1.bf16.msra.mxu0 0
    %2799 = vmatprep.subr.bf16.mxu0 0
    %2800 = vmatpush1.bf16.msra.mxu0 0
    %2801 = vmatprep.subr.bf16.mxu0 0
    %2802 = vmatpush1.bf16.msra.mxu0 0
    %2803 = vmatprep.subr.bf16.mxu0 0
    %2804 = vmatpush1.bf16.msra.mxu0 0
    %2805 = vmatprep.subr.bf16.mxu0 0
    %2806 = vmatpush1.bf16.msra.mxu0 0
    %2807 = vmatprep.subr.bf16.mxu0 0
    %2808 = vmatpush1.bf16.msra.mxu0 0
    %2809 = vmatprep.mubr.bf16.mxu0 0
    %2810 = vmatmul.mubr.bf16.gmra.mrb[0].mxu0 %v2772
    %v2811 = vpop.f32.mrb[0].mxu0
    %v2812 = vadd.f32 0.0, %v2811
    %v2813 = vpop.f32.mrb[0].mxu0
    %v2814 = vadd.f32 0.0, %v2813
    %v2815 = vpop.f32.mrb[0].mxu0
    %v2816 = vpop.f32.mrb[0].mxu0
    %2817 = vdwg.mxu0
    %2818 = vmatprep.subr.bf16.mxu0 %v2607
    %2819 = vmatpush1.bf16.msra.mxu0 %v2606
    %2820 = vmatprep.subr.bf16.mxu0 %v2611
    %2821 = vmatpush1.bf16.msra.mxu0 %v2610
    %2822 = vmatprep.subr.bf16.mxu0 %v2615
    %2823 = vmatpush1.bf16.msra.mxu0 %v2614
    %2824 = vmatprep.subr.bf16.mxu0 %v2619
    %2825 = vmatpush1.bf16.msra.mxu0 %v2618
    %2826 = vmatprep.subr.bf16.mxu0 %v2623
    %2827 = vmatpush1.bf16.msra.mxu0 %v2622
    %2828 = vmatprep.subr.bf16.mxu0 %v2627
    %2829 = vmatpush1.bf16.msra.mxu0 %v2626
    %2830 = vmatprep.subr.bf16.mxu0 %v2631
    %2831 = vmatpush1.bf16.msra.mxu0 %v2630
    %2832 = vmatprep.subr.bf16.mxu0 %v2635
    %2833 = vmatpush1.bf16.msra.mxu0 %v2634
    %2834 = vmatprep.subr.bf16.mxu0 0
    %2835 = vmatpush1.bf16.msra.mxu0 0
    %2836 = vmatprep.subr.bf16.mxu0 0
    %2837 = vmatpush1.bf16.msra.mxu0 0
    %2838 = vmatprep.subr.bf16.mxu0 0
    %2839 = vmatpush1.bf16.msra.mxu0 0
    %2840 = vmatprep.subr.bf16.mxu0 0
    %2841 = vmatpush1.bf16.msra.mxu0 0
    %2842 = vmatprep.subr.bf16.mxu0 0
    %2843 = vmatpush1.bf16.msra.mxu0 0
    %2844 = vmatprep.subr.bf16.mxu0 0
    %2845 = vmatpush1.bf16.msra.mxu0 0
    %2846 = vmatprep.subr.bf16.mxu0 0
    %2847 = vmatpush1.bf16.msra.mxu0 0
    %2848 = vmatprep.subr.bf16.mxu0 0
    %2849 = vmatpush1.bf16.msra.mxu0 0
    %2850 = vmatprep.mubr.bf16.mxu0 0
    %2851 = vmatmul.mubr.bf16.gmra.mrb[0].mxu0 %v2772
    %v2852 = vpop.f32.mrb[0].mxu0
    %v2853 = vadd.f32 0.0, %v2852
    %v2854 = vpop.f32.mrb[0].mxu0
    %v2855 = vadd.f32 0.0, %v2854
    %v2856 = vpop.f32.mrb[0].mxu0
    %v2857 = vpop.f32.mrb[0].mxu0
    %2858 = vdwg.mxu0
    %v2859 = vadd.f32 %v2773, %v2812
    %v2860 = vadd.f32 %v2774, %v2814
    %v2861 = vadd.f32 %v2775, %v2853
    %v2862 = vadd.f32 %v2776, %v2855
    %v2863 = vmul.f32 %v2859, 0.5
    %v2864 = vmul.f32 %v2860, 0.5
    %v2865 = vmul.f32 %v2861, 0.5
    %v2866 = vtanh.pop %v2863
    %v2867 = vtanh.pop %v2864
    %v2868 = vtanh.pop %v2865
    %v2869 = vmul.f32 %v2866, 0.5
    %v2870 = vmul.f32 %v2867, 0.5
    %v2871 = vmul.f32 %v2868, 0.5
    %v2872 = vadd.f32 %v2869, 0.5
    %v2873 = vadd.f32 %v2870, 0.5
    %v2874 = vadd.f32 %v2871, 0.5
    %v2875 = vtanh.pop %v2862
    %v2876 = vmul.f32 %v2873, %v2769
    %v2877 = vmul.f32 %v2872, %v2875
    %v2878 = vadd.f32 %v2876, %v2877
    %v2879 = vtanh.pop %v2878
    %v2880 = vmul.f32 %v2874, %v2879
    %v2881 = vpack.c.bf16 %v2880, %v2880
    %v2882 = vld [vmem:[%s1482] sm:$0xff]
    %v2883 = vld [vmem:[%s1482 + $0x8] sm:$0xff]
    %v2884 = vld [vmem:[%s1482 + $0x10] sm:$0xff]
    %v2885 = vld [vmem:[%s1482 + $0x18] sm:$0xff]
    %2886 = vmatprep.subr.bf16.mxu0 %v2605
    %2887 = vmatpush1.bf16.msra.mxu0 %v2604
    %2888 = vmatprep.subr.bf16.mxu0 %v2609
    %2889 = vmatpush1.bf16.msra.mxu0 %v2608
    %2890 = vmatprep.subr.bf16.mxu0 %v2613
    %2891 = vmatpush1.bf16.msra.mxu0 %v2612
    %2892 = vmatprep.subr.bf16.mxu0 %v2617
    %2893 = vmatpush1.bf16.msra.mxu0 %v2616
    %2894 = vmatprep.subr.bf16.mxu0 %v2621
    %2895 = vmatpush1.bf16.msra.mxu0 %v2620
    %2896 = vmatprep.subr.bf16.mxu0 %v2625
    %2897 = vmatpush1.bf16.msra.mxu0 %v2624
    %2898 = vmatprep.subr.bf16.mxu0 %v2629
    %2899 = vmatpush1.bf16.msra.mxu0 %v2628
    %2900 = vmatprep.subr.bf16.mxu0 %v2633
    %2901 = vmatpush1.bf16.msra.mxu0 %v2632
    %2902 = vmatprep.subr.bf16.mxu0 0
    %2903 = vmatpush1.bf16.msra.mxu0 0
    %2904 = vmatprep.subr.bf16.mxu0 0
    %2905 = vmatpush1.bf16.msra.mxu0 0
    %2906 = vmatprep.subr.bf16.mxu0 0
    %2907 = vmatpush1.bf16.msra.mxu0 0
    %2908 = vmatprep.subr.bf16.mxu0 0
    %2909 = vmatpush1.bf16.msra.mxu0 0
    %2910 = vmatprep.subr.bf16.mxu0 0
    %2911 = vmatpush1.bf16.msra.mxu0 0
    %2912 = vmatprep.subr.bf16.mxu0 0
    %2913 = vmatpush1.bf16.msra.mxu0 0
    %2914 = vmatprep.subr.bf16.mxu0 0
    %2915 = vmatpush1.bf16.msra.mxu0 0
    %2916 = vmatprep.subr.bf16.mxu0 0
    %2917 = vmatpush1.bf16.msra.mxu0 0
    %2918 = vmatprep.mubr.bf16.mxu0 0
    %2919 = vmatmul.mubr.bf16.gmra.mrb[0].mxu0 %v2881
    %v2920 = vpop.f32.mrb[0].mxu0
    %v2921 = vadd.f32 0.0, %v2920
    %v2922 = vpop.f32.mrb[0].mxu0
    %v2923 = vadd.f32 0.0, %v2922
    %v2924 = vpop.f32.mrb[0].mxu0
    %v2925 = vpop.f32.mrb[0].mxu0
    %2926 = vdwg.mxu0
    %2927 = vmatprep.subr.bf16.mxu0 %v2607
    %2928 = vmatpush1.bf16.msra.mxu0 %v2606
    %2929 = vmatprep.subr.bf16.mxu0 %v2611
    %2930 = vmatpush1.bf16.msra.mxu0 %v2610
    %2931 = vmatprep.subr.bf16.mxu0 %v2615
    %2932 = vmatpush1.bf16.msra.mxu0 %v2614
    %2933 = vmatprep.subr.bf16.mxu0 %v2619
    %2934 = vmatpush1.bf16.msra.mxu0 %v2618
    %2935 = vmatprep.subr.bf16.mxu0 %v2623
    %2936 = vmatpush1.bf16.msra.mxu0 %v2622
    %2937 = vmatprep.subr.bf16.mxu0 %v2627
    %2938 = vmatpush1.bf16.msra.mxu0 %v2626
    %2939 = vmatprep.subr.bf16.mxu0 %v2631
    %2940 = vmatpush1.bf16.msra.mxu0 %v2630
    %2941 = vmatprep.subr.bf16.mxu0 %v2635
    %2942 = vmatpush1.bf16.msra.mxu0 %v2634
    %2943 = vmatprep.subr.bf16.mxu0 0
    %2944 = vmatpush1.bf16.msra.mxu0 0
    %2945 = vmatprep.subr.bf16.mxu0 0
    %2946 = vmatpush1.bf16.msra.mxu0 0
    %2947 = vmatprep.subr.bf16.mxu0 0
    %2948 = vmatpush1.bf16.msra.mxu0 0
    %2949 = vmatprep.subr.bf16.mxu0 0
    %2950 = vmatpush1.bf16.msra.mxu0 0
    %2951 = vmatprep.subr.bf16.mxu0 0
    %2952 = vmatpush1.bf16.msra.mxu0 0
    %2953 = vmatprep.subr.bf16.mxu0 0
    %2954 = vmatpush1.bf16.msra.mxu0 0
    %2955 = vmatprep.subr.bf16.mxu0 0
    %2956 = vmatpush1.bf16.msra.mxu0 0
    %2957 = vmatprep.subr.bf16.mxu0 0
    %2958 = vmatpush1.bf16.msra.mxu0 0
    %2959 = vmatprep.mubr.bf16.mxu0 0
    %2960 = vmatmul.mubr.bf16.gmra.mrb[0].mxu0 %v2881
    %v2961 = vpop.f32.mrb[0].mxu0
    %v2962 = vadd.f32 0.0, %v2961
    %v2963 = vpop.f32.mrb[0].mxu0
    %v2964 = vadd.f32 0.0, %v2963
    %v2965 = vpop.f32.mrb[0].mxu0
    %v2966 = vpop.f32.mrb[0].mxu0
    %2967 = vdwg.mxu0
    %v2968 = vadd.f32 %v2882, %v2921
    %v2969 = vadd.f32 %v2883, %v2923
    %v2970 = vadd.f32 %v2884, %v2962
    %v2971 = vadd.f32 %v2885, %v2964
    %v2972 = vmul.f32 %v2968, 0.5
    %v2973 = vmul.f32 %v2969, 0.5
    %v2974 = vmul.f32 %v2970, 0.5
    %v2975 = vtanh.pop %v2972
    %v2976 = vtanh.pop %v2973
    %v2977 = vtanh.pop %v2974
    %v2978 = vmul.f32 %v2975, 0.5
    %v2979 = vmul.f32 %v2976, 0.5
    %v2980 = vmul.f32 %v2977, 0.5
    %v2981 = vadd.f32 %v2978, 0.5
    %v2982 = vadd.f32 %v2979, 0.5
    %v2983 = vadd.f32 %v2980, 0.5
    %v2984 = vtanh.pop %v2971
    %v2985 = vmul.f32 %v2982, %v2878
    %v2986 = vmul.f32 %v2981, %v2984
    %v2987 = vadd.f32 %v2985, %v2986
    %v2988 = vtanh.pop %v2987
    %v2989 = vmul.f32 %v2983, %v2988
    %v2990 = vpack.c.bf16 %v2989, %v2989
    %v2991 = vld [vmem:[%s1679] sm:$0xff]
    %v2992 = vld [vmem:[%s1679 + $0x8] sm:$0xff]
    %v2993 = vld [vmem:[%s1679 + $0x10] sm:$0xff]
    %v2994 = vld [vmem:[%s1679 + $0x18] sm:$0xff]
    %2995 = vmatprep.subr.bf16.mxu0 %v2605
    %2996 = vmatpush1.bf16.msra.mxu0 %v2604
    %2997 = vmatprep.subr.bf16.mxu0 %v2609
    %2998 = vmatpush1.bf16.msra.mxu0 %v2608
    %2999 = vmatprep.subr.bf16.mxu0 %v2613
    %3000 = vmatpush1.bf16.msra.mxu0 %v2612
    %3001 = vmatprep.subr.bf16.mxu0 %v2617
    %3002 = vmatpush1.bf16.msra.mxu0 %v2616
    %3003 = vmatprep.subr.bf16.mxu0 %v2621
    %3004 = vmatpush1.bf16.msra.mxu0 %v2620
    %3005 = vmatprep.subr.bf16.mxu0 %v2625
    %3006 = vmatpush1.bf16.msra.mxu0 %v2624
    %3007 = vmatprep.subr.bf16.mxu0 %v2629
    %3008 = vmatpush1.bf16.msra.mxu0 %v2628
    %3009 = vmatprep.subr.bf16.mxu0 %v2633
    %3010 = vmatpush1.bf16.msra.mxu0 %v2632
    %3011 = vmatprep.subr.bf16.mxu0 0
    %3012 = vmatpush1.bf16.msra.mxu0 0
    %3013 = vmatprep.subr.bf16.mxu0 0
    %3014 = vmatpush1.bf16.msra.mxu0 0
    %3015 = vmatprep.subr.bf16.mxu0 0
    %3016 = vmatpush1.bf16.msra.mxu0 0
    %3017 = vmatprep.subr.bf16.mxu0 0
    %3018 = vmatpush1.bf16.msra.mxu0 0
    %3019 = vmatprep.subr.bf16.mxu0 0
    %3020 = vmatpush1.bf16.msra.mxu0 0
    %3021 = vmatprep.subr.bf16.mxu0 0
    %3022 = vmatpush1.bf16.msra.mxu0 0
    %3023 = vmatprep.subr.bf16.mxu0 0
    %3024 = vmatpush1.bf16.msra.mxu0 0
    %3025 = vmatprep.subr.bf16.mxu0 0
    %3026 = vmatpush1.bf16.msra.mxu0 0
    %3027 = vmatprep.mubr.bf16.mxu0 0
    %3028 = vmatmul.mubr.bf16.gmra.mrb[0].mxu0 %v2990
    %v3029 = vpop.f32.mrb[0].mxu0
    %v3030 = vadd.f32 0.0, %v3029
    %v3031 = vpop.f32.mrb[0].mxu0
    %v3032 = vadd.f32 0.0, %v3031
    %v3033 = vpop.f32.mrb[0].mxu0
    %v3034 = vpop.f32.mrb[0].mxu0
    %3035 = vdwg.mxu0
    %3036 = vmatprep.subr.bf16.mxu0 %v2607
    %3037 = vmatpush1.bf16.msra.mxu0 %v2606
    %3038 = vmatprep.subr.bf16.mxu0 %v2611
    %3039 = vmatpush1.bf16.msra.mxu0 %v2610
    %3040 = vmatprep.subr.bf16.mxu0 %v2615
    %3041 = vmatpush1.bf16.msra.mxu0 %v2614
    %3042 = vmatprep.subr.bf16.mxu0 %v2619
    %3043 = vmatpush1.bf16.msra.mxu0 %v2618
    %3044 = vmatprep.subr.bf16.mxu0 %v2623
    %3045 = vmatpush1.bf16.msra.mxu0 %v2622
    %3046 = vmatprep.subr.bf16.mxu0 %v2627
    %3047 = vmatpush1.bf16.msra.mxu0 %v2626
    %3048 = vmatprep.subr.bf16.mxu0 %v2631
    %3049 = vmatpush1.bf16.msra.mxu0 %v2630
    %3050 = vmatprep.subr.bf16.mxu0 %v2635
    %3051 = vmatpush1.bf16.msra.mxu0 %v2634
    %3052 = vmatprep.subr.bf16.mxu0 0
    %3053 = vmatpush1.bf16.msra.mxu0 0
    %3054 = vmatprep.subr.bf16.mxu0 0
    %3055 = vmatpush1.bf16.msra.mxu0 0
    %3056 = vmatprep.subr.bf16.mxu0 0
    %3057 = vmatpush1.bf16.msra.mxu0 0
    %3058 = vmatprep.subr.bf16.mxu0 0
    %3059 = vmatpush1.bf16.msra.mxu0 0
    %3060 = vmatprep.subr.bf16.mxu0 0
    %3061 = vmatpush1.bf16.msra.mxu0 0
    %3062 = vmatprep.subr.bf16.mxu0 0
    %3063 = vmatpush1.bf16.msra.mxu0 0
    %3064 = vmatprep.subr.bf16.mxu0 0
    %3065 = vmatpush1.bf16.msra.mxu0 0
    %3066 = vmatprep.subr.bf16.mxu0 0
    %3067 = vmatpush1.bf16.msra.mxu0 0
    %3068 = vmatprep.mubr.bf16.mxu0 0
    %3069 = vmatmul.mubr.bf16.gmra.mrb[0].mxu0 %v2990
    %v3070 = vpop.f32.mrb[0].mxu0
    %v3071 = vadd.f32 0.0, %v3070
    %v3072 = vpop.f32.mrb[0].mxu0
    %v3073 = vadd.f32 0.0, %v3072
    %v3074 = vpop.f32.mrb[0].mxu0
    %v3075 = vpop.f32.mrb[0].mxu0
    %3076 = vdwg.mxu0
    %v3077 = vadd.f32 %v2991, %v3030
    %v3078 = vadd.f32 %v2992, %v3032
    %v3079 = vadd.f32 %v2993, %v3071
    %v3080 = vadd.f32 %v2994, %v3073
    %v3081 = vmul.f32 %v3077, 0.5
    %v3082 = vmul.f32 %v3078, 0.5
    %v3083 = vmul.f32 %v3079, 0.5
    %v3084 = vtanh.pop %v3081
    %v3085 = vtanh.pop %v3082
    %v3086 = vtanh.pop %v3083
    %v3087 = vmul.f32 %v3084, 0.5
    %v3088 = vmul.f32 %v3085, 0.5
    %v3089 = vmul.f32 %v3086, 0.5
    %v3090 = vadd.f32 %v3087, 0.5
    %v3091 = vadd.f32 %v3088, 0.5
    %v3092 = vadd.f32 %v3089, 0.5
    %v3093 = vtanh.pop %v3080
    %v3094 = vmul.f32 %v3091, %v2987
    %v3095 = vmul.f32 %v3090, %v3093
    %v3096 = vadd.f32 %v3094, %v3095
    %v3097 = vtanh.pop %v3096
    %v3098 = vmul.f32 %v3092, %v3097
    %v3099 = vpack.c.bf16 %v3098, %v3098
    %v3100 = vld [vmem:[%s1876] sm:$0xff]
    %v3101 = vld [vmem:[%s1876 + $0x8] sm:$0xff]
    %v3102 = vld [vmem:[%s1876 + $0x10] sm:$0xff]
    %v3103 = vld [vmem:[%s1876 + $0x18] sm:$0xff]
    %3104 = vmatprep.subr.bf16.mxu0 %v2605
    %3105 = vmatpush1.bf16.msra.mxu0 %v2604
    %3106 = vmatprep.subr.bf16.mxu0 %v2609
    %3107 = vmatpush1.bf16.msra.mxu0 %v2608
    %3108 = vmatprep.subr.bf16.mxu0 %v2613
    %3109 = vmatpush1.bf16.msra.mxu0 %v2612
    %3110 = vmatprep.subr.bf16.mxu0 %v2617
    %3111 = vmatpush1.bf16.msra.mxu0 %v2616
    %3112 = vmatprep.subr.bf16.mxu0 %v2621
    %3113 = vmatpush1.bf16.msra.mxu0 %v2620
    %3114 = vmatprep.subr.bf16.mxu0 %v2625
    %3115 = vmatpush1.bf16.msra.mxu0 %v2624
    %3116 = vmatprep.subr.bf16.mxu0 %v2629
    %3117 = vmatpush1.bf16.msra.mxu0 %v2628
    %3118 = vmatprep.subr.bf16.mxu0 %v2633
    %3119 = vmatpush1.bf16.msra.mxu0 %v2632
    %3120 = vmatprep.subr.bf16.mxu0 0
    %3121 = vmatpush1.bf16.msra.mxu0 0
    %3122 = vmatprep.subr.bf16.mxu0 0
    %3123 = vmatpush1.bf16.msra.mxu0 0
    %3124 = vmatprep.subr.bf16.mxu0 0
    %3125 = vmatpush1.bf16.msra.mxu0 0
    %3126 = vmatprep.subr.bf16.mxu0 0
    %3127 = vmatpush1.bf16.msra.mxu0 0
    %3128 = vmatprep.subr.bf16.mxu0 0
    %3129 = vmatpush1.bf16.msra.mxu0 0
    %3130 = vmatprep.subr.bf16.mxu0 0
    %3131 = vmatpush1.bf16.msra.mxu0 0
    %3132 = vmatprep.subr.bf16.mxu0 0
    %3133 = vmatpush1.bf16.msra.mxu0 0
    %3134 = vmatprep.subr.bf16.mxu0 0
    %3135 = vmatpush1.bf16.msra.mxu0 0
    %3136 = vmatprep.mubr.bf16.mxu0 0
    %3137 = vmatmul.mubr.bf16.gmra.mrb[0].mxu0 %v3099
    %v3138 = vpop.f32.mrb[0].mxu0
    %v3139 = vadd.f32 0.0, %v3138
    %v3140 = vpop.f32.mrb[0].mxu0
    %v3141 = vadd.f32 0.0, %v3140
    %v3142 = vpop.f32.mrb[0].mxu0
    %v3143 = vpop.f32.mrb[0].mxu0
    %3144 = vdwg.mxu0
    %3145 = vmatprep.subr.bf16.mxu0 %v2607
    %3146 = vmatpush1.bf16.msra.mxu0 %v2606
    %3147 = vmatprep.subr.bf16.mxu0 %v2611
    %3148 = vmatpush1.bf16.msra.mxu0 %v2610
    %3149 = vmatprep.subr.bf16.mxu0 %v2615
    %3150 = vmatpush1.bf16.msra.mxu0 %v2614
    %3151 = vmatprep.subr.bf16.mxu0 %v2619
    %3152 = vmatpush1.bf16.msra.mxu0 %v2618
    %3153 = vmatprep.subr.bf16.mxu0 %v2623
    %3154 = vmatpush1.bf16.msra.mxu0 %v2622
    %3155 = vmatprep.subr.bf16.mxu0 %v2627
    %3156 = vmatpush1.bf16.msra.mxu0 %v2626
    %3157 = vmatprep.subr.bf16.mxu0 %v2631
    %3158 = vmatpush1.bf16.msra.mxu0 %v2630
    %3159 = vmatprep.subr.bf16.mxu0 %v2635
    %3160 = vmatpush1.bf16.msra.mxu0 %v2634
    %3161 = vmatprep.subr.bf16.mxu0 0
    %3162 = vmatpush1.bf16.msra.mxu0 0
    %3163 = vmatprep.subr.bf16.mxu0 0
    %3164 = vmatpush1.bf16.msra.mxu0 0
    %3165 = vmatprep.subr.bf16.mxu0 0
    %3166 = vmatpush1.bf16.msra.mxu0 0
    %3167 = vmatprep.subr.bf16.mxu0 0
    %3168 = vmatpush1.bf16.msra.mxu0 0
    %3169 = vmatprep.subr.bf16.mxu0 0
    %3170 = vmatpush1.bf16.msra.mxu0 0
    %3171 = vmatprep.subr.bf16.mxu0 0
    %3172 = vmatpush1.bf16.msra.mxu0 0
    %3173 = vmatprep.subr.bf16.mxu0 0
    %3174 = vmatpush1.bf16.msra.mxu0 0
    %3175 = vmatprep.subr.bf16.mxu0 0
    %3176 = vmatpush1.bf16.msra.mxu0 0
    %3177 = vmatprep.mubr.bf16.mxu0 0
    %3178 = vmatmul.mubr.bf16.gmra.mrb[0].mxu0 %v3099
    %v3179 = vpop.f32.mrb[0].mxu0
    %v3180 = vadd.f32 0.0, %v3179
    %v3181 = vpop.f32.mrb[0].mxu0
    %v3182 = vadd.f32 0.0, %v3181
    %v3183 = vpop.f32.mrb[0].mxu0
    %v3184 = vpop.f32.mrb[0].mxu0
    %3185 = vdwg.mxu0
    %v3186 = vadd.f32 %v3100, %v3139
    %v3187 = vadd.f32 %v3101, %v3141
    %v3188 = vadd.f32 %v3102, %v3180
    %v3189 = vadd.f32 %v3103, %v3182
    %v3190 = vmul.f32 %v3186, 0.5
    %v3191 = vmul.f32 %v3187, 0.5
    %v3192 = vmul.f32 %v3188, 0.5
    %v3193 = vtanh.pop %v3190
    %v3194 = vtanh.pop %v3191
    %v3195 = vtanh.pop %v3192
    %v3196 = vmul.f32 %v3193, 0.5
    %v3197 = vmul.f32 %v3194, 0.5
    %v3198 = vmul.f32 %v3195, 0.5
    %v3199 = vadd.f32 %v3196, 0.5
    %v3200 = vadd.f32 %v3197, 0.5
    %v3201 = vadd.f32 %v3198, 0.5
    %v3202 = vtanh.pop %v3189
    %v3203 = vmul.f32 %v3200, %v3096
    %v3204 = vmul.f32 %v3199, %v3202
    %v3205 = vadd.f32 %v3203, %v3204
    %v3206 = vtanh.pop %v3205
    %v3207 = vmul.f32 %v3201, %v3206
    %v3208 = vpack.c.bf16 %v3207, %v3207
    %v3209 = vld [vmem:[%s2073] sm:$0xff]
    %v3210 = vld [vmem:[%s2073 + $0x8] sm:$0xff]
    %v3211 = vld [vmem:[%s2073 + $0x10] sm:$0xff]
    %v3212 = vld [vmem:[%s2073 + $0x18] sm:$0xff]
    %3213 = vmatprep.subr.bf16.mxu0 %v2605
    %3214 = vmatpush1.bf16.msra.mxu0 %v2604
    %3215 = vmatprep.subr.bf16.mxu0 %v2609
    %3216 = vmatpush1.bf16.msra.mxu0 %v2608
    %3217 = vmatprep.subr.bf16.mxu0 %v2613
    %3218 = vmatpush1.bf16.msra.mxu0 %v2612
    %3219 = vmatprep.subr.bf16.mxu0 %v2617
    %3220 = vmatpush1.bf16.msra.mxu0 %v2616
    %3221 = vmatprep.subr.bf16.mxu0 %v2621
    %3222 = vmatpush1.bf16.msra.mxu0 %v2620
    %3223 = vmatprep.subr.bf16.mxu0 %v2625
    %3224 = vmatpush1.bf16.msra.mxu0 %v2624
    %3225 = vmatprep.subr.bf16.mxu0 %v2629
    %3226 = vmatpush1.bf16.msra.mxu0 %v2628
    %3227 = vmatprep.subr.bf16.mxu0 %v2633
    %3228 = vmatpush1.bf16.msra.mxu0 %v2632
    %3229 = vmatprep.subr.bf16.mxu0 0
    %3230 = vmatpush1.bf16.msra.mxu0 0
    %3231 = vmatprep.subr.bf16.mxu0 0
    %3232 = vmatpush1.bf16.msra.mxu0 0
    %3233 = vmatprep.subr.bf16.mxu0 0
    %3234 = vmatpush1.bf16.msra.mxu0 0
    %3235 = vmatprep.subr.bf16.mxu0 0
    %3236 = vmatpush1.bf16.msra.mxu0 0
    %3237 = vmatprep.subr.bf16.mxu0 0
    %3238 = vmatpush1.bf16.msra.mxu0 0
    %3239 = vmatprep.subr.bf16.mxu0 0
    %3240 = vmatpush1.bf16.msra.mxu0 0
    %3241 = vmatprep.subr.bf16.mxu0 0
    %3242 = vmatpush1.bf16.msra.mxu0 0
    %3243 = vmatprep.subr.bf16.mxu0 0
    %3244 = vmatpush1.bf16.msra.mxu0 0
    %3245 = vmatprep.mubr.bf16.mxu0 0
    %3246 = vmatmul.mubr.bf16.gmra.mrb[0].mxu0 %v3208
    %v3247 = vpop.f32.mrb[0].mxu0
    %v3248 = vadd.f32 0.0, %v3247
    %v3249 = vpop.f32.mrb[0].mxu0
    %v3250 = vadd.f32 0.0, %v3249
    %v3251 = vpop.f32.mrb[0].mxu0
    %v3252 = vpop.f32.mrb[0].mxu0
    %3253 = vdwg.mxu0
    %3254 = vmatprep.subr.bf16.mxu0 %v2607
    %3255 = vmatpush1.bf16.msra.mxu0 %v2606
    %3256 = vmatprep.subr.bf16.mxu0 %v2611
    %3257 = vmatpush1.bf16.msra.mxu0 %v2610
    %3258 = vmatprep.subr.bf16.mxu0 %v2615
    %3259 = vmatpush1.bf16.msra.mxu0 %v2614
    %3260 = vmatprep.subr.bf16.mxu0 %v2619
    %3261 = vmatpush1.bf16.msra.mxu0 %v2618
    %3262 = vmatprep.subr.bf16.mxu0 %v2623
    %3263 = vmatpush1.bf16.msra.mxu0 %v2622
    %3264 = vmatprep.subr.bf16.mxu0 %v2627
    %3265 = vmatpush1.bf16.msra.mxu0 %v2626
    %3266 = vmatprep.subr.bf16.mxu0 %v2631
    %3267 = vmatpush1.bf16.msra.mxu0 %v2630
    %3268 = vmatprep.subr.bf16.mxu0 %v2635
    %3269 = vmatpush1.bf16.msra.mxu0 %v2634
    %3270 = vmatprep.subr.bf16.mxu0 0
    %3271 = vmatpush1.bf16.msra.mxu0 0
    %3272 = vmatprep.subr.bf16.mxu0 0
    %3273 = vmatpush1.bf16.msra.mxu0 0
    %3274 = vmatprep.subr.bf16.mxu0 0
    %3275 = vmatpush1.bf16.msra.mxu0 0
    %3276 = vmatprep.subr.bf16.mxu0 0
    %3277 = vmatpush1.bf16.msra.mxu0 0
    %3278 = vmatprep.subr.bf16.mxu0 0
    %3279 = vmatpush1.bf16.msra.mxu0 0
    %3280 = vmatprep.subr.bf16.mxu0 0
    %3281 = vmatpush1.bf16.msra.mxu0 0
    %3282 = vmatprep.subr.bf16.mxu0 0
    %3283 = vmatpush1.bf16.msra.mxu0 0
    %3284 = vmatprep.subr.bf16.mxu0 0
    %3285 = vmatpush1.bf16.msra.mxu0 0
    %3286 = vmatprep.mubr.bf16.mxu0 0
    %3287 = vmatmul.mubr.bf16.gmra.mrb[0].mxu0 %v3208
    %v3288 = vpop.f32.mrb[0].mxu0
    %v3289 = vadd.f32 0.0, %v3288
    %v3290 = vpop.f32.mrb[0].mxu0
    %v3291 = vadd.f32 0.0, %v3290
    %v3292 = vpop.f32.mrb[0].mxu0
    %v3293 = vpop.f32.mrb[0].mxu0
    %3294 = vdwg.mxu0
    %v3295 = vadd.f32 %v3209, %v3248
    %v3296 = vadd.f32 %v3210, %v3250
    %v3297 = vadd.f32 %v3211, %v3289
    %v3298 = vadd.f32 %v3212, %v3291
    %v3299 = vmul.f32 %v3295, 0.5
    %v3300 = vmul.f32 %v3296, 0.5
    %v3301 = vmul.f32 %v3297, 0.5
    %v3302 = vtanh.pop %v3299
    %v3303 = vtanh.pop %v3300
    %v3304 = vtanh.pop %v3301
    %v3305 = vmul.f32 %v3302, 0.5
    %v3306 = vmul.f32 %v3303, 0.5
    %v3307 = vmul.f32 %v3304, 0.5
    %v3308 = vadd.f32 %v3305, 0.5
    %v3309 = vadd.f32 %v3306, 0.5
    %v3310 = vadd.f32 %v3307, 0.5
    %v3311 = vtanh.pop %v3298
    %v3312 = vmul.f32 %v3309, %v3205
    %v3313 = vmul.f32 %v3308, %v3311
    %v3314 = vadd.f32 %v3312, %v3313
    %v3315 = vtanh.pop %v3314
    %v3316 = vmul.f32 %v3310, %v3315
    %v3317 = vpack.c.bf16 %v3316, %v3316
    %v3318 = vld [vmem:[%s2270] sm:$0xff]
    %v3319 = vld [vmem:[%s2270 + $0x8] sm:$0xff]
    %v3320 = vld [vmem:[%s2270 + $0x10] sm:$0xff]
    %v3321 = vld [vmem:[%s2270 + $0x18] sm:$0xff]
    %3322 = vmatprep.subr.bf16.mxu0 %v2605
    %3323 = vmatpush1.bf16.msra.mxu0 %v2604
    %3324 = vmatprep.subr.bf16.mxu0 %v2609
    %3325 = vmatpush1.bf16.msra.mxu0 %v2608
    %3326 = vmatprep.subr.bf16.mxu0 %v2613
    %3327 = vmatpush1.bf16.msra.mxu0 %v2612
    %3328 = vmatprep.subr.bf16.mxu0 %v2617
    %3329 = vmatpush1.bf16.msra.mxu0 %v2616
    %3330 = vmatprep.subr.bf16.mxu0 %v2621
    %3331 = vmatpush1.bf16.msra.mxu0 %v2620
    %3332 = vmatprep.subr.bf16.mxu0 %v2625
    %3333 = vmatpush1.bf16.msra.mxu0 %v2624
    %3334 = vmatprep.subr.bf16.mxu0 %v2629
    %3335 = vmatpush1.bf16.msra.mxu0 %v2628
    %3336 = vmatprep.subr.bf16.mxu0 %v2633
    %3337 = vmatpush1.bf16.msra.mxu0 %v2632
    %3338 = vmatprep.subr.bf16.mxu0 0
    %3339 = vmatpush1.bf16.msra.mxu0 0
    %3340 = vmatprep.subr.bf16.mxu0 0
    %3341 = vmatpush1.bf16.msra.mxu0 0
    %3342 = vmatprep.subr.bf16.mxu0 0
    %3343 = vmatpush1.bf16.msra.mxu0 0
    %3344 = vmatprep.subr.bf16.mxu0 0
    %3345 = vmatpush1.bf16.msra.mxu0 0
    %3346 = vmatprep.subr.bf16.mxu0 0
    %3347 = vmatpush1.bf16.msra.mxu0 0
    %3348 = vmatprep.subr.bf16.mxu0 0
    %3349 = vmatpush1.bf16.msra.mxu0 0
    %3350 = vmatprep.subr.bf16.mxu0 0
    %3351 = vmatpush1.bf16.msra.mxu0 0
    %3352 = vmatprep.subr.bf16.mxu0 0
    %3353 = vmatpush1.bf16.msra.mxu0 0
    %3354 = vmatprep.mubr.bf16.mxu0 0
    %3355 = vmatmul.mubr.bf16.gmra.mrb[0].mxu0 %v3317
    %v3356 = vpop.f32.mrb[0].mxu0
    %v3357 = vadd.f32 0.0, %v3356
    %v3358 = vpop.f32.mrb[0].mxu0
    %v3359 = vadd.f32 0.0, %v3358
    %v3360 = vpop.f32.mrb[0].mxu0
    %v3361 = vpop.f32.mrb[0].mxu0
    %3362 = vdwg.mxu0
    %3363 = vmatprep.subr.bf16.mxu0 %v2607
    %3364 = vmatpush1.bf16.msra.mxu0 %v2606
    %3365 = vmatprep.subr.bf16.mxu0 %v2611
    %3366 = vmatpush1.bf16.msra.mxu0 %v2610
    %3367 = vmatprep.subr.bf16.mxu0 %v2615
    %3368 = vmatpush1.bf16.msra.mxu0 %v2614
    %3369 = vmatprep.subr.bf16.mxu0 %v2619
    %3370 = vmatpush1.bf16.msra.mxu0 %v2618
    %3371 = vmatprep.subr.bf16.mxu0 %v2623
    %3372 = vmatpush1.bf16.msra.mxu0 %v2622
    %3373 = vmatprep.subr.bf16.mxu0 %v2627
    %3374 = vmatpush1.bf16.msra.mxu0 %v2626
    %3375 = vmatprep.subr.bf16.mxu0 %v2631
    %3376 = vmatpush1.bf16.msra.mxu0 %v2630
    %3377 = vmatprep.subr.bf16.mxu0 %v2635
    %3378 = vmatpush1.bf16.msra.mxu0 %v2634
    %3379 = vmatprep.subr.bf16.mxu0 0
    %3380 = vmatpush1.bf16.msra.mxu0 0
    %3381 = vmatprep.subr.bf16.mxu0 0
    %3382 = vmatpush1.bf16.msra.mxu0 0
    %3383 = vmatprep.subr.bf16.mxu0 0
    %3384 = vmatpush1.bf16.msra.mxu0 0
    %3385 = vmatprep.subr.bf16.mxu0 0
    %3386 = vmatpush1.bf16.msra.mxu0 0
    %3387 = vmatprep.subr.bf16.mxu0 0
    %3388 = vmatpush1.bf16.msra.mxu0 0
    %3389 = vmatprep.subr.bf16.mxu0 0
    %3390 = vmatpush1.bf16.msra.mxu0 0
    %3391 = vmatprep.subr.bf16.mxu0 0
    %3392 = vmatpush1.bf16.msra.mxu0 0
    %3393 = vmatprep.subr.bf16.mxu0 0
    %3394 = vmatpush1.bf16.msra.mxu0 0
    %3395 = vmatprep.mubr.bf16.mxu0 0
    %3396 = vmatmul.mubr.bf16.gmra.mrb[0].mxu0 %v3317
    %v3397 = vpop.f32.mrb[0].mxu0
    %v3398 = vadd.f32 0.0, %v3397
    %v3399 = vpop.f32.mrb[0].mxu0
    %v3400 = vadd.f32 0.0, %v3399
    %v3401 = vpop.f32.mrb[0].mxu0
    %v3402 = vpop.f32.mrb[0].mxu0
    %3403 = vdwg.mxu0
    %v3404 = vadd.f32 %v3318, %v3357
    %v3405 = vadd.f32 %v3319, %v3359
    %v3406 = vadd.f32 %v3320, %v3398
    %v3407 = vadd.f32 %v3321, %v3400
    %v3408 = vmul.f32 %v3404, 0.5
    %v3409 = vmul.f32 %v3405, 0.5
    %v3410 = vmul.f32 %v3406, 0.5
    %v3411 = vtanh.pop %v3408
    %v3412 = vtanh.pop %v3409
    %v3413 = vtanh.pop %v3410
    %v3414 = vmul.f32 %v3411, 0.5
    %v3415 = vmul.f32 %v3412, 0.5
    %v3416 = vmul.f32 %v3413, 0.5
    %v3417 = vadd.f32 %v3414, 0.5
    %v3418 = vadd.f32 %v3415, 0.5
    %v3419 = vadd.f32 %v3416, 0.5
    %v3420 = vtanh.pop %v3407
    %v3421 = vmul.f32 %v3418, %v3314
    %v3422 = vmul.f32 %v3417, %v3420
    %v3423 = vadd.f32 %v3421, %v3422
    %v3424 = vtanh.pop %v3423
    %v3425 = vmul.f32 %v3419, %v3424
    %v3426 = vpack.c.bf16 %v3425, %v3425
    %v3427 = vld [vmem:[%s2467] sm:$0xff]
    %v3428 = vld [vmem:[%s2467 + $0x8] sm:$0xff]
    %v3429 = vld [vmem:[%s2467 + $0x10] sm:$0xff]
    %v3430 = vld [vmem:[%s2467 + $0x18] sm:$0xff]
    %3431 = vmatprep.subr.bf16.mxu0 %v2605
    %3432 = vmatpush1.bf16.msra.mxu0 %v2604
    %3433 = vmatprep.subr.bf16.mxu0 %v2609
    %3434 = vmatpush1.bf16.msra.mxu0 %v2608
    %3435 = vmatprep.subr.bf16.mxu0 %v2613
    %3436 = vmatpush1.bf16.msra.mxu0 %v2612
    %3437 = vmatprep.subr.bf16.mxu0 %v2617
    %3438 = vmatpush1.bf16.msra.mxu0 %v2616
    %3439 = vmatprep.subr.bf16.mxu0 %v2621
    %3440 = vmatpush1.bf16.msra.mxu0 %v2620
    %3441 = vmatprep.subr.bf16.mxu0 %v2625
    %3442 = vmatpush1.bf16.msra.mxu0 %v2624
    %3443 = vmatprep.subr.bf16.mxu0 %v2629
    %3444 = vmatpush1.bf16.msra.mxu0 %v2628
    %3445 = vmatprep.subr.bf16.mxu0 %v2633
    %3446 = vmatpush1.bf16.msra.mxu0 %v2632
    %3447 = vmatprep.subr.bf16.mxu0 0
    %3448 = vmatpush1.bf16.msra.mxu0 0
    %3449 = vmatprep.subr.bf16.mxu0 0
    %3450 = vmatpush1.bf16.msra.mxu0 0
    %3451 = vmatprep.subr.bf16.mxu0 0
    %3452 = vmatpush1.bf16.msra.mxu0 0
    %3453 = vmatprep.subr.bf16.mxu0 0
    %3454 = vmatpush1.bf16.msra.mxu0 0
    %3455 = vmatprep.subr.bf16.mxu0 0
    %3456 = vmatpush1.bf16.msra.mxu0 0
    %3457 = vmatprep.subr.bf16.mxu0 0
    %3458 = vmatpush1.bf16.msra.mxu0 0
    %3459 = vmatprep.subr.bf16.mxu0 0
    %3460 = vmatpush1.bf16.msra.mxu0 0
    %3461 = vmatprep.subr.bf16.mxu0 0
    %3462 = vmatpush1.bf16.msra.mxu0 0
    %3463 = vmatprep.mubr.bf16.mxu0 0
    %3464 = vmatmul.mubr.bf16.gmra.mrb[0].mxu0 %v3426
    %v3465 = vpop.f32.mrb[0].mxu0
    %v3466 = vadd.f32 0.0, %v3465
    %v3467 = vpop.f32.mrb[0].mxu0
    %v3468 = vadd.f32 0.0, %v3467
    %v3469 = vpop.f32.mrb[0].mxu0
    %v3470 = vpop.f32.mrb[0].mxu0
    %3471 = vdwg.mxu0
    %3472 = vmatprep.subr.bf16.mxu0 %v2607
    %3473 = vmatpush1.bf16.msra.mxu0 %v2606
    %3474 = vmatprep.subr.bf16.mxu0 %v2611
    %3475 = vmatpush1.bf16.msra.mxu0 %v2610
    %3476 = vmatprep.subr.bf16.mxu0 %v2615
    %3477 = vmatpush1.bf16.msra.mxu0 %v2614
    %3478 = vmatprep.subr.bf16.mxu0 %v2619
    %3479 = vmatpush1.bf16.msra.mxu0 %v2618
    %3480 = vmatprep.subr.bf16.mxu0 %v2623
    %3481 = vmatpush1.bf16.msra.mxu0 %v2622
    %3482 = vmatprep.subr.bf16.mxu0 %v2627
    %3483 = vmatpush1.bf16.msra.mxu0 %v2626
    %3484 = vmatprep.subr.bf16.mxu0 %v2631
    %3485 = vmatpush1.bf16.msra.mxu0 %v2630
    %3486 = vmatprep.subr.bf16.mxu0 %v2635
    %3487 = vmatpush1.bf16.msra.mxu0 %v2634
    %3488 = vmatprep.subr.bf16.mxu0 0
    %3489 = vmatpush1.bf16.msra.mxu0 0
    %3490 = vmatprep.subr.bf16.mxu0 0
    %3491 = vmatpush1.bf16.msra.mxu0 0
    %3492 = vmatprep.subr.bf16.mxu0 0
    %3493 = vmatpush1.bf16.msra.mxu0 0
    %3494 = vmatprep.subr.bf16.mxu0 0
    %3495 = vmatpush1.bf16.msra.mxu0 0
    %3496 = vmatprep.subr.bf16.mxu0 0
    %3497 = vmatpush1.bf16.msra.mxu0 0
    %3498 = vmatprep.subr.bf16.mxu0 0
    %3499 = vmatpush1.bf16.msra.mxu0 0
    %3500 = vmatprep.subr.bf16.mxu0 0
    %3501 = vmatpush1.bf16.msra.mxu0 0
    %3502 = vmatprep.subr.bf16.mxu0 0
    %3503 = vmatpush1.bf16.msra.mxu0 0
    %3504 = vmatprep.mubr.bf16.mxu0 0
    %3505 = vmatmul.mubr.bf16.gmra.mrb[0].mxu0 %v3426
    %v3506 = vpop.f32.mrb[0].mxu0
    %v3507 = vadd.f32 0.0, %v3506
    %v3508 = vpop.f32.mrb[0].mxu0
    %v3509 = vadd.f32 0.0, %v3508
    %v3510 = vpop.f32.mrb[0].mxu0
    %v3511 = vpop.f32.mrb[0].mxu0
    %3512 = vdwg.mxu0
    %v3513 = vadd.f32 %v3427, %v3466
    %v3514 = vadd.f32 %v3428, %v3468
    %v3515 = vadd.f32 %v3429, %v3507
    %v3516 = vadd.f32 %v3430, %v3509
    %v3517 = vmul.f32 %v3513, 0.5
    %v3518 = vmul.f32 %v3514, 0.5
    %v3519 = vmul.f32 %v3515, 0.5
    %v3520 = vtanh.pop %v3517
    %v3521 = vtanh.pop %v3518
    %v3522 = vtanh.pop %v3519
    %v3523 = vmul.f32 %v3520, 0.5
    %v3524 = vmul.f32 %v3521, 0.5
    %v3525 = vmul.f32 %v3522, 0.5
    %v3526 = vadd.f32 %v3523, 0.5
    %v3527 = vadd.f32 %v3524, 0.5
    %v3528 = vadd.f32 %v3525, 0.5
    %v3529 = vtanh.pop %v3516
    %v3530 = vmul.f32 %v3527, %v3423
    %v3531 = vmul.f32 %v3526, %v3529
    %v3532 = vadd.f32 %v3530, %v3531
    %v3533 = vtanh.pop %v3532
    %v3534 = vmul.f32 %v3528, %v3533
    %v3535 = vpack.c.bf16 %v3534, %v3534
    %v3536 = vld [vmem:[%s7] sm:$0xf]
    %v3537 = vld [vmem:[%s7 + $0x4] sm:$0xf]
    %v3538 = vld [vmem:[%s7 + $0x8] sm:$0xf]
    %v3539 = vld [vmem:[%s7 + $0xc] sm:$0xf]
    %v3540 = vld [vmem:[%s7 + $0x10] sm:$0xf]
    %v3541 = vld [vmem:[%s7 + $0x14] sm:$0xf]
    %v3542 = vld [vmem:[%s7 + $0x18] sm:$0xf]
    %v3543 = vld [vmem:[%s7 + $0x1c] sm:$0xf]
    %v3544 = vld [vmem:[%s7 + $0x20] sm:$0xf]
    %v3545 = vld [vmem:[%s7 + $0x24] sm:$0xf]
    %v3546 = vld [vmem:[%s7 + $0x28] sm:$0xf]
    %v3547 = vld [vmem:[%s7 + $0x2c] sm:$0xf]
    %v3548 = vld [vmem:[%s7 + $0x30] sm:$0xf]
    %v3549 = vld [vmem:[%s7 + $0x34] sm:$0xf]
    %v3550 = vld [vmem:[%s7 + $0x38] sm:$0xf]
    %v3551 = vld [vmem:[%s7 + $0x3c] sm:$0xf]
    %v3552 = vld [vmem:[%s8] sm:$0x1]
    %v3554 = vlaneseq
    %v3555 = vshrl.u32 %v3554, 7
    %v3556 = vsub.s32 0, %v3555
    %v3557 = vrot.slane %v3552, %v3556
    %v3575 = vunpack.c.l.b16 %v3536
    %v3576 = vunpack.c.l.b16 %v3537
    %v3577 = vunpack.c.l.b16 %v3538
    %v3578 = vunpack.c.l.b16 %v3539
    %v3579 = vunpack.c.l.b16 %v3540
    %v3580 = vunpack.c.l.b16 %v3541
    %v3581 = vunpack.c.l.b16 %v3542
    %v3582 = vunpack.c.l.b16 %v3543
    %v3583 = vunpack.c.l.b16 %v3544
    %v3584 = vunpack.c.l.b16 %v3545
    %v3585 = vunpack.c.l.b16 %v3546
    %v3586 = vunpack.c.l.b16 %v3547
    %v3587 = vunpack.c.l.b16 %v3548
    %v3588 = vunpack.c.l.b16 %v3549
    %v3589 = vunpack.c.l.b16 %v3550
    %v3590 = vunpack.c.l.b16 %v3551
    %v3591 = vpack.c.b16 %v3576, %v3575
    %v3592 = vpack.c.b16 %v3578, %v3577
    %v3593 = vpack.c.b16 %v3580, %v3579
    %v3594 = vpack.c.b16 %v3582, %v3581
    %v3595 = vpack.c.b16 %v3584, %v3583
    %v3596 = vpack.c.b16 %v3586, %v3585
    %v3597 = vpack.c.b16 %v3588, %v3587
    %v3598 = vpack.c.b16 %v3590, %v3589
    %3607 = vmatprep.subr.bf16.mxu0 0
    %3608 = vmatpush1.bf16.msra.mxu0 %v3591
    %3609 = vmatprep.subr.bf16.mxu0 0
    %3610 = vmatpush1.bf16.msra.mxu0 %v3592
    %3611 = vmatprep.subr.bf16.mxu0 0
    %3612 = vmatpush1.bf16.msra.mxu0 %v3593
    %3613 = vmatprep.subr.bf16.mxu0 0
    %3614 = vmatpush1.bf16.msra.mxu0 %v3594
    %3615 = vmatprep.subr.bf16.mxu0 0
    %3616 = vmatpush1.bf16.msra.mxu0 %v3595
    %3617 = vmatprep.subr.bf16.mxu0 0
    %3618 = vmatpush1.bf16.msra.mxu0 %v3596
    %3619 = vmatprep.subr.bf16.mxu0 0
    %3620 = vmatpush1.bf16.msra.mxu0 %v3597
    %3621 = vmatprep.subr.bf16.mxu0 0
    %3622 = vmatpush1.bf16.msra.mxu0 %v3598
    %3623 = vmatprep.subr.bf16.mxu0 0
    %3624 = vmatpush1.bf16.msra.mxu0 0
    %3625 = vmatprep.subr.bf16.mxu0 0
    %3626 = vmatpush1.bf16.msra.mxu0 0
    %3627 = vmatprep.subr.bf16.mxu0 0
    %3628 = vmatpush1.bf16.msra.mxu0 0
    %3629 = vmatprep.subr.bf16.mxu0 0
    %3630 = vmatpush1.bf16.msra.mxu0 0
    %3631 = vmatprep.subr.bf16.mxu0 0
    %3632 = vmatpush1.bf16.msra.mxu0 0
    %3633 = vmatprep.subr.bf16.mxu0 0
    %3634 = vmatpush1.bf16.msra.mxu0 0
    %3635 = vmatprep.subr.bf16.mxu0 0
    %3636 = vmatpush1.bf16.msra.mxu0 0
    %3637 = vmatprep.subr.bf16.mxu0 0
    %3638 = vmatpush1.bf16.msra.mxu0 0
    %3639 = vmatprep.mubr.bf16.mxu0 0
    %3640 = vmatmul.mubr.bf16.gmra.mrb[0].mxu0 %v3535
    %v3641 = vpop.f32.mrb[0].mxu0
    %v3642 = vadd.f32 %v3557, %v3641
    %v3643 = vpop.f32.mrb[0].mxu0
    %v3644 = vpop.f32.mrb[0].mxu0
    %v3645 = vpop.f32.mrb[0].mxu0
    %3646 = vdwg.mxu0
    %3647 = vst [vmem:[%s9] sm:$0xff] %v3642
    // Predicated region
    $region54: #{forward.1} parent=1 // pred_check
      _
    $region55: #{forward.1} parent=1 // pred_check_branch
      %3649 = sbr.rel (0) target = $region57
    $region56: #{forward.1} parent=1 // pred_region
      _
    $region57: #{forward.1} parent=1 // pred_fallthru
      _
    // Predicated region
    $region58: #{forward.1} parent=1 // pred_check
      _
    $region59: #{forward.1} parent=1 // pred_check_branch
      %3651 = sbr.rel (0) target = $region61
    $region60: #{forward.1} parent=1 // pred_region
      _
    $region61: #{forward.1} parent=1 // pred_fallthru
      _
    %3652 = vsyncpa [#allocation5], 1
    %3653 = vsyncpa [#allocation7], 1
    %3654 = vsyncpa [#allocation10], 1

</llo_original>
